<compile_context>
chip_gen: v6e
topology: v6e:2x2x1
jax: 0.10.0
libtpu: 0.0.40
codegen_flags: <defaults>
</compile_context>

<pallas_src>
import jax
import jax.numpy as jnp
from jax.experimental import pallas as pl
from jax.experimental.pallas import tpu as pltpu

NEG_SLOPE = 0.05
EMB = 1024
BN_EPS = 1e-5


def _leaky_relu(x):
    return jnp.where(x >= 0, x, NEG_SLOPE * x)


# ----------------------------- fused Pallas kernel -----------------------------

def fused_net_kernel(
    # scalars (SMEM)
    mixw_ref,            # (2,)  softmax(self.weight)
    b2s_ref,             # (3,)  final biases of the three heads
    # activations (VMEM)
    lower_ref, upper_ref, gr_ref,                         # [B, 1024] f32
    # Scores head #1 (variation_output)
    s1_w1_ref, s1_b1_ref, s1_bns_ref, s1_bnb_ref, s1_w2_ref,
    # Scores head #2 (gr_output)
    s2_w1_ref, s2_b1_ref, s2_bns_ref, s2_bnb_ref, s2_w2_ref,
    # fusion head
    f_s0a_ref, f_sh0a_ref, f_s0b_ref, f_sh0b_ref,         # folded BN(2048), split per half
    f_w1a_ref, f_w1b_ref, f_b1_ref, f_bns_ref, f_bnb_ref, f_w2_ref,
    # output
    out_ref,             # [B, 128] f32 ; lanes 0/1/2 = output1/2/3
):
    B = out_ref.shape[0]

    lower = lower_ref[...]
    upper = upper_ref[...]
    gr = gr_ref[...]

    # variation_embedding = lower * w0 + upper * w1 (stays in vregs/VMEM, never hits HBM)
    var = lower * mixw_ref[0] + upper * mixw_ref[1]

    def scores_head(x, w1_ref, b1_ref, bns_ref, bnb_ref, w2_ref, b2):
        # LeakyReLU -> Linear(1024,256) -> folded BN -> LeakyReLU -> Dropout(id) -> Linear(256,1)
        y = _leaky_relu(x).astype(jnp.bfloat16)
        h = jnp.dot(y, w1_ref[...], preferred_element_type=jnp.float32) + b1_ref[...]
        h = _leaky_relu(h * bns_ref[...] + bnb_ref[...])
        # final Linear(.,1) as a lane reduction instead of a 1-lane MXU matmul
        return jnp.sum(h * w2_ref[...], axis=-1, keepdims=True) + b2       # [B, 1]

    o1 = scores_head(var, s1_w1_ref, s1_b1_ref, s1_bns_ref, s1_bnb_ref, s1_w2_ref, b2s_ref[0])
    o2 = scores_head(gr,  s2_w1_ref, s2_b1_ref, s2_bns_ref, s2_bnb_ref, s2_w2_ref, b2s_ref[1])

    # fusion head on the (never materialized) concat [var, gr]:
    #   BN(2048) -> LeakyReLU -> Linear(2048,512) computed half-by-half.
    ya = _leaky_relu(var * f_s0a_ref[...] + f_sh0a_ref[...]).astype(jnp.bfloat16)
    yb = _leaky_relu(gr  * f_s0b_ref[...] + f_sh0b_ref[...]).astype(jnp.bfloat16)
    h3 = (jnp.dot(ya, f_w1a_ref[...], preferred_element_type=jnp.float32)
          + jnp.dot(yb, f_w1b_ref[...], preferred_element_type=jnp.float32)
          + f_b1_ref[...])
    h3 = _leaky_relu(h3 * f_bns_ref[...] + f_bnb_ref[...])
    o3 = jnp.sum(h3 * f_w2_ref[...], axis=-1, keepdims=True) + b2s_ref[2]   # [B, 1]

    # lane-dense packed output (unmasked vst): lane0=output1, lane1=output2, lane2=output3
    lane = jax.lax.broadcasted_iota(jnp.int32, (B, 128), 1)
    o1b = jnp.broadcast_to(o1, (B, 128))
    o2b = jnp.broadcast_to(o2, (B, 128))
    o3b = jnp.broadcast_to(o3, (B, 128))
    out_ref[...] = jnp.where(lane == 0, o1b,
                   jnp.where(lane == 1, o2b,
                   jnp.where(lane == 2, o3b, 0.0)))


def fused_forward(mixw, b2s, lower, upper, gr, vo, go, fu):
    B = lower.shape[0]
    smem = pl.BlockSpec(memory_space=pltpu.MemorySpace.SMEM)
    vmem = pl.BlockSpec(memory_space=pltpu.MemorySpace.VMEM)
    args = (
        mixw, b2s, lower, upper, gr,
        vo["w1"], vo["b1"], vo["bn_scale"], vo["bn_shift"], vo["w2"],
        go["w1"], go["b1"], go["bn_scale"], go["bn_shift"], go["w2"],
        fu["s0a"], fu["sh0a"], fu["s0b"], fu["sh0b"],
        fu["w1a"], fu["w1b"], fu["b1"], fu["bn_scale"], fu["bn_shift"], fu["w2"],
    )
    return pl.pallas_call(
        fused_net_kernel,
        out_shape=jax.ShapeDtypeStruct((B, 128), jnp.float32),
        in_specs=[smem, smem] + [vmem] * (len(args) - 2),
        out_specs=vmem,
    )(*args)


# ----------------------------- parameter setup -----------------------------

def _fold_bn(gamma, beta, mean, var):
    scale = gamma / jnp.sqrt(var + BN_EPS)
    shift = beta - mean * scale
    return scale, shift


def init_params(key, ve_size, gr_size):
    ks = jax.random.split(key, 8)
    p = {}
    # Placeholder embedding branches (TODO(synk) above): linear projections to EMB.
    p["lower_w"] = 0.02 * jax.random.normal(ks[0], (ve_size, EMB), jnp.float32)
    p["upper_w"] = 0.02 * jax.random.normal(ks[1], (ve_size, EMB), jnp.float32)
    p["gr_w"]    = 0.02 * jax.random.normal(ks[2], (gr_size, EMB), jnp.float32)

    # self.weight = Parameter([0.5, 0.5])
    p["mix_weight"] = jnp.array([0.5, 0.5], jnp.float32)

    def scores_params(k):
        k1, k2, k3, k4, k5, k6 = jax.random.split(k, 6)
        w1 = 0.02 * jax.random.normal(k1, (EMB, 256), jnp.float32)
        b1 = 0.02 * jax.random.normal(k2, (1, 256), jnp.float32)
        gamma = 1.0 + 0.01 * jax.random.normal(k3, (256,), jnp.float32)
        beta = 0.01 * jax.random.normal(k4, (256,), jnp.float32)
        bn_scale, bn_shift = _fold_bn(gamma, beta, jnp.zeros((256,)), jnp.ones((256,)))
        w2 = 0.02 * jax.random.normal(k5, (256, 1), jnp.float32)
        b2 = 0.02 * jax.random.normal(k6, (), jnp.float32)
        return dict(
            w1=w1.astype(jnp.bfloat16),                    # bf16 weight DMA, f32 accumulate
            b1=b1,
            bn_scale=bn_scale.reshape(1, 256), bn_shift=bn_shift.reshape(1, 256),
            w2=w2.reshape(1, 256),                         # row for the lane-reduction Linear(256,1)
            b2=b2,
        )

    p["variation_output"] = scores_params(ks[3])
    p["gr_output"] = scores_params(ks[4])

    # fusion: BN1d(2048) -> LeakyReLU -> Linear(2048,512) -> BN1d(512) -> LeakyReLU
    #         -> Dropout -> Linear(512,1)
    k1, k2, k3, k4, k5, k6, k7, k8 = jax.random.split(ks[5], 8)
    g0 = 1.0 + 0.01 * jax.random.normal(k1, (2 * EMB,), jnp.float32)
    b0 = 0.01 * jax.random.normal(k2, (2 * EMB,), jnp.float32)
    s0, sh0 = _fold_bn(g0, b0, jnp.zeros((2 * EMB,)), jnp.ones((2 * EMB,)))
    w1 = 0.02 * jax.random.normal(k3, (2 * EMB, 512), jnp.float32)
    b1 = 0.02 * jax.random.normal(k4, (1, 512), jnp.float32)
    g1 = 1.0 + 0.01 * jax.random.normal(k5, (512,), jnp.float32)
    be1 = 0.01 * jax.random.normal(k6, (512,), jnp.float32)
    s1, sh1 = _fold_bn(g1, be1, jnp.zeros((512,)), jnp.ones((512,)))
    w2 = 0.02 * jax.random.normal(k7, (512, 1), jnp.float32)
    b2 = 0.02 * jax.random.normal(k8, (), jnp.float32)
    p["fusion"] = dict(
        # folded BN(2048) scale/shift split into the variation half and the gr half
        s0a=s0[:EMB].reshape(1, EMB), sh0a=sh0[:EMB].reshape(1, EMB),
        s0b=s0[EMB:].reshape(1, EMB), sh0b=sh0[EMB:].reshape(1, EMB),
        # Linear(2048,512) split into two [1024,512] halves so the concat is never built
        w1a=w1[:EMB].astype(jnp.bfloat16), w1b=w1[EMB:].astype(jnp.bfloat16),
        b1=b1,
        bn_scale=s1.reshape(1, 512), bn_shift=sh1.reshape(1, 512),
        w2=w2.reshape(1, 512),
        b2=b2,
    )
    return p


# ----------------------------- Net forward -----------------------------

def net_forward(params, snp, sim):
    # Placeholder embedding branches (plain JAX glue).
    lower = snp @ params["lower_w"]          # [B, 1024]
    upper = snp @ params["upper_w"]          # [B, 1024]
    gr    = sim @ params["gr_w"]             # [B, 1024]

    # weight = softmax(self.weight, dim=-1)  (2 scalars; glue)
    mixw = jax.nn.softmax(params["mix_weight"], axis=-1)
    b2s = jnp.stack([params["variation_output"]["b2"],
                     params["gr_output"]["b2"],
                     params["fusion"]["b2"]])

    packed = fused_forward(mixw, b2s, lower, upper, gr,
                           params["variation_output"], params["gr_output"], params["fusion"])
    output1 = packed[:, 0:1]                 # [B, 1]
    output2 = packed[:, 1:2]                 # [B, 1]
    output3 = packed[:, 2:3]                 # [B, 1]
    return output1, output2, output3


if __name__ == "__main__":
    key = jax.random.PRNGKey(0)
    k_param, k_snp, k_sim = jax.random.split(key, 3)

    B, ve_size, gr_size = 8, 64, 48
    snp = jax.random.normal(k_snp, (B, ve_size), jnp.float32)
    sim = jax.random.normal(k_sim, (B, gr_size), jnp.float32)

    params = init_params(k_param, ve_size, gr_size)

    out1, out2, out3 = jax.jit(net_forward)(params, snp, sim)
    jax.block_until_ready((out1, out2, out3))

    assert out1.shape == (B, 1) and out2.shape == (B, 1) and out3.shape == (B, 1)
    print("KERNEL_OK")
</pallas_src>

<mosaic_0001>
module attributes {stable_mosaic.version = 11 : i64} {
  func.func @fused_net_kernel(%arg0: memref<2xf32, #tpu.memory_space<smem>>, %arg1: memref<3xf32, #tpu.memory_space<smem>>, %arg2: memref<8x1024xf32, #tpu.memory_space<vmem>>, %arg3: memref<8x1024xf32, #tpu.memory_space<vmem>>, %arg4: memref<8x1024xf32, #tpu.memory_space<vmem>>, %arg5: memref<1024x256xbf16, #tpu.memory_space<vmem>>, %arg6: memref<1x256xf32, #tpu.memory_space<vmem>>, %arg7: memref<1x256xf32, #tpu.memory_space<vmem>>, %arg8: memref<1x256xf32, #tpu.memory_space<vmem>>, %arg9: memref<1x256xf32, #tpu.memory_space<vmem>>, %arg10: memref<1024x256xbf16, #tpu.memory_space<vmem>>, %arg11: memref<1x256xf32, #tpu.memory_space<vmem>>, %arg12: memref<1x256xf32, #tpu.memory_space<vmem>>, %arg13: memref<1x256xf32, #tpu.memory_space<vmem>>, %arg14: memref<1x256xf32, #tpu.memory_space<vmem>>, %arg15: memref<1x1024xf32, #tpu.memory_space<vmem>>, %arg16: memref<1x1024xf32, #tpu.memory_space<vmem>>, %arg17: memref<1x1024xf32, #tpu.memory_space<vmem>>, %arg18: memref<1x1024xf32, #tpu.memory_space<vmem>>, %arg19: memref<1024x512xbf16, #tpu.memory_space<vmem>>, %arg20: memref<1024x512xbf16, #tpu.memory_space<vmem>>, %arg21: memref<1x512xf32, #tpu.memory_space<vmem>>, %arg22: memref<1x512xf32, #tpu.memory_space<vmem>>, %arg23: memref<1x512xf32, #tpu.memory_space<vmem>>, %arg24: memref<1x512xf32, #tpu.memory_space<vmem>>, %arg25: memref<8x128xf32, #tpu.memory_space<vmem>>) attributes {dimension_semantics = [], scalar_prefetch = 0 : i64, scratch_operands = 0 : i64, tpu.core_type = #tpu.core_type<tc>} {
    %c0 = arith.constant 0 : index
    %c0_0 = arith.constant 0 : index
    %0 = vector.load %arg2[%c0, %c0_0] : memref<8x1024xf32, #tpu.memory_space<vmem>>, vector<8x1024xf32>
    %c0_1 = arith.constant 0 : index
    %c0_2 = arith.constant 0 : index
    %1 = vector.load %arg3[%c0_1, %c0_2] : memref<8x1024xf32, #tpu.memory_space<vmem>>, vector<8x1024xf32>
    %c0_3 = arith.constant 0 : index
    %c0_4 = arith.constant 0 : index
    %2 = vector.load %arg4[%c0_3, %c0_4] : memref<8x1024xf32, #tpu.memory_space<vmem>>, vector<8x1024xf32>
    %c0_5 = arith.constant 0 : index
    %3 = memref.load %arg0[%c0_5] : memref<2xf32, #tpu.memory_space<smem>>
    %4 = vector.broadcast %3 : f32 to vector<8x1024xf32>
    %5 = arith.mulf %0, %4 : vector<8x1024xf32>
    %c1 = arith.constant 1 : index
    %6 = memref.load %arg0[%c1] : memref<2xf32, #tpu.memory_space<smem>>
    %7 = vector.broadcast %6 : f32 to vector<8x1024xf32>
    %8 = arith.mulf %1, %7 : vector<8x1024xf32>
    %9 = arith.addf %5, %8 : vector<8x1024xf32>
    %c0_6 = arith.constant 0 : index
    %10 = memref.load %arg1[%c0_6] : memref<3xf32, #tpu.memory_space<smem>>
    %cst = arith.constant 0.000000e+00 : f32
    %11 = vector.broadcast %cst : f32 to vector<8x1024xf32>
    %12 = arith.cmpf oge, %9, %11 : vector<8x1024xf32>
    %cst_7 = arith.constant 5.000000e-02 : f32
    %13 = vector.broadcast %cst_7 : f32 to vector<8x1024xf32>
    %14 = arith.mulf %13, %9 : vector<8x1024xf32>
    %15 = arith.select %12, %9, %14 : vector<8x1024xi1>, vector<8x1024xf32>
    %16 = arith.truncf %15 : vector<8x1024xf32> to vector<8x1024xbf16>
    %c0_8 = arith.constant 0 : index
    %c0_9 = arith.constant 0 : index
    %17 = vector.load %arg5[%c0_8, %c0_9] : memref<1024x256xbf16, #tpu.memory_space<vmem>>, vector<1024x256xbf16>
    %cst_10 = arith.constant dense<0.000000e+00> : vector<8x256xf32>
    %18 = tpu.matmul %16, %17, %cst_10 {dimension_numbers = #tpu.dot_dimension_numbers<[1], [0], [0], [1], [0, 0, 1, 1], [], []>} : vector<8x1024xbf16>, vector<1024x256xbf16>, vector<8x256xf32> -> vector<8x256xf32>
    %c0_11 = arith.constant 0 : index
    %c0_12 = arith.constant 0 : index
    %19 = vector.load %arg6[%c0_11, %c0_12] : memref<1x256xf32, #tpu.memory_space<vmem>>, vector<1x256xf32>
    %20 = vector.broadcast %19 : vector<1x256xf32> to vector<8x256xf32>
    %21 = arith.addf %18, %20 : vector<8x256xf32>
    %c0_13 = arith.constant 0 : index
    %c0_14 = arith.constant 0 : index
    %22 = vector.load %arg7[%c0_13, %c0_14] : memref<1x256xf32, #tpu.memory_space<vmem>>, vector<1x256xf32>
    %23 = vector.broadcast %22 : vector<1x256xf32> to vector<8x256xf32>
    %24 = arith.mulf %21, %23 : vector<8x256xf32>
    %c0_15 = arith.constant 0 : index
    %c0_16 = arith.constant 0 : index
    %25 = vector.load %arg8[%c0_15, %c0_16] : memref<1x256xf32, #tpu.memory_space<vmem>>, vector<1x256xf32>
    %26 = vector.broadcast %25 : vector<1x256xf32> to vector<8x256xf32>
    %27 = arith.addf %24, %26 : vector<8x256xf32>
    %cst_17 = arith.constant 0.000000e+00 : f32
    %28 = vector.broadcast %cst_17 : f32 to vector<8x256xf32>
    %29 = arith.cmpf oge, %27, %28 : vector<8x256xf32>
    %cst_18 = arith.constant 5.000000e-02 : f32
    %30 = vector.broadcast %cst_18 : f32 to vector<8x256xf32>
    %31 = arith.mulf %30, %27 : vector<8x256xf32>
    %32 = arith.select %29, %27, %31 : vector<8x256xi1>, vector<8x256xf32>
    %c0_19 = arith.constant 0 : index
    %c0_20 = arith.constant 0 : index
    %33 = vector.load %arg9[%c0_19, %c0_20] : memref<1x256xf32, #tpu.memory_space<vmem>>, vector<1x256xf32>
    %34 = vector.broadcast %33 : vector<1x256xf32> to vector<8x256xf32>
    %35 = arith.mulf %32, %34 : vector<8x256xf32>
    %cst_21 = arith.constant dense<0.000000e+00> : vector<8xf32>
    %36 = vector.multi_reduction <add>, %35, %cst_21 [1] : vector<8x256xf32> to vector<8xf32>
    %37 = vector.shape_cast %36 : vector<8xf32> to vector<8x1xf32>
    %38 = vector.broadcast %10 : f32 to vector<8x1xf32>
    %39 = arith.addf %37, %38 : vector<8x1xf32>
    %c1_22 = arith.constant 1 : index
    %40 = memref.load %arg1[%c1_22] : memref<3xf32, #tpu.memory_space<smem>>
    %cst_23 = arith.constant 0.000000e+00 : f32
    %41 = vector.broadcast %cst_23 : f32 to vector<8x1024xf32>
    %42 = arith.cmpf oge, %2, %41 : vector<8x1024xf32>
    %cst_24 = arith.constant 5.000000e-02 : f32
    %43 = vector.broadcast %cst_24 : f32 to vector<8x1024xf32>
    %44 = arith.mulf %43, %2 : vector<8x1024xf32>
    %45 = arith.select %42, %2, %44 : vector<8x1024xi1>, vector<8x1024xf32>
    %46 = arith.truncf %45 : vector<8x1024xf32> to vector<8x1024xbf16>
    %c0_25 = arith.constant 0 : index
    %c0_26 = arith.constant 0 : index
    %47 = vector.load %arg10[%c0_25, %c0_26] : memref<1024x256xbf16, #tpu.memory_space<vmem>>, vector<1024x256xbf16>
    %cst_27 = arith.constant dense<0.000000e+00> : vector<8x256xf32>
    %48 = tpu.matmul %46, %47, %cst_27 {dimension_numbers = #tpu.dot_dimension_numbers<[1], [0], [0], [1], [0, 0, 1, 1], [], []>} : vector<8x1024xbf16>, vector<1024x256xbf16>, vector<8x256xf32> -> vector<8x256xf32>
    %c0_28 = arith.constant 0 : index
    %c0_29 = arith.constant 0 : index
    %49 = vector.load %arg11[%c0_28, %c0_29] : memref<1x256xf32, #tpu.memory_space<vmem>>, vector<1x256xf32>
    %50 = vector.broadcast %49 : vector<1x256xf32> to vector<8x256xf32>
    %51 = arith.addf %48, %50 : vector<8x256xf32>
    %c0_30 = arith.constant 0 : index
    %c0_31 = arith.constant 0 : index
    %52 = vector.load %arg12[%c0_30, %c0_31] : memref<1x256xf32, #tpu.memory_space<vmem>>, vector<1x256xf32>
    %53 = vector.broadcast %52 : vector<1x256xf32> to vector<8x256xf32>
    %54 = arith.mulf %51, %53 : vector<8x256xf32>
    %c0_32 = arith.constant 0 : index
    %c0_33 = arith.constant 0 : index
    %55 = vector.load %arg13[%c0_32, %c0_33] : memref<1x256xf32, #tpu.memory_space<vmem>>, vector<1x256xf32>
    %56 = vector.broadcast %55 : vector<1x256xf32> to vector<8x256xf32>
    %57 = arith.addf %54, %56 : vector<8x256xf32>
    %cst_34 = arith.constant 0.000000e+00 : f32
    %58 = vector.broadcast %cst_34 : f32 to vector<8x256xf32>
    %59 = arith.cmpf oge, %57, %58 : vector<8x256xf32>
    %cst_35 = arith.constant 5.000000e-02 : f32
    %60 = vector.broadcast %cst_35 : f32 to vector<8x256xf32>
    %61 = arith.mulf %60, %57 : vector<8x256xf32>
    %62 = arith.select %59, %57, %61 : vector<8x256xi1>, vector<8x256xf32>
    %c0_36 = arith.constant 0 : index
    %c0_37 = arith.constant 0 : index
    %63 = vector.load %arg14[%c0_36, %c0_37] : memref<1x256xf32, #tpu.memory_space<vmem>>, vector<1x256xf32>
    %64 = vector.broadcast %63 : vector<1x256xf32> to vector<8x256xf32>
    %65 = arith.mulf %62, %64 : vector<8x256xf32>
    %cst_38 = arith.constant dense<0.000000e+00> : vector<8xf32>
    %66 = vector.multi_reduction <add>, %65, %cst_38 [1] : vector<8x256xf32> to vector<8xf32>
    %67 = vector.shape_cast %66 : vector<8xf32> to vector<8x1xf32>
    %68 = vector.broadcast %40 : f32 to vector<8x1xf32>
    %69 = arith.addf %67, %68 : vector<8x1xf32>
    %c0_39 = arith.constant 0 : index
    %c0_40 = arith.constant 0 : index
    %70 = vector.load %arg15[%c0_39, %c0_40] : memref<1x1024xf32, #tpu.memory_space<vmem>>, vector<1x1024xf32>
    %71 = vector.broadcast %70 : vector<1x1024xf32> to vector<8x1024xf32>
    %72 = arith.mulf %9, %71 : vector<8x1024xf32>
    %c0_41 = arith.constant 0 : index
    %c0_42 = arith.constant 0 : index
    %73 = vector.load %arg16[%c0_41, %c0_42] : memref<1x1024xf32, #tpu.memory_space<vmem>>, vector<1x1024xf32>
    %74 = vector.broadcast %73 : vector<1x1024xf32> to vector<8x1024xf32>
    %75 = arith.addf %72, %74 : vector<8x1024xf32>
    %cst_43 = arith.constant 0.000000e+00 : f32
    %76 = vector.broadcast %cst_43 : f32 to vector<8x1024xf32>
    %77 = arith.cmpf oge, %75, %76 : vector<8x1024xf32>
    %cst_44 = arith.constant 5.000000e-02 : f32
    %78 = vector.broadcast %cst_44 : f32 to vector<8x1024xf32>
    %79 = arith.mulf %78, %75 : vector<8x1024xf32>
    %80 = arith.select %77, %75, %79 : vector<8x1024xi1>, vector<8x1024xf32>
    %81 = arith.truncf %80 : vector<8x1024xf32> to vector<8x1024xbf16>
    %c0_45 = arith.constant 0 : index
    %c0_46 = arith.constant 0 : index
    %82 = vector.load %arg17[%c0_45, %c0_46] : memref<1x1024xf32, #tpu.memory_space<vmem>>, vector<1x1024xf32>
    %83 = vector.broadcast %82 : vector<1x1024xf32> to vector<8x1024xf32>
    %84 = arith.mulf %2, %83 : vector<8x1024xf32>
    %c0_47 = arith.constant 0 : index
    %c0_48 = arith.constant 0 : index
    %85 = vector.load %arg18[%c0_47, %c0_48] : memref<1x1024xf32, #tpu.memory_space<vmem>>, vector<1x1024xf32>
    %86 = vector.broadcast %85 : vector<1x1024xf32> to vector<8x1024xf32>
    %87 = arith.addf %84, %86 : vector<8x1024xf32>
    %cst_49 = arith.constant 0.000000e+00 : f32
    %88 = vector.broadcast %cst_49 : f32 to vector<8x1024xf32>
    %89 = arith.cmpf oge, %87, %88 : vector<8x1024xf32>
    %cst_50 = arith.constant 5.000000e-02 : f32
    %90 = vector.broadcast %cst_50 : f32 to vector<8x1024xf32>
    %91 = arith.mulf %90, %87 : vector<8x1024xf32>
    %92 = arith.select %89, %87, %91 : vector<8x1024xi1>, vector<8x1024xf32>
    %93 = arith.truncf %92 : vector<8x1024xf32> to vector<8x1024xbf16>
    %c0_51 = arith.constant 0 : index
    %c0_52 = arith.constant 0 : index
    %94 = vector.load %arg19[%c0_51, %c0_52] : memref<1024x512xbf16, #tpu.memory_space<vmem>>, vector<1024x512xbf16>
    %cst_53 = arith.constant dense<0.000000e+00> : vector<8x512xf32>
    %95 = tpu.matmul %81, %94, %cst_53 {dimension_numbers = #tpu.dot_dimension_numbers<[1], [0], [0], [1], [0, 0, 1, 1], [], []>} : vector<8x1024xbf16>, vector<1024x512xbf16>, vector<8x512xf32> -> vector<8x512xf32>
    %c0_54 = arith.constant 0 : index
    %c0_55 = arith.constant 0 : index
    %96 = vector.load %arg20[%c0_54, %c0_55] : memref<1024x512xbf16, #tpu.memory_space<vmem>>, vector<1024x512xbf16>
    %cst_56 = arith.constant dense<0.000000e+00> : vector<8x512xf32>
    %97 = tpu.matmul %93, %96, %cst_56 {dimension_numbers = #tpu.dot_dimension_numbers<[1], [0], [0], [1], [0, 0, 1, 1], [], []>} : vector<8x1024xbf16>, vector<1024x512xbf16>, vector<8x512xf32> -> vector<8x512xf32>
    %98 = arith.addf %95, %97 : vector<8x512xf32>
    %c0_57 = arith.constant 0 : index
    %c0_58 = arith.constant 0 : index
    %99 = vector.load %arg21[%c0_57, %c0_58] : memref<1x512xf32, #tpu.memory_space<vmem>>, vector<1x512xf32>
    %100 = vector.broadcast %99 : vector<1x512xf32> to vector<8x512xf32>
    %101 = arith.addf %98, %100 : vector<8x512xf32>
    %c0_59 = arith.constant 0 : index
    %c0_60 = arith.constant 0 : index
    %102 = vector.load %arg22[%c0_59, %c0_60] : memref<1x512xf32, #tpu.memory_space<vmem>>, vector<1x512xf32>
    %103 = vector.broadcast %102 : vector<1x512xf32> to vector<8x512xf32>
    %104 = arith.mulf %101, %103 : vector<8x512xf32>
    %c0_61 = arith.constant 0 : index
    %c0_62 = arith.constant 0 : index
    %105 = vector.load %arg23[%c0_61, %c0_62] : memref<1x512xf32, #tpu.memory_space<vmem>>, vector<1x512xf32>
    %106 = vector.broadcast %105 : vector<1x512xf32> to vector<8x512xf32>
    %107 = arith.addf %104, %106 : vector<8x512xf32>
    %cst_63 = arith.constant 0.000000e+00 : f32
    %108 = vector.broadcast %cst_63 : f32 to vector<8x512xf32>
    %109 = arith.cmpf oge, %107, %108 : vector<8x512xf32>
    %cst_64 = arith.constant 5.000000e-02 : f32
    %110 = vector.broadcast %cst_64 : f32 to vector<8x512xf32>
    %111 = arith.mulf %110, %107 : vector<8x512xf32>
    %112 = arith.select %109, %107, %111 : vector<8x512xi1>, vector<8x512xf32>
    %c0_65 = arith.constant 0 : index
    %c0_66 = arith.constant 0 : index
    %113 = vector.load %arg24[%c0_65, %c0_66] : memref<1x512xf32, #tpu.memory_space<vmem>>, vector<1x512xf32>
    %114 = vector.broadcast %113 : vector<1x512xf32> to vector<8x512xf32>
    %115 = arith.mulf %112, %114 : vector<8x512xf32>
    %cst_67 = arith.constant dense<0.000000e+00> : vector<8xf32>
    %116 = vector.multi_reduction <add>, %115, %cst_67 [1] : vector<8x512xf32> to vector<8xf32>
    %117 = vector.shape_cast %116 : vector<8xf32> to vector<8x1xf32>
    %c2 = arith.constant 2 : index
    %118 = memref.load %arg1[%c2] : memref<3xf32, #tpu.memory_space<smem>>
    %119 = vector.broadcast %118 : f32 to vector<8x1xf32>
    %120 = arith.addf %117, %119 : vector<8x1xf32>
    %121 = tpu.iota {dimensions = array<i32: 1>} : vector<8x128xi32>
    %122 = vector.shape_cast %39 : vector<8x1xf32> to vector<8x1xf32>
    %123 = vector.broadcast %122 : vector<8x1xf32> to vector<8x128xf32>
    %124 = vector.shape_cast %69 : vector<8x1xf32> to vector<8x1xf32>
    %125 = vector.broadcast %124 : vector<8x1xf32> to vector<8x128xf32>
    %126 = vector.shape_cast %120 : vector<8x1xf32> to vector<8x1xf32>
    %127 = vector.broadcast %126 : vector<8x1xf32> to vector<8x128xf32>
    %c0_i32 = arith.constant 0 : i32
    %128 = vector.broadcast %c0_i32 : i32 to vector<8x128xi32>
    %129 = arith.cmpi eq, %121, %128 : vector<8x128xi32>
    %c1_i32 = arith.constant 1 : i32
    %130 = vector.broadcast %c1_i32 : i32 to vector<8x128xi32>
    %131 = arith.cmpi eq, %121, %130 : vector<8x128xi32>
    %c2_i32 = arith.constant 2 : i32
    %132 = vector.broadcast %c2_i32 : i32 to vector<8x128xi32>
    %133 = arith.cmpi eq, %121, %132 : vector<8x128xi32>
    %cst_68 = arith.constant 0.000000e+00 : f32
    %134 = vector.broadcast %cst_68 : f32 to vector<8x128xf32>
    %135 = arith.select %133, %127, %134 : vector<8x128xi1>, vector<8x128xf32>
    %136 = arith.select %131, %125, %135 : vector<8x128xi1>, vector<8x128xf32>
    %137 = arith.select %129, %123, %136 : vector<8x128xi1>, vector<8x128xf32>
    %c0_69 = arith.constant 0 : index
    %c0_70 = arith.constant 0 : index
    %138 = vector.load %arg25[%c0_69, %c0_70] : memref<8x128xf32, #tpu.memory_space<vmem>>, vector<8x128xf32>
    tpu.vector_store %arg25[%c0_69, %c0_70], %137 {strides = array<i32>} : memref<8x128xf32, #tpu.memory_space<vmem>>, vector<8x128xf32>,
    return
  }
}

</mosaic_0001>

<llo_original>
// kernel: net_forward.1
$region0: #{net_forward.1}
  #allocation0 [shape = 'u32[]', space=smem, size = 0x4, offset = 0x4, fixed_abs, tag = 'smem constant byte address 0x4 - core index']
  #allocation1 [shape = 'u32[144,128]{1,0:T(1,128)}', space=vmem, size = 0x12000, scoped, tag = 'internal scratch']
  %s0 = inlined_call_operand.vmem [shape: f32[2], index: 0, kind: input, shape index: {}]
  %s1 = inlined_call_operand.vmem [shape: f32[3], index: 1, kind: input, shape index: {}]
  %s2 = inlined_call_operand.vmem [shape: f32[8,1024], index: 2, kind: input, shape index: {}]
  %s3 = inlined_call_operand.vmem [shape: f32[8,1024], index: 3, kind: input, shape index: {}]
  %s4 = inlined_call_operand.vmem [shape: f32[8,1024], index: 4, kind: input, shape index: {}]
  %s5 = inlined_call_operand.vmem [shape: bf16[1024,256], index: 5, kind: input, shape index: {}]
  %s6 = inlined_call_operand.vmem [shape: f32[1,256], index: 6, kind: input, shape index: {}]
  %s7 = inlined_call_operand.vmem [shape: f32[1,256], index: 7, kind: input, shape index: {}]
  %s8 = inlined_call_operand.vmem [shape: f32[1,256], index: 8, kind: input, shape index: {}]
  %s9 = inlined_call_operand.vmem [shape: f32[1,256], index: 9, kind: input, shape index: {}]
  %s10 = inlined_call_operand.hbm [shape: bf16[1024,256], index: 10, kind: input, shape index: {}]
  %s11 = inlined_call_operand.vmem [shape: f32[1,256], index: 11, kind: input, shape index: {}]
  %s12 = inlined_call_operand.vmem [shape: f32[1,256], index: 12, kind: input, shape index: {}]
  %s13 = inlined_call_operand.vmem [shape: f32[1,256], index: 13, kind: input, shape index: {}]
  %s14 = inlined_call_operand.vmem [shape: f32[1,256], index: 14, kind: input, shape index: {}]
  %s15 = inlined_call_operand.vmem [shape: f32[1,1024], index: 15, kind: input, shape index: {}]
  %s16 = inlined_call_operand.vmem [shape: f32[1,1024], index: 16, kind: input, shape index: {}]
  %s17 = inlined_call_operand.vmem [shape: f32[1,1024], index: 17, kind: input, shape index: {}]
  %s18 = inlined_call_operand.vmem [shape: f32[1,1024], index: 18, kind: input, shape index: {}]
  %s19 = inlined_call_operand.hbm [shape: bf16[1024,512], index: 19, kind: input, shape index: {}]
  %s20 = inlined_call_operand.hbm [shape: bf16[1024,512], index: 20, kind: input, shape index: {}]
  %s21 = inlined_call_operand.vmem [shape: f32[1,512], index: 21, kind: input, shape index: {}]
  %s22 = inlined_call_operand.vmem [shape: f32[1,512], index: 22, kind: input, shape index: {}]
  %s23 = inlined_call_operand.vmem [shape: f32[1,512], index: 23, kind: input, shape index: {}]
  %s24 = inlined_call_operand.vmem [shape: f32[1,512], index: 24, kind: input, shape index: {}]
  %s25 = inlined_call_operand.vmem [shape: f32[8,128], index: 25, kind: output, shape index: {}]
  %s26 = sld [smem:[#allocation0]]
  $region130: #{net_forward.1} parent=0
    _
  %s28 = ssub.s32 1, %s26
  %s29 = scalar_select 0, %s28, %s26
  $region1: #{net_forward.1} parent=0
    #allocation2 [shape = 'u8[512]{0}', space=smem, size = 0x200, scoped, tag = 'input window, operand 0, single buffered']
    #allocation3 [shape = 's32[1]{0}', space=sflag, size = 0x4, scoped, tag = 'scoped memory for net_forward.1']
    #allocation4 [shape = 's32[1]{0}', space=sflag, size = 0x4, scoped, tag = 'scoped memory for net_forward.1']
    #allocation5 [shape = 'u8[512]{0}', space=smem, size = 0x200, scoped, tag = 'input window, operand 1, single buffered']
    #allocation6 [shape = 's32[1]{0}', space=sflag, size = 0x4, scoped, tag = 'scoped memory for net_forward.1']
    #allocation7 [shape = 'u8[524288]{0}', space=vmem, size = 0x80000, scoped, tag = 'input window, operand 10, single buffered']
    #allocation8 [shape = 'u8[1048576]{0}', space=vmem, size = 0x100000, scoped, tag = 'input window, operand 19, single buffered']
    #allocation9 [shape = 's32[1]{0}', space=sflag, size = 0x4, scoped, tag = 'scoped memory for net_forward.1']
    #allocation10 [shape = 'u8[1048576]{0}', space=vmem, size = 0x100000, scoped, tag = 'input window, operand 20, single buffered']
    %30 = vsyncpa [#allocation4], 0
    %31 = vsyncpa [#allocation6], 0
    %32 = vsyncpa [#allocation3], 0
    %33 = vsyncpa [#allocation9], 0
    // Predicated region
    $region2: #{net_forward.1} parent=1 // pred_check
      _
    $region3: #{net_forward.1} parent=1 // pred_check_branch
      %35 = sbr.rel (0) target = $region5
    $region4: #{net_forward.1} parent=1 // pred_region
      %s37 = ssub.s32 16, 16
      %38 = vsyncadd [#allocation4], %s37
      %s40 = sshll.u32 %s0, 4
      %s41 = int_to_ptr.vmem [resolvable:$true] %s40
      %43 = dma.vmem_to_smem %s41, 16, [#allocation2], [#allocation4]
    $region5: #{net_forward.1} parent=1 // pred_fallthru
      _
    // Predicated region
    $region6: #{net_forward.1} parent=1 // pred_check
      _
    $region7: #{net_forward.1} parent=1 // pred_check_branch
      %45 = sbr.rel (0) target = $region9
    $region8: #{net_forward.1} parent=1 // pred_region
      %s47 = ssub.s32 16, 16
      %48 = vsyncadd [#allocation6], %s47
      %s50 = sshll.u32 %s1, 4
      %s51 = int_to_ptr.vmem [resolvable:$true] %s50
      %53 = dma.vmem_to_smem %s51, 16, [#allocation5], [#allocation6]
    $region9: #{net_forward.1} parent=1 // pred_fallthru
      _
    // Predicated region
    $region10: #{net_forward.1} parent=1 // pred_check
      _
    $region11: #{net_forward.1} parent=1 // pred_check_branch
      %55 = sbr.rel (0) target = $region13
    $region12: #{net_forward.1} parent=1 // pred_region
      _
    $region13: #{net_forward.1} parent=1 // pred_fallthru
      _
    // Predicated region
    $region14: #{net_forward.1} parent=1 // pred_check
      _
    $region15: #{net_forward.1} parent=1 // pred_check_branch
      %57 = sbr.rel (0) target = $region17
    $region16: #{net_forward.1} parent=1 // pred_region
      _
    $region17: #{net_forward.1} parent=1 // pred_fallthru
      _
    // Predicated region
    $region18: #{net_forward.1} parent=1 // pred_check
      _
    $region19: #{net_forward.1} parent=1 // pred_check_branch
      %59 = sbr.rel (0) target = $region21
    $region20: #{net_forward.1} parent=1 // pred_region
      _
    $region21: #{net_forward.1} parent=1 // pred_fallthru
      _
    // Predicated region
    $region22: #{net_forward.1} parent=1 // pred_check
      _
    $region23: #{net_forward.1} parent=1 // pred_check_branch
      %61 = sbr.rel (0) target = $region25
    $region24: #{net_forward.1} parent=1 // pred_region
      _
    $region25: #{net_forward.1} parent=1 // pred_fallthru
      _
    // Predicated region
    $region26: #{net_forward.1} parent=1 // pred_check
      _
    $region27: #{net_forward.1} parent=1 // pred_check_branch
      %63 = sbr.rel (0) target = $region29
    $region28: #{net_forward.1} parent=1 // pred_region
      _
    $region29: #{net_forward.1} parent=1 // pred_fallthru
      _
    // Predicated region
    $region30: #{net_forward.1} parent=1 // pred_check
      _
    $region31: #{net_forward.1} parent=1 // pred_check_branch
      %65 = sbr.rel (0) target = $region33
    $region32: #{net_forward.1} parent=1 // pred_region
      _
    $region33: #{net_forward.1} parent=1 // pred_fallthru
      _
    // Predicated region
    $region34: #{net_forward.1} parent=1 // pred_check
      _
    $region35: #{net_forward.1} parent=1 // pred_check_branch
      %67 = sbr.rel (0) target = $region37
    $region36: #{net_forward.1} parent=1 // pred_region
      _
    $region37: #{net_forward.1} parent=1 // pred_fallthru
      _
    // Predicated region
    $region38: #{net_forward.1} parent=1 // pred_check
      _
    $region39: #{net_forward.1} parent=1 // pred_check_branch
      %69 = sbr.rel (0) target = $region41
    $region40: #{net_forward.1} parent=1 // pred_region
      _
    $region41: #{net_forward.1} parent=1 // pred_fallthru
      _
    // Predicated region
    $region42: #{net_forward.1} parent=1 // pred_check
      _
    $region43: #{net_forward.1} parent=1 // pred_check_branch
      %71 = sbr.rel (0) target = $region45
    $region44: #{net_forward.1} parent=1 // pred_region
      %s73 = ssub.s32 16384, 16384
      %74 = vsyncadd [#allocation3], %s73
      %s75 = sshll.u32 [#allocation7], 4
      %s76 = int_to_ptr.vmem [resolvable:$true] %s75
      %81 = dma.hbm_to_vmem [thread:$0]  %s10, 16384, %s76, [#allocation3], 128, 128, 8
    $region45: #{net_forward.1} parent=1 // pred_fallthru
      _
    // Predicated region
    $region46: #{net_forward.1} parent=1 // pred_check
      _
    $region47: #{net_forward.1} parent=1 // pred_check_branch
      %83 = sbr.rel (0) target = $region49
    $region48: #{net_forward.1} parent=1 // pred_region
      _
    $region49: #{net_forward.1} parent=1 // pred_fallthru
      _
    // Predicated region
    $region50: #{net_forward.1} parent=1 // pred_check
      _
    $region51: #{net_forward.1} parent=1 // pred_check_branch
      %85 = sbr.rel (0) target = $region53
    $region52: #{net_forward.1} parent=1 // pred_region
      _
    $region53: #{net_forward.1} parent=1 // pred_fallthru
      _
    // Predicated region
    $region54: #{net_forward.1} parent=1 // pred_check
      _
    $region55: #{net_forward.1} parent=1 // pred_check_branch
      %87 = sbr.rel (0) target = $region57
    $region56: #{net_forward.1} parent=1 // pred_region
      _
    $region57: #{net_forward.1} parent=1 // pred_fallthru
      _
    // Predicated region
    $region58: #{net_forward.1} parent=1 // pred_check
      _
    $region59: #{net_forward.1} parent=1 // pred_check_branch
      %89 = sbr.rel (0) target = $region61
    $region60: #{net_forward.1} parent=1 // pred_region
      _
    $region61: #{net_forward.1} parent=1 // pred_fallthru
      _
    // Predicated region
    $region62: #{net_forward.1} parent=1 // pred_check
      _
    $region63: #{net_forward.1} parent=1 // pred_check_branch
      %91 = sbr.rel (0) target = $region65
    $region64: #{net_forward.1} parent=1 // pred_region
      _
    $region65: #{net_forward.1} parent=1 // pred_fallthru
      _
    // Predicated region
    $region66: #{net_forward.1} parent=1 // pred_check
      _
    $region67: #{net_forward.1} parent=1 // pred_check_branch
      %93 = sbr.rel (0) target = $region69
    $region68: #{net_forward.1} parent=1 // pred_region
      _
    $region69: #{net_forward.1} parent=1 // pred_fallthru
      _
    // Predicated region
    $region70: #{net_forward.1} parent=1 // pred_check
      _
    $region71: #{net_forward.1} parent=1 // pred_check_branch
      %95 = sbr.rel (0) target = $region73
    $region72: #{net_forward.1} parent=1 // pred_region
      _
    $region73: #{net_forward.1} parent=1 // pred_fallthru
      _
    // Predicated region
    $region74: #{net_forward.1} parent=1 // pred_check
      _
    $region75: #{net_forward.1} parent=1 // pred_check_branch
      %97 = sbr.rel (0) target = $region77
    $region76: #{net_forward.1} parent=1 // pred_region
      _
    $region77: #{net_forward.1} parent=1 // pred_fallthru
      _
    // Predicated region
    $region78: #{net_forward.1} parent=1 // pred_check
      _
    $region79: #{net_forward.1} parent=1 // pred_check_branch
      %99 = sbr.rel (0) target = $region81
    $region80: #{net_forward.1} parent=1 // pred_region
      %s101 = ssub.s32 32768, 32768
      %102 = vsyncadd [#allocation9], %s101
      %s103 = sshll.u32 [#allocation8], 4
      %s104 = int_to_ptr.vmem [resolvable:$true] %s103
      %109 = dma.hbm_to_vmem [thread:$0]  %s19, 32768, %s104, [#allocation9], 256, 256, 16
    $region81: #{net_forward.1} parent=1 // pred_fallthru
      _
    // Predicated region
    $region82: #{net_forward.1} parent=1 // pred_check
      _
    $region83: #{net_forward.1} parent=1 // pred_check_branch
      %111 = sbr.rel (0) target = $region85
    $region84: #{net_forward.1} parent=1 // pred_region
      %s113 = ssub.s32 32768, 32768
      %114 = vsyncadd [#allocation9], %s113
      %s115 = sshll.u32 [#allocation10], 4
      %s116 = int_to_ptr.vmem [resolvable:$true] %s115
      %121 = dma.hbm_to_vmem [thread:$0]  %s20, 32768, %s116, [#allocation9], 256, 256, 16
    $region85: #{net_forward.1} parent=1 // pred_fallthru
      _
    // Predicated region
    $region86: #{net_forward.1} parent=1 // pred_check
      _
    $region87: #{net_forward.1} parent=1 // pred_check_branch
      %123 = sbr.rel (0) target = $region89
    $region88: #{net_forward.1} parent=1 // pred_region
      _
    $region89: #{net_forward.1} parent=1 // pred_fallthru
      _
    // Predicated region
    $region90: #{net_forward.1} parent=1 // pred_check
      _
    $region91: #{net_forward.1} parent=1 // pred_check_branch
      %125 = sbr.rel (0) target = $region93
    $region92: #{net_forward.1} parent=1 // pred_region
      _
    $region93: #{net_forward.1} parent=1 // pred_fallthru
      _
    // Predicated region
    $region94: #{net_forward.1} parent=1 // pred_check
      _
    $region95: #{net_forward.1} parent=1 // pred_check_branch
      %127 = sbr.rel (0) target = $region97
    $region96: #{net_forward.1} parent=1 // pred_region
      _
    $region97: #{net_forward.1} parent=1 // pred_fallthru
      _
    // Predicated region
    $region98: #{net_forward.1} parent=1 // pred_check
      _
    $region99: #{net_forward.1} parent=1 // pred_check_branch
      %129 = sbr.rel (0) target = $region101
    $region100: #{net_forward.1} parent=1 // pred_region
      _
    $region101: #{net_forward.1} parent=1 // pred_fallthru
      _
    // Predicated region
    $region102: #{net_forward.1} parent=1 // pred_check
      _
    $region103: #{net_forward.1} parent=1 // pred_check_branch
      %131 = sbr.rel (0) target = $region105
    $region104: #{net_forward.1} parent=1 // pred_region
      %132 = dma.done [#allocation4], 16
    $region105: #{net_forward.1} parent=1 // pred_fallthru
      _
    // Predicated region
    $region106: #{net_forward.1} parent=1 // pred_check
      _
    $region107: #{net_forward.1} parent=1 // pred_check_branch
      %134 = sbr.rel (0) target = $region109
    $region108: #{net_forward.1} parent=1 // pred_region
      %135 = dma.done [#allocation6], 16
    $region109: #{net_forward.1} parent=1 // pred_fallthru
      _
    // Predicated region
    $region110: #{net_forward.1} parent=1 // pred_check
      _
    $region111: #{net_forward.1} parent=1 // pred_check_branch
      %137 = sbr.rel (0) target = $region113
    $region112: #{net_forward.1} parent=1 // pred_region
      %138 = dma.done [#allocation3], 16384
    $region113: #{net_forward.1} parent=1 // pred_fallthru
      _
    // Predicated region
    $region114: #{net_forward.1} parent=1 // pred_check
      _
    $region115: #{net_forward.1} parent=1 // pred_check_branch
      %140 = sbr.rel (0) target = $region117
    $region116: #{net_forward.1} parent=1 // pred_region
      %141 = dma.done [#allocation9], 32768
    $region117: #{net_forward.1} parent=1 // pred_fallthru
      _
    // Predicated region
    $region118: #{net_forward.1} parent=1 // pred_check
      _
    $region119: #{net_forward.1} parent=1 // pred_check_branch
      %143 = sbr.rel (0) target = $region121
    $region120: #{net_forward.1} parent=1 // pred_region
      %144 = dma.done [#allocation9], 32768
    $region121: #{net_forward.1} parent=1 // pred_fallthru
      _
    %145 = sfence
    %v146 = vld [vmem:[%s2] sm:$0xff]
    %v147 = vld [vmem:[%s2 + $0x8] sm:$0xff]
    %v148 = vld [vmem:[%s2 + $0x10] sm:$0xff]
    %v149 = vld [vmem:[%s2 + $0x18] sm:$0xff]
    %v150 = vld [vmem:[%s2 + $0x20] sm:$0xff]
    %v151 = vld [vmem:[%s2 + $0x28] sm:$0xff]
    %v152 = vld [vmem:[%s2 + $0x30] sm:$0xff]
    %v153 = vld [vmem:[%s2 + $0x38] sm:$0xff]
    %v154 = vld [vmem:[%s3] sm:$0xff]
    %v155 = vld [vmem:[%s3 + $0x8] sm:$0xff]
    %v156 = vld [vmem:[%s3 + $0x10] sm:$0xff]
    %v157 = vld [vmem:[%s3 + $0x18] sm:$0xff]
    %v158 = vld [vmem:[%s3 + $0x20] sm:$0xff]
    %v159 = vld [vmem:[%s3 + $0x28] sm:$0xff]
    %v160 = vld [vmem:[%s3 + $0x30] sm:$0xff]
    %v161 = vld [vmem:[%s3 + $0x38] sm:$0xff]
    %v162 = vld [vmem:[%s4] sm:$0xff]
    %v163 = vld [vmem:[%s4 + $0x8] sm:$0xff]
    %v164 = vld [vmem:[%s4 + $0x10] sm:$0xff]
    %v165 = vld [vmem:[%s4 + $0x18] sm:$0xff]
    %v166 = vld [vmem:[%s4 + $0x20] sm:$0xff]
    %v167 = vld [vmem:[%s4 + $0x28] sm:$0xff]
    %v168 = vld [vmem:[%s4 + $0x30] sm:$0xff]
    %v169 = vld [vmem:[%s4 + $0x38] sm:$0xff]
    %s170 = sld [smem:[#allocation2]]
    %v171 = vstv %s170
    %v172 = vmul.f32 %v146, %v171
    %v173 = vmul.f32 %v147, %v171
    %v174 = vmul.f32 %v148, %v171
    %v175 = vmul.f32 %v149, %v171
    %v176 = vmul.f32 %v150, %v171
    %v177 = vmul.f32 %v151, %v171
    %v178 = vmul.f32 %v152, %v171
    %v179 = vmul.f32 %v153, %v171
    %s180 = sld [smem:[#allocation2 + $0x1]]
    %v181 = vstv %s180
    %v182 = vmul.f32 %v154, %v181
    %v183 = vmul.f32 %v155, %v181
    %v184 = vmul.f32 %v156, %v181
    %v185 = vmul.f32 %v157, %v181
    %v186 = vmul.f32 %v158, %v181
    %v187 = vmul.f32 %v159, %v181
    %v188 = vmul.f32 %v160, %v181
    %v189 = vmul.f32 %v161, %v181
    %v190 = vadd.f32 %v172, %v182
    %v191 = vadd.f32 %v173, %v183
    %v192 = vadd.f32 %v174, %v184
    %v193 = vadd.f32 %v175, %v185
    %v194 = vadd.f32 %v176, %v186
    %v195 = vadd.f32 %v177, %v187
    %v196 = vadd.f32 %v178, %v188
    %v197 = vadd.f32 %v179, %v189
    %s198 = sld [smem:[#allocation5]]
    %vm199 = vcmp.ge.f32.partialorder %v190, 0.0
    %vm200 = vcmp.ge.f32.partialorder %v191, 0.0
    %vm201 = vcmp.ge.f32.partialorder %v192, 0.0
    %vm202 = vcmp.ge.f32.partialorder %v193, 0.0
    %vm203 = vcmp.ge.f32.partialorder %v194, 0.0
    %vm204 = vcmp.ge.f32.partialorder %v195, 0.0
    %vm205 = vcmp.ge.f32.partialorder %v196, 0.0
    %vm206 = vcmp.ge.f32.partialorder %v197, 0.0
    %v207 = vmul.f32 %v190, 0.05
    %v208 = vmul.f32 %v191, 0.05
    %v209 = vmul.f32 %v192, 0.05
    %v210 = vmul.f32 %v193, 0.05
    %v211 = vmul.f32 %v194, 0.05
    %v212 = vmul.f32 %v195, 0.05
    %v213 = vmul.f32 %v196, 0.05
    %v214 = vmul.f32 %v197, 0.05
    %v215 = vsel %vm199, %v190, %v207
    %v216 = vsel %vm200, %v191, %v208
    %v217 = vsel %vm201, %v192, %v209
    %v218 = vsel %vm202, %v193, %v210
    %v219 = vsel %vm203, %v194, %v211
    %v220 = vsel %vm204, %v195, %v212
    %v221 = vsel %vm205, %v196, %v213
    %v222 = vsel %vm206, %v197, %v214
    %v223 = vpack.c.bf16 %v215, %v215
    %v224 = vpack.c.bf16 %v216, %v216
    %v225 = vpack.c.bf16 %v217, %v217
    %v226 = vpack.c.bf16 %v218, %v218
    %v227 = vpack.c.bf16 %v219, %v219
    %v228 = vpack.c.bf16 %v220, %v220
    %v229 = vpack.c.bf16 %v221, %v221
    %v230 = vpack.c.bf16 %v222, %v222
    %v231 = vld [vmem:[%s5] sm:$0xff]
    %v232 = vld [vmem:[%s5 + $0x8] sm:$0xff]
    %v233 = vld [vmem:[%s5 + $0x10] sm:$0xff]
    %v234 = vld [vmem:[%s5 + $0x18] sm:$0xff]
    %v235 = vld [vmem:[%s5 + $0x20] sm:$0xff]
    %v236 = vld [vmem:[%s5 + $0x28] sm:$0xff]
    %v237 = vld [vmem:[%s5 + $0x30] sm:$0xff]
    %v238 = vld [vmem:[%s5 + $0x38] sm:$0xff]
    %v239 = vld [vmem:[%s5 + $0x40] sm:$0xff]
    %v240 = vld [vmem:[%s5 + $0x48] sm:$0xff]
    %v241 = vld [vmem:[%s5 + $0x50] sm:$0xff]
    %v242 = vld [vmem:[%s5 + $0x58] sm:$0xff]
    %v243 = vld [vmem:[%s5 + $0x60] sm:$0xff]
    %v244 = vld [vmem:[%s5 + $0x68] sm:$0xff]
    %v245 = vld [vmem:[%s5 + $0x70] sm:$0xff]
    %v246 = vld [vmem:[%s5 + $0x78] sm:$0xff]
    %v247 = vld [vmem:[%s5 + $0x80] sm:$0xff]
    %v248 = vld [vmem:[%s5 + $0x88] sm:$0xff]
    %v249 = vld [vmem:[%s5 + $0x90] sm:$0xff]
    %v250 = vld [vmem:[%s5 + $0x98] sm:$0xff]
    %v251 = vld [vmem:[%s5 + $0xa0] sm:$0xff]
    %v252 = vld [vmem:[%s5 + $0xa8] sm:$0xff]
    %v253 = vld [vmem:[%s5 + $0xb0] sm:$0xff]
    %v254 = vld [vmem:[%s5 + $0xb8] sm:$0xff]
    %v255 = vld [vmem:[%s5 + $0xc0] sm:$0xff]
    %v256 = vld [vmem:[%s5 + $0xc8] sm:$0xff]
    %v257 = vld [vmem:[%s5 + $0xd0] sm:$0xff]
    %v258 = vld [vmem:[%s5 + $0xd8] sm:$0xff]
    %v259 = vld [vmem:[%s5 + $0xe0] sm:$0xff]
    %v260 = vld [vmem:[%s5 + $0xe8] sm:$0xff]
    %v261 = vld [vmem:[%s5 + $0xf0] sm:$0xff]
    %v262 = vld [vmem:[%s5 + $0xf8] sm:$0xff]
    %v263 = vld [vmem:[%s5 + $0x100] sm:$0xff]
    %v264 = vld [vmem:[%s5 + $0x108] sm:$0xff]
    %v265 = vld [vmem:[%s5 + $0x110] sm:$0xff]
    %v266 = vld [vmem:[%s5 + $0x118] sm:$0xff]
    %v267 = vld [vmem:[%s5 + $0x120] sm:$0xff]
    %v268 = vld [vmem:[%s5 + $0x128] sm:$0xff]
    %v269 = vld [vmem:[%s5 + $0x130] sm:$0xff]
    %v270 = vld [vmem:[%s5 + $0x138] sm:$0xff]
    %v271 = vld [vmem:[%s5 + $0x140] sm:$0xff]
    %v272 = vld [vmem:[%s5 + $0x148] sm:$0xff]
    %v273 = vld [vmem:[%s5 + $0x150] sm:$0xff]
    %v274 = vld [vmem:[%s5 + $0x158] sm:$0xff]
    %v275 = vld [vmem:[%s5 + $0x160] sm:$0xff]
    %v276 = vld [vmem:[%s5 + $0x168] sm:$0xff]
    %v277 = vld [vmem:[%s5 + $0x170] sm:$0xff]
    %v278 = vld [vmem:[%s5 + $0x178] sm:$0xff]
    %v279 = vld [vmem:[%s5 + $0x180] sm:$0xff]
    %v280 = vld [vmem:[%s5 + $0x188] sm:$0xff]
    %v281 = vld [vmem:[%s5 + $0x190] sm:$0xff]
    %v282 = vld [vmem:[%s5 + $0x198] sm:$0xff]
    %v283 = vld [vmem:[%s5 + $0x1a0] sm:$0xff]
    %v284 = vld [vmem:[%s5 + $0x1a8] sm:$0xff]
    %v285 = vld [vmem:[%s5 + $0x1b0] sm:$0xff]
    %v286 = vld [vmem:[%s5 + $0x1b8] sm:$0xff]
    %v287 = vld [vmem:[%s5 + $0x1c0] sm:$0xff]
    %v288 = vld [vmem:[%s5 + $0x1c8] sm:$0xff]
    %v289 = vld [vmem:[%s5 + $0x1d0] sm:$0xff]
    %v290 = vld [vmem:[%s5 + $0x1d8] sm:$0xff]
    %v291 = vld [vmem:[%s5 + $0x1e0] sm:$0xff]
    %v292 = vld [vmem:[%s5 + $0x1e8] sm:$0xff]
    %v293 = vld [vmem:[%s5 + $0x1f0] sm:$0xff]
    %v294 = vld [vmem:[%s5 + $0x1f8] sm:$0xff]
    %v295 = vld [vmem:[%s5 + $0x200] sm:$0xff]
    %v296 = vld [vmem:[%s5 + $0x208] sm:$0xff]
    %v297 = vld [vmem:[%s5 + $0x210] sm:$0xff]
    %v298 = vld [vmem:[%s5 + $0x218] sm:$0xff]
    %v299 = vld [vmem:[%s5 + $0x220] sm:$0xff]
    %v300 = vld [vmem:[%s5 + $0x228] sm:$0xff]
    %v301 = vld [vmem:[%s5 + $0x230] sm:$0xff]
    %v302 = vld [vmem:[%s5 + $0x238] sm:$0xff]
    %v303 = vld [vmem:[%s5 + $0x240] sm:$0xff]
    %v304 = vld [vmem:[%s5 + $0x248] sm:$0xff]
    %v305 = vld [vmem:[%s5 + $0x250] sm:$0xff]
    %v306 = vld [vmem:[%s5 + $0x258] sm:$0xff]
    %v307 = vld [vmem:[%s5 + $0x260] sm:$0xff]
    %v308 = vld [vmem:[%s5 + $0x268] sm:$0xff]
    %v309 = vld [vmem:[%s5 + $0x270] sm:$0xff]
    %v310 = vld [vmem:[%s5 + $0x278] sm:$0xff]
    %v311 = vld [vmem:[%s5 + $0x280] sm:$0xff]
    %v312 = vld [vmem:[%s5 + $0x288] sm:$0xff]
    %v313 = vld [vmem:[%s5 + $0x290] sm:$0xff]
    %v314 = vld [vmem:[%s5 + $0x298] sm:$0xff]
    %v315 = vld [vmem:[%s5 + $0x2a0] sm:$0xff]
    %v316 = vld [vmem:[%s5 + $0x2a8] sm:$0xff]
    %v317 = vld [vmem:[%s5 + $0x2b0] sm:$0xff]
    %v318 = vld [vmem:[%s5 + $0x2b8] sm:$0xff]
    %v319 = vld [vmem:[%s5 + $0x2c0] sm:$0xff]
    %v320 = vld [vmem:[%s5 + $0x2c8] sm:$0xff]
    %v321 = vld [vmem:[%s5 + $0x2d0] sm:$0xff]
    %v322 = vld [vmem:[%s5 + $0x2d8] sm:$0xff]
    %v323 = vld [vmem:[%s5 + $0x2e0] sm:$0xff]
    %v324 = vld [vmem:[%s5 + $0x2e8] sm:$0xff]
    %v325 = vld [vmem:[%s5 + $0x2f0] sm:$0xff]
    %v326 = vld [vmem:[%s5 + $0x2f8] sm:$0xff]
    %v327 = vld [vmem:[%s5 + $0x300] sm:$0xff]
    %v328 = vld [vmem:[%s5 + $0x308] sm:$0xff]
    %v329 = vld [vmem:[%s5 + $0x310] sm:$0xff]
    %v330 = vld [vmem:[%s5 + $0x318] sm:$0xff]
    %v331 = vld [vmem:[%s5 + $0x320] sm:$0xff]
    %v332 = vld [vmem:[%s5 + $0x328] sm:$0xff]
    %v333 = vld [vmem:[%s5 + $0x330] sm:$0xff]
    %v334 = vld [vmem:[%s5 + $0x338] sm:$0xff]
    %v335 = vld [vmem:[%s5 + $0x340] sm:$0xff]
    %v336 = vld [vmem:[%s5 + $0x348] sm:$0xff]
    %v337 = vld [vmem:[%s5 + $0x350] sm:$0xff]
    %v338 = vld [vmem:[%s5 + $0x358] sm:$0xff]
    %v339 = vld [vmem:[%s5 + $0x360] sm:$0xff]
    %v340 = vld [vmem:[%s5 + $0x368] sm:$0xff]
    %v341 = vld [vmem:[%s5 + $0x370] sm:$0xff]
    %v342 = vld [vmem:[%s5 + $0x378] sm:$0xff]
    %v343 = vld [vmem:[%s5 + $0x380] sm:$0xff]
    %v344 = vld [vmem:[%s5 + $0x388] sm:$0xff]
    %v345 = vld [vmem:[%s5 + $0x390] sm:$0xff]
    %v346 = vld [vmem:[%s5 + $0x398] sm:$0xff]
    %v347 = vld [vmem:[%s5 + $0x3a0] sm:$0xff]
    %v348 = vld [vmem:[%s5 + $0x3a8] sm:$0xff]
    %v349 = vld [vmem:[%s5 + $0x3b0] sm:$0xff]
    %v350 = vld [vmem:[%s5 + $0x3b8] sm:$0xff]
    %v351 = vld [vmem:[%s5 + $0x3c0] sm:$0xff]
    %v352 = vld [vmem:[%s5 + $0x3c8] sm:$0xff]
    %v353 = vld [vmem:[%s5 + $0x3d0] sm:$0xff]
    %v354 = vld [vmem:[%s5 + $0x3d8] sm:$0xff]
    %v355 = vld [vmem:[%s5 + $0x3e0] sm:$0xff]
    %v356 = vld [vmem:[%s5 + $0x3e8] sm:$0xff]
    %v357 = vld [vmem:[%s5 + $0x3f0] sm:$0xff]
    %v358 = vld [vmem:[%s5 + $0x3f8] sm:$0xff]
    %v359 = vld [vmem:[%s6] sm:$0x3]
    %v361 = vlaneseq
    %v362 = vshrl.u32 %v361, 7
    %v363 = vsub.s32 0, %v362
    %v364 = vrot.slane %v359, %v363
    %v365 = vlaneseq
    %v366 = vshrl.u32 %v365, 7
    %v367 = vsub.s32 1, %v366
    %v368 = vrot.slane %v359, %v367
    %v499 = vunpack.c.l.b16 %v231
    %v500 = vunpack.c.h.b16 %v231
    %v501 = vunpack.c.l.b16 %v232
    %v502 = vunpack.c.h.b16 %v232
    %v503 = vunpack.c.l.b16 %v233
    %v504 = vunpack.c.h.b16 %v233
    %v505 = vunpack.c.l.b16 %v234
    %v506 = vunpack.c.h.b16 %v234
    %v507 = vunpack.c.l.b16 %v235
    %v508 = vunpack.c.h.b16 %v235
    %v509 = vunpack.c.l.b16 %v236
    %v510 = vunpack.c.h.b16 %v236
    %v511 = vunpack.c.l.b16 %v237
    %v512 = vunpack.c.h.b16 %v237
    %v513 = vunpack.c.l.b16 %v238
    %v514 = vunpack.c.h.b16 %v238
    %v515 = vunpack.c.l.b16 %v239
    %v516 = vunpack.c.h.b16 %v239
    %v517 = vunpack.c.l.b16 %v240
    %v518 = vunpack.c.h.b16 %v240
    %v519 = vunpack.c.l.b16 %v241
    %v520 = vunpack.c.h.b16 %v241
    %v521 = vunpack.c.l.b16 %v242
    %v522 = vunpack.c.h.b16 %v242
    %v523 = vunpack.c.l.b16 %v243
    %v524 = vunpack.c.h.b16 %v243
    %v525 = vunpack.c.l.b16 %v244
    %v526 = vunpack.c.h.b16 %v244
    %v527 = vunpack.c.l.b16 %v245
    %v528 = vunpack.c.h.b16 %v245
    %v529 = vunpack.c.l.b16 %v246
    %v530 = vunpack.c.h.b16 %v246
    %v531 = vunpack.c.l.b16 %v247
    %v532 = vunpack.c.h.b16 %v247
    %v533 = vunpack.c.l.b16 %v248
    %v534 = vunpack.c.h.b16 %v248
    %v535 = vunpack.c.l.b16 %v249
    %v536 = vunpack.c.h.b16 %v249
    %v537 = vunpack.c.l.b16 %v250
    %v538 = vunpack.c.h.b16 %v250
    %v539 = vunpack.c.l.b16 %v251
    %v540 = vunpack.c.h.b16 %v251
    %v541 = vunpack.c.l.b16 %v252
    %v542 = vunpack.c.h.b16 %v252
    %v543 = vunpack.c.l.b16 %v253
    %v544 = vunpack.c.h.b16 %v253
    %v545 = vunpack.c.l.b16 %v254
    %v546 = vunpack.c.h.b16 %v254
    %v547 = vunpack.c.l.b16 %v255
    %v548 = vunpack.c.h.b16 %v255
    %v549 = vunpack.c.l.b16 %v256
    %v550 = vunpack.c.h.b16 %v256
    %v551 = vunpack.c.l.b16 %v257
    %v552 = vunpack.c.h.b16 %v257
    %v553 = vunpack.c.l.b16 %v258
    %v554 = vunpack.c.h.b16 %v258
    %v555 = vunpack.c.l.b16 %v259
    %v556 = vunpack.c.h.b16 %v259
    %v557 = vunpack.c.l.b16 %v260
    %v558 = vunpack.c.h.b16 %v260
    %v559 = vunpack.c.l.b16 %v261
    %v560 = vunpack.c.h.b16 %v261
    %v561 = vunpack.c.l.b16 %v262
    %v562 = vunpack.c.h.b16 %v262
    %v563 = vunpack.c.l.b16 %v263
    %v564 = vunpack.c.h.b16 %v263
    %v565 = vunpack.c.l.b16 %v264
    %v566 = vunpack.c.h.b16 %v264
    %v567 = vunpack.c.l.b16 %v265
    %v568 = vunpack.c.h.b16 %v265
    %v569 = vunpack.c.l.b16 %v266
    %v570 = vunpack.c.h.b16 %v266
    %v571 = vunpack.c.l.b16 %v267
    %v572 = vunpack.c.h.b16 %v267
    %v573 = vunpack.c.l.b16 %v268
    %v574 = vunpack.c.h.b16 %v268
    %v575 = vunpack.c.l.b16 %v269
    %v576 = vunpack.c.h.b16 %v269
    %v577 = vunpack.c.l.b16 %v270
    %v578 = vunpack.c.h.b16 %v270
    %v579 = vunpack.c.l.b16 %v271
    %v580 = vunpack.c.h.b16 %v271
    %v581 = vunpack.c.l.b16 %v272
    %v582 = vunpack.c.h.b16 %v272
    %v583 = vunpack.c.l.b16 %v273
    %v584 = vunpack.c.h.b16 %v273
    %v585 = vunpack.c.l.b16 %v274
    %v586 = vunpack.c.h.b16 %v274
    %v587 = vunpack.c.l.b16 %v275
    %v588 = vunpack.c.h.b16 %v275
    %v589 = vunpack.c.l.b16 %v276
    %v590 = vunpack.c.h.b16 %v276
    %v591 = vunpack.c.l.b16 %v277
    %v592 = vunpack.c.h.b16 %v277
    %v593 = vunpack.c.l.b16 %v278
    %v594 = vunpack.c.h.b16 %v278
    %v595 = vunpack.c.l.b16 %v279
    %v596 = vunpack.c.h.b16 %v279
    %v597 = vunpack.c.l.b16 %v280
    %v598 = vunpack.c.h.b16 %v280
    %v599 = vunpack.c.l.b16 %v281
    %v600 = vunpack.c.h.b16 %v281
    %v601 = vunpack.c.l.b16 %v282
    %v602 = vunpack.c.h.b16 %v282
    %v603 = vunpack.c.l.b16 %v283
    %v604 = vunpack.c.h.b16 %v283
    %v605 = vunpack.c.l.b16 %v284
    %v606 = vunpack.c.h.b16 %v284
    %v607 = vunpack.c.l.b16 %v285
    %v608 = vunpack.c.h.b16 %v285
    %v609 = vunpack.c.l.b16 %v286
    %v610 = vunpack.c.h.b16 %v286
    %v611 = vunpack.c.l.b16 %v287
    %v612 = vunpack.c.h.b16 %v287
    %v613 = vunpack.c.l.b16 %v288
    %v614 = vunpack.c.h.b16 %v288
    %v615 = vunpack.c.l.b16 %v289
    %v616 = vunpack.c.h.b16 %v289
    %v617 = vunpack.c.l.b16 %v290
    %v618 = vunpack.c.h.b16 %v290
    %v619 = vunpack.c.l.b16 %v291
    %v620 = vunpack.c.h.b16 %v291
    %v621 = vunpack.c.l.b16 %v292
    %v622 = vunpack.c.h.b16 %v292
    %v623 = vunpack.c.l.b16 %v293
    %v624 = vunpack.c.h.b16 %v293
    %v625 = vunpack.c.l.b16 %v294
    %v626 = vunpack.c.h.b16 %v294
    %v627 = vunpack.c.l.b16 %v295
    %v628 = vunpack.c.h.b16 %v295
    %v629 = vunpack.c.l.b16 %v296
    %v630 = vunpack.c.h.b16 %v296
    %v631 = vunpack.c.l.b16 %v297
    %v632 = vunpack.c.h.b16 %v297
    %v633 = vunpack.c.l.b16 %v298
    %v634 = vunpack.c.h.b16 %v298
    %v635 = vunpack.c.l.b16 %v299
    %v636 = vunpack.c.h.b16 %v299
    %v637 = vunpack.c.l.b16 %v300
    %v638 = vunpack.c.h.b16 %v300
    %v639 = vunpack.c.l.b16 %v301
    %v640 = vunpack.c.h.b16 %v301
    %v641 = vunpack.c.l.b16 %v302
    %v642 = vunpack.c.h.b16 %v302
    %v643 = vunpack.c.l.b16 %v303
    %v644 = vunpack.c.h.b16 %v303
    %v645 = vunpack.c.l.b16 %v304
    %v646 = vunpack.c.h.b16 %v304
    %v647 = vunpack.c.l.b16 %v305
    %v648 = vunpack.c.h.b16 %v305
    %v649 = vunpack.c.l.b16 %v306
    %v650 = vunpack.c.h.b16 %v306
    %v651 = vunpack.c.l.b16 %v307
    %v652 = vunpack.c.h.b16 %v307
    %v653 = vunpack.c.l.b16 %v308
    %v654 = vunpack.c.h.b16 %v308
    %v655 = vunpack.c.l.b16 %v309
    %v656 = vunpack.c.h.b16 %v309
    %v657 = vunpack.c.l.b16 %v310
    %v658 = vunpack.c.h.b16 %v310
    %v659 = vunpack.c.l.b16 %v311
    %v660 = vunpack.c.h.b16 %v311
    %v661 = vunpack.c.l.b16 %v312
    %v662 = vunpack.c.h.b16 %v312
    %v663 = vunpack.c.l.b16 %v313
    %v664 = vunpack.c.h.b16 %v313
    %v665 = vunpack.c.l.b16 %v314
    %v666 = vunpack.c.h.b16 %v314
    %v667 = vunpack.c.l.b16 %v315
    %v668 = vunpack.c.h.b16 %v315
    %v669 = vunpack.c.l.b16 %v316
    %v670 = vunpack.c.h.b16 %v316
    %v671 = vunpack.c.l.b16 %v317
    %v672 = vunpack.c.h.b16 %v317
    %v673 = vunpack.c.l.b16 %v318
    %v674 = vunpack.c.h.b16 %v318
    %v675 = vunpack.c.l.b16 %v319
    %v676 = vunpack.c.h.b16 %v319
    %v677 = vunpack.c.l.b16 %v320
    %v678 = vunpack.c.h.b16 %v320
    %v679 = vunpack.c.l.b16 %v321
    %v680 = vunpack.c.h.b16 %v321
    %v681 = vunpack.c.l.b16 %v322
    %v682 = vunpack.c.h.b16 %v322
    %v683 = vunpack.c.l.b16 %v323
    %v684 = vunpack.c.h.b16 %v323
    %v685 = vunpack.c.l.b16 %v324
    %v686 = vunpack.c.h.b16 %v324
    %v687 = vunpack.c.l.b16 %v325
    %v688 = vunpack.c.h.b16 %v325
    %v689 = vunpack.c.l.b16 %v326
    %v690 = vunpack.c.h.b16 %v326
    %v691 = vunpack.c.l.b16 %v327
    %v692 = vunpack.c.h.b16 %v327
    %v693 = vunpack.c.l.b16 %v328
    %v694 = vunpack.c.h.b16 %v328
    %v695 = vunpack.c.l.b16 %v329
    %v696 = vunpack.c.h.b16 %v329
    %v697 = vunpack.c.l.b16 %v330
    %v698 = vunpack.c.h.b16 %v330
    %v699 = vunpack.c.l.b16 %v331
    %v700 = vunpack.c.h.b16 %v331
    %v701 = vunpack.c.l.b16 %v332
    %v702 = vunpack.c.h.b16 %v332
    %v703 = vunpack.c.l.b16 %v333
    %v704 = vunpack.c.h.b16 %v333
    %v705 = vunpack.c.l.b16 %v334
    %v706 = vunpack.c.h.b16 %v334
    %v707 = vunpack.c.l.b16 %v335
    %v708 = vunpack.c.h.b16 %v335
    %v709 = vunpack.c.l.b16 %v336
    %v710 = vunpack.c.h.b16 %v336
    %v711 = vunpack.c.l.b16 %v337
    %v712 = vunpack.c.h.b16 %v337
    %v713 = vunpack.c.l.b16 %v338
    %v714 = vunpack.c.h.b16 %v338
    %v715 = vunpack.c.l.b16 %v339
    %v716 = vunpack.c.h.b16 %v339
    %v717 = vunpack.c.l.b16 %v340
    %v718 = vunpack.c.h.b16 %v340
    %v719 = vunpack.c.l.b16 %v341
    %v720 = vunpack.c.h.b16 %v341
    %v721 = vunpack.c.l.b16 %v342
    %v722 = vunpack.c.h.b16 %v342
    %v723 = vunpack.c.l.b16 %v343
    %v724 = vunpack.c.h.b16 %v343
    %v725 = vunpack.c.l.b16 %v344
    %v726 = vunpack.c.h.b16 %v344
    %v727 = vunpack.c.l.b16 %v345
    %v728 = vunpack.c.h.b16 %v345
    %v729 = vunpack.c.l.b16 %v346
    %v730 = vunpack.c.h.b16 %v346
    %v731 = vunpack.c.l.b16 %v347
    %v732 = vunpack.c.h.b16 %v347
    %v733 = vunpack.c.l.b16 %v348
    %v734 = vunpack.c.h.b16 %v348
    %v735 = vunpack.c.l.b16 %v349
    %v736 = vunpack.c.h.b16 %v349
    %v737 = vunpack.c.l.b16 %v350
    %v738 = vunpack.c.h.b16 %v350
    %v739 = vunpack.c.l.b16 %v351
    %v740 = vunpack.c.h.b16 %v351
    %v741 = vunpack.c.l.b16 %v352
    %v742 = vunpack.c.h.b16 %v352
    %v743 = vunpack.c.l.b16 %v353
    %v744 = vunpack.c.h.b16 %v353
    %v745 = vunpack.c.l.b16 %v354
    %v746 = vunpack.c.h.b16 %v354
    %v747 = vunpack.c.l.b16 %v355
    %v748 = vunpack.c.h.b16 %v355
    %v749 = vunpack.c.l.b16 %v356
    %v750 = vunpack.c.h.b16 %v356
    %v751 = vunpack.c.l.b16 %v357
    %v752 = vunpack.c.h.b16 %v357
    %v753 = vunpack.c.l.b16 %v358
    %v754 = vunpack.c.h.b16 %v358
    %v755 = vpack.c.b16 %v501, %v499
    %v756 = vpack.c.b16 %v502, %v500
    %v757 = vpack.c.b16 %v505, %v503
    %v758 = vpack.c.b16 %v506, %v504
    %v759 = vpack.c.b16 %v509, %v507
    %v760 = vpack.c.b16 %v510, %v508
    %v761 = vpack.c.b16 %v513, %v511
    %v762 = vpack.c.b16 %v514, %v512
    %v763 = vpack.c.b16 %v517, %v515
    %v764 = vpack.c.b16 %v518, %v516
    %v765 = vpack.c.b16 %v521, %v519
    %v766 = vpack.c.b16 %v522, %v520
    %v767 = vpack.c.b16 %v525, %v523
    %v768 = vpack.c.b16 %v526, %v524
    %v769 = vpack.c.b16 %v529, %v527
    %v770 = vpack.c.b16 %v530, %v528
    %v771 = vpack.c.b16 %v533, %v531
    %v772 = vpack.c.b16 %v534, %v532
    %v773 = vpack.c.b16 %v537, %v535
    %v774 = vpack.c.b16 %v538, %v536
    %v775 = vpack.c.b16 %v541, %v539
    %v776 = vpack.c.b16 %v542, %v540
    %v777 = vpack.c.b16 %v545, %v543
    %v778 = vpack.c.b16 %v546, %v544
    %v779 = vpack.c.b16 %v549, %v547
    %v780 = vpack.c.b16 %v550, %v548
    %v781 = vpack.c.b16 %v553, %v551
    %v782 = vpack.c.b16 %v554, %v552
    %v783 = vpack.c.b16 %v557, %v555
    %v784 = vpack.c.b16 %v558, %v556
    %v785 = vpack.c.b16 %v561, %v559
    %v786 = vpack.c.b16 %v562, %v560
    %v787 = vpack.c.b16 %v565, %v563
    %v788 = vpack.c.b16 %v566, %v564
    %v789 = vpack.c.b16 %v569, %v567
    %v790 = vpack.c.b16 %v570, %v568
    %v791 = vpack.c.b16 %v573, %v571
    %v792 = vpack.c.b16 %v574, %v572
    %v793 = vpack.c.b16 %v577, %v575
    %v794 = vpack.c.b16 %v578, %v576
    %v795 = vpack.c.b16 %v581, %v579
    %v796 = vpack.c.b16 %v582, %v580
    %v797 = vpack.c.b16 %v585, %v583
    %v798 = vpack.c.b16 %v586, %v584
    %v799 = vpack.c.b16 %v589, %v587
    %v800 = vpack.c.b16 %v590, %v588
    %v801 = vpack.c.b16 %v593, %v591
    %v802 = vpack.c.b16 %v594, %v592
    %v803 = vpack.c.b16 %v597, %v595
    %v804 = vpack.c.b16 %v598, %v596
    %v805 = vpack.c.b16 %v601, %v599
    %v806 = vpack.c.b16 %v602, %v600
    %v807 = vpack.c.b16 %v605, %v603
    %v808 = vpack.c.b16 %v606, %v604
    %v809 = vpack.c.b16 %v609, %v607
    %v810 = vpack.c.b16 %v610, %v608
    %v811 = vpack.c.b16 %v613, %v611
    %v812 = vpack.c.b16 %v614, %v612
    %v813 = vpack.c.b16 %v617, %v615
    %v814 = vpack.c.b16 %v618, %v616
    %v815 = vpack.c.b16 %v621, %v619
    %v816 = vpack.c.b16 %v622, %v620
    %v817 = vpack.c.b16 %v625, %v623
    %v818 = vpack.c.b16 %v626, %v624
    %v819 = vpack.c.b16 %v629, %v627
    %v820 = vpack.c.b16 %v630, %v628
    %v821 = vpack.c.b16 %v633, %v631
    %v822 = vpack.c.b16 %v634, %v632
    %v823 = vpack.c.b16 %v637, %v635
    %v824 = vpack.c.b16 %v638, %v636
    %v825 = vpack.c.b16 %v641, %v639
    %v826 = vpack.c.b16 %v642, %v640
    %v827 = vpack.c.b16 %v645, %v643
    %v828 = vpack.c.b16 %v646, %v644
    %v829 = vpack.c.b16 %v649, %v647
    %v830 = vpack.c.b16 %v650, %v648
    %v831 = vpack.c.b16 %v653, %v651
    %v832 = vpack.c.b16 %v654, %v652
    %v833 = vpack.c.b16 %v657, %v655
    %v834 = vpack.c.b16 %v658, %v656
    %v835 = vpack.c.b16 %v661, %v659
    %v836 = vpack.c.b16 %v662, %v660
    %v837 = vpack.c.b16 %v665, %v663
    %v838 = vpack.c.b16 %v666, %v664
    %v839 = vpack.c.b16 %v669, %v667
    %v840 = vpack.c.b16 %v670, %v668
    %v841 = vpack.c.b16 %v673, %v671
    %v842 = vpack.c.b16 %v674, %v672
    %v843 = vpack.c.b16 %v677, %v675
    %v844 = vpack.c.b16 %v678, %v676
    %v845 = vpack.c.b16 %v681, %v679
    %v846 = vpack.c.b16 %v682, %v680
    %v847 = vpack.c.b16 %v685, %v683
    %v848 = vpack.c.b16 %v686, %v684
    %v849 = vpack.c.b16 %v689, %v687
    %v850 = vpack.c.b16 %v690, %v688
    %v851 = vpack.c.b16 %v693, %v691
    %v852 = vpack.c.b16 %v694, %v692
    %v853 = vpack.c.b16 %v697, %v695
    %v854 = vpack.c.b16 %v698, %v696
    %v855 = vpack.c.b16 %v701, %v699
    %v856 = vpack.c.b16 %v702, %v700
    %v857 = vpack.c.b16 %v705, %v703
    %v858 = vpack.c.b16 %v706, %v704
    %v859 = vpack.c.b16 %v709, %v707
    %v860 = vpack.c.b16 %v710, %v708
    %v861 = vpack.c.b16 %v713, %v711
    %v862 = vpack.c.b16 %v714, %v712
    %v863 = vpack.c.b16 %v717, %v715
    %v864 = vpack.c.b16 %v718, %v716
    %v865 = vpack.c.b16 %v721, %v719
    %v866 = vpack.c.b16 %v722, %v720
    %v867 = vpack.c.b16 %v725, %v723
    %v868 = vpack.c.b16 %v726, %v724
    %v869 = vpack.c.b16 %v729, %v727
    %v870 = vpack.c.b16 %v730, %v728
    %v871 = vpack.c.b16 %v733, %v731
    %v872 = vpack.c.b16 %v734, %v732
    %v873 = vpack.c.b16 %v737, %v735
    %v874 = vpack.c.b16 %v738, %v736
    %v875 = vpack.c.b16 %v741, %v739
    %v876 = vpack.c.b16 %v742, %v740
    %v877 = vpack.c.b16 %v745, %v743
    %v878 = vpack.c.b16 %v746, %v744
    %v879 = vpack.c.b16 %v749, %v747
    %v880 = vpack.c.b16 %v750, %v748
    %v881 = vpack.c.b16 %v753, %v751
    %v882 = vpack.c.b16 %v754, %v752
    %1011 = vmatprep.subr.bf16.mxu0 %v770
    %1012 = vmatpush1.bf16.msra.mxu0 %v769
    %1013 = vmatprep.subr.bf16.mxu0 %v768
    %1014 = vmatpush1.bf16.msra.mxu0 %v767
    %1015 = vmatprep.subr.bf16.mxu0 %v766
    %1016 = vmatpush1.bf16.msra.mxu0 %v765
    %1017 = vmatprep.subr.bf16.mxu0 %v764
    %1018 = vmatpush1.bf16.msra.mxu0 %v763
    %1019 = vmatprep.subr.bf16.mxu0 %v762
    %1020 = vmatpush1.bf16.msra.mxu0 %v761
    %1021 = vmatprep.subr.bf16.mxu0 %v760
    %1022 = vmatpush1.bf16.msra.mxu0 %v759
    %1023 = vmatprep.subr.bf16.mxu0 %v758
    %1024 = vmatpush1.bf16.msra.mxu0 %v757
    %1025 = vmatprep.subr.bf16.mxu0 %v756
    %1026 = vmatpush1.bf16.msra.mxu0 %v755
    %1027 = vmatprep.subr.bf16.mxu0 %v786
    %1028 = vmatpush2.bf16.msra.mxu0 %v785
    %1029 = vmatprep.subr.bf16.mxu0 %v784
    %1030 = vmatpush2.bf16.msra.mxu0 %v783
    %1031 = vmatprep.subr.bf16.mxu0 %v782
    %1032 = vmatpush2.bf16.msra.mxu0 %v781
    %1033 = vmatprep.subr.bf16.mxu0 %v780
    %1034 = vmatpush2.bf16.msra.mxu0 %v779
    %1035 = vmatprep.subr.bf16.mxu0 %v778
    %1036 = vmatpush2.bf16.msra.mxu0 %v777
    %1037 = vmatprep.subr.bf16.mxu0 %v776
    %1038 = vmatpush2.bf16.msra.mxu0 %v775
    %1039 = vmatprep.subr.bf16.mxu0 %v774
    %1040 = vmatpush2.bf16.msra.mxu0 %v773
    %1041 = vmatprep.subr.bf16.mxu0 %v772
    %1042 = vmatpush2.bf16.msra.mxu0 %v771
    %1043 = vmatprep.mubr.bf16.mxu0 %v224
    %1044 = vmatmul.mubr.bf16.gmra.mxu0 %v223
    %v1045 = vpop.f32.mrf.mxu0
    %v1046 = vadd.f32 %v364, %v1045
    %v1047 = vpop.f32.mrf.mxu0
    %v1048 = vadd.f32 %v368, %v1047
    %v1049 = vpop.f32.mrf.mxu0
    %v1050 = vpop.f32.mrf.mxu0
    %1051 = vdwg.mxu0
    %1052 = vmatprep.subr.bf16.mxu0 %v802
    %1053 = vmatpush1.bf16.msra.mxu0 %v801
    %1054 = vmatprep.subr.bf16.mxu0 %v800
    %1055 = vmatpush1.bf16.msra.mxu0 %v799
    %1056 = vmatprep.subr.bf16.mxu0 %v798
    %1057 = vmatpush1.bf16.msra.mxu0 %v797
    %1058 = vmatprep.subr.bf16.mxu0 %v796
    %1059 = vmatpush1.bf16.msra.mxu0 %v795
    %1060 = vmatprep.subr.bf16.mxu0 %v794
    %1061 = vmatpush1.bf16.msra.mxu0 %v793
    %1062 = vmatprep.subr.bf16.mxu0 %v792
    %1063 = vmatpush1.bf16.msra.mxu0 %v791
    %1064 = vmatprep.subr.bf16.mxu0 %v790
    %1065 = vmatpush1.bf16.msra.mxu0 %v789
    %1066 = vmatprep.subr.bf16.mxu0 %v788
    %1067 = vmatpush1.bf16.msra.mxu0 %v787
    %1068 = vmatprep.subr.bf16.mxu0 %v818
    %1069 = vmatpush2.bf16.msra.mxu0 %v817
    %1070 = vmatprep.subr.bf16.mxu0 %v816
    %1071 = vmatpush2.bf16.msra.mxu0 %v815
    %1072 = vmatprep.subr.bf16.mxu0 %v814
    %1073 = vmatpush2.bf16.msra.mxu0 %v813
    %1074 = vmatprep.subr.bf16.mxu0 %v812
    %1075 = vmatpush2.bf16.msra.mxu0 %v811
    %1076 = vmatprep.subr.bf16.mxu0 %v810
    %1077 = vmatpush2.bf16.msra.mxu0 %v809
    %1078 = vmatprep.subr.bf16.mxu0 %v808
    %1079 = vmatpush2.bf16.msra.mxu0 %v807
    %1080 = vmatprep.subr.bf16.mxu0 %v806
    %1081 = vmatpush2.bf16.msra.mxu0 %v805
    %1082 = vmatprep.subr.bf16.mxu0 %v804
    %1083 = vmatpush2.bf16.msra.mxu0 %v803
    %1084 = vmatprep.mubr.bf16.mxu0 %v226
    %1085 = vmatmul.mubr.bf16.gmra.mxu0 %v225
    %v1086 = vpop.f32.mrf.mxu0
    %v1087 = vadd.f32 %v1046, %v1086
    %v1088 = vpop.f32.mrf.mxu0
    %v1089 = vadd.f32 %v1048, %v1088
    %v1090 = vpop.f32.mrf.mxu0
    %v1091 = vpop.f32.mrf.mxu0
    %1092 = vdwg.mxu0
    %1093 = vmatprep.subr.bf16.mxu0 %v834
    %1094 = vmatpush1.bf16.msra.mxu0 %v833
    %1095 = vmatprep.subr.bf16.mxu0 %v832
    %1096 = vmatpush1.bf16.msra.mxu0 %v831
    %1097 = vmatprep.subr.bf16.mxu0 %v830
    %1098 = vmatpush1.bf16.msra.mxu0 %v829
    %1099 = vmatprep.subr.bf16.mxu0 %v828
    %1100 = vmatpush1.bf16.msra.mxu0 %v827
    %1101 = vmatprep.subr.bf16.mxu0 %v826
    %1102 = vmatpush1.bf16.msra.mxu0 %v825
    %1103 = vmatprep.subr.bf16.mxu0 %v824
    %1104 = vmatpush1.bf16.msra.mxu0 %v823
    %1105 = vmatprep.subr.bf16.mxu0 %v822
    %1106 = vmatpush1.bf16.msra.mxu0 %v821
    %1107 = vmatprep.subr.bf16.mxu0 %v820
    %1108 = vmatpush1.bf16.msra.mxu0 %v819
    %1109 = vmatprep.subr.bf16.mxu0 %v850
    %1110 = vmatpush2.bf16.msra.mxu0 %v849
    %1111 = vmatprep.subr.bf16.mxu0 %v848
    %1112 = vmatpush2.bf16.msra.mxu0 %v847
    %1113 = vmatprep.subr.bf16.mxu0 %v846
    %1114 = vmatpush2.bf16.msra.mxu0 %v845
    %1115 = vmatprep.subr.bf16.mxu0 %v844
    %1116 = vmatpush2.bf16.msra.mxu0 %v843
    %1117 = vmatprep.subr.bf16.mxu0 %v842
    %1118 = vmatpush2.bf16.msra.mxu0 %v841
    %1119 = vmatprep.subr.bf16.mxu0 %v840
    %1120 = vmatpush2.bf16.msra.mxu0 %v839
    %1121 = vmatprep.subr.bf16.mxu0 %v838
    %1122 = vmatpush2.bf16.msra.mxu0 %v837
    %1123 = vmatprep.subr.bf16.mxu0 %v836
    %1124 = vmatpush2.bf16.msra.mxu0 %v835
    %1125 = vmatprep.mubr.bf16.mxu0 %v228
    %1126 = vmatmul.mubr.bf16.gmra.mxu0 %v227
    %v1127 = vpop.f32.mrf.mxu0
    %v1128 = vadd.f32 %v1087, %v1127
    %v1129 = vpop.f32.mrf.mxu0
    %v1130 = vadd.f32 %v1089, %v1129
    %v1131 = vpop.f32.mrf.mxu0
    %v1132 = vpop.f32.mrf.mxu0
    %1133 = vdwg.mxu0
    %1134 = vmatprep.subr.bf16.mxu0 %v866
    %1135 = vmatpush1.bf16.msra.mxu0 %v865
    %1136 = vmatprep.subr.bf16.mxu0 %v864
    %1137 = vmatpush1.bf16.msra.mxu0 %v863
    %1138 = vmatprep.subr.bf16.mxu0 %v862
    %1139 = vmatpush1.bf16.msra.mxu0 %v861
    %1140 = vmatprep.subr.bf16.mxu0 %v860
    %1141 = vmatpush1.bf16.msra.mxu0 %v859
    %1142 = vmatprep.subr.bf16.mxu0 %v858
    %1143 = vmatpush1.bf16.msra.mxu0 %v857
    %1144 = vmatprep.subr.bf16.mxu0 %v856
    %1145 = vmatpush1.bf16.msra.mxu0 %v855
    %1146 = vmatprep.subr.bf16.mxu0 %v854
    %1147 = vmatpush1.bf16.msra.mxu0 %v853
    %1148 = vmatprep.subr.bf16.mxu0 %v852
    %1149 = vmatpush1.bf16.msra.mxu0 %v851
    %1150 = vmatprep.subr.bf16.mxu0 %v882
    %1151 = vmatpush2.bf16.msra.mxu0 %v881
    %1152 = vmatprep.subr.bf16.mxu0 %v880
    %1153 = vmatpush2.bf16.msra.mxu0 %v879
    %1154 = vmatprep.subr.bf16.mxu0 %v878
    %1155 = vmatpush2.bf16.msra.mxu0 %v877
    %1156 = vmatprep.subr.bf16.mxu0 %v876
    %1157 = vmatpush2.bf16.msra.mxu0 %v875
    %1158 = vmatprep.subr.bf16.mxu0 %v874
    %1159 = vmatpush2.bf16.msra.mxu0 %v873
    %1160 = vmatprep.subr.bf16.mxu0 %v872
    %1161 = vmatpush2.bf16.msra.mxu0 %v871
    %1162 = vmatprep.subr.bf16.mxu0 %v870
    %1163 = vmatpush2.bf16.msra.mxu0 %v869
    %1164 = vmatprep.subr.bf16.mxu0 %v868
    %1165 = vmatpush2.bf16.msra.mxu0 %v867
    %1166 = vmatprep.mubr.bf16.mxu0 %v230
    %1167 = vmatmul.mubr.bf16.gmra.mxu0 %v229
    %v1168 = vpop.f32.mrf.mxu0
    %v1169 = vadd.f32 %v1128, %v1168
    %v1170 = vpop.f32.mrf.mxu0
    %v1171 = vadd.f32 %v1130, %v1170
    %v1172 = vpop.f32.mrf.mxu0
    %v1173 = vpop.f32.mrf.mxu0
    %1174 = vdwg.mxu0
    %v1175 = vld [vmem:[%s7] sm:$0x3]
    %v1177 = vlaneseq
    %v1178 = vshrl.u32 %v1177, 7
    %v1179 = vsub.s32 0, %v1178
    %v1180 = vrot.slane %v1175, %v1179
    %v1181 = vlaneseq
    %v1182 = vshrl.u32 %v1181, 7
    %v1183 = vsub.s32 1, %v1182
    %v1184 = vrot.slane %v1175, %v1183
    %v1187 = vmul.f32 %v1169, %v1180
    %v1188 = vmul.f32 %v1171, %v1184
    %v1189 = vld [vmem:[%s8] sm:$0x3]
    %v1191 = vlaneseq
    %v1192 = vshrl.u32 %v1191, 7
    %v1193 = vsub.s32 0, %v1192
    %v1194 = vrot.slane %v1189, %v1193
    %v1195 = vlaneseq
    %v1196 = vshrl.u32 %v1195, 7
    %v1197 = vsub.s32 1, %v1196
    %v1198 = vrot.slane %v1189, %v1197
    %v1201 = vadd.f32 %v1187, %v1194
    %v1202 = vadd.f32 %v1188, %v1198
    %vm1203 = vcmp.ge.f32.partialorder %v1201, 0.0
    %vm1204 = vcmp.ge.f32.partialorder %v1202, 0.0
    %v1205 = vmul.f32 %v1201, 0.05
    %v1206 = vmul.f32 %v1202, 0.05
    %v1207 = vsel %vm1203, %v1201, %v1205
    %v1208 = vsel %vm1204, %v1202, %v1206
    %v1209 = vld [vmem:[%s9] sm:$0x3]
    %v1211 = vlaneseq
    %v1212 = vshrl.u32 %v1211, 7
    %v1213 = vsub.s32 0, %v1212
    %v1214 = vrot.slane %v1209, %v1213
    %v1215 = vlaneseq
    %v1216 = vshrl.u32 %v1215, 7
    %v1217 = vsub.s32 1, %v1216
    %v1218 = vrot.slane %v1209, %v1217
    %v1221 = vmul.f32 %v1207, %v1214
    %v1222 = vmul.f32 %v1208, %v1218
    %v1223 = vadd.f32 %v1221, %v1222
    %1224 = vadd.xlane.f32.xlu0 %v1223
    %v1225 = vpop.xlane.xlu0 %1224
    %v1226 = vstv %s198
    %v1227 = vadd.f32 %v1225, %v1226
    %s1228 = sld [smem:[#allocation5 + $0x1]]
    %vm1229 = vcmp.ge.f32.partialorder %v162, 0.0
    %vm1230 = vcmp.ge.f32.partialorder %v163, 0.0
    %vm1231 = vcmp.ge.f32.partialorder %v164, 0.0
    %vm1232 = vcmp.ge.f32.partialorder %v165, 0.0
    %vm1233 = vcmp.ge.f32.partialorder %v166, 0.0
    %vm1234 = vcmp.ge.f32.partialorder %v167, 0.0
    %vm1235 = vcmp.ge.f32.partialorder %v168, 0.0
    %vm1236 = vcmp.ge.f32.partialorder %v169, 0.0
    %v1237 = vmul.f32 %v162, 0.05
    %v1238 = vmul.f32 %v163, 0.05
    %v1239 = vmul.f32 %v164, 0.05
    %v1240 = vmul.f32 %v165, 0.05
    %v1241 = vmul.f32 %v166, 0.05
    %v1242 = vmul.f32 %v167, 0.05
    %v1243 = vmul.f32 %v168, 0.05
    %v1244 = vmul.f32 %v169, 0.05
    %v1245 = vsel %vm1229, %v162, %v1237
    %v1246 = vsel %vm1230, %v163, %v1238
    %v1247 = vsel %vm1231, %v164, %v1239
    %v1248 = vsel %vm1232, %v165, %v1240
    %v1249 = vsel %vm1233, %v166, %v1241
    %v1250 = vsel %vm1234, %v167, %v1242
    %v1251 = vsel %vm1235, %v168, %v1243
    %v1252 = vsel %vm1236, %v169, %v1244
    %v1253 = vpack.c.bf16 %v1245, %v1245
    %v1254 = vpack.c.bf16 %v1246, %v1246
    %v1255 = vpack.c.bf16 %v1247, %v1247
    %v1256 = vpack.c.bf16 %v1248, %v1248
    %v1257 = vpack.c.bf16 %v1249, %v1249
    %v1258 = vpack.c.bf16 %v1250, %v1250
    %v1259 = vpack.c.bf16 %v1251, %v1251
    %v1260 = vpack.c.bf16 %v1252, %v1252
    %v1261 = vld [vmem:[#allocation7] sm:$0xff]
    %v1262 = vld [vmem:[#allocation7 + $0x8] sm:$0xff]
    %v1263 = vld [vmem:[#allocation7 + $0x10] sm:$0xff]
    %v1264 = vld [vmem:[#allocation7 + $0x18] sm:$0xff]
    %v1265 = vld [vmem:[#allocation7 + $0x20] sm:$0xff]
    %v1266 = vld [vmem:[#allocation7 + $0x28] sm:$0xff]
    %v1267 = vld [vmem:[#allocation7 + $0x30] sm:$0xff]
    %v1268 = vld [vmem:[#allocation7 + $0x38] sm:$0xff]
    %v1269 = vld [vmem:[#allocation7 + $0x40] sm:$0xff]
    %v1270 = vld [vmem:[#allocation7 + $0x48] sm:$0xff]
    %v1271 = vld [vmem:[#allocation7 + $0x50] sm:$0xff]
    %v1272 = vld [vmem:[#allocation7 + $0x58] sm:$0xff]
    %v1273 = vld [vmem:[#allocation7 + $0x60] sm:$0xff]
    %v1274 = vld [vmem:[#allocation7 + $0x68] sm:$0xff]
    %v1275 = vld [vmem:[#allocation7 + $0x70] sm:$0xff]
    %v1276 = vld [vmem:[#allocation7 + $0x78] sm:$0xff]
    %v1277 = vld [vmem:[#allocation7 + $0x80] sm:$0xff]
    %v1278 = vld [vmem:[#allocation7 + $0x88] sm:$0xff]
    %v1279 = vld [vmem:[#allocation7 + $0x90] sm:$0xff]
    %v1280 = vld [vmem:[#allocation7 + $0x98] sm:$0xff]
    %v1281 = vld [vmem:[#allocation7 + $0xa0] sm:$0xff]
    %v1282 = vld [vmem:[#allocation7 + $0xa8] sm:$0xff]
    %v1283 = vld [vmem:[#allocation7 + $0xb0] sm:$0xff]
    %v1284 = vld [vmem:[#allocation7 + $0xb8] sm:$0xff]
    %v1285 = vld [vmem:[#allocation7 + $0xc0] sm:$0xff]
    %v1286 = vld [vmem:[#allocation7 + $0xc8] sm:$0xff]
    %v1287 = vld [vmem:[#allocation7 + $0xd0] sm:$0xff]
    %v1288 = vld [vmem:[#allocation7 + $0xd8] sm:$0xff]
    %v1289 = vld [vmem:[#allocation7 + $0xe0] sm:$0xff]
    %v1290 = vld [vmem:[#allocation7 + $0xe8] sm:$0xff]
    %v1291 = vld [vmem:[#allocation7 + $0xf0] sm:$0xff]
    %v1292 = vld [vmem:[#allocation7 + $0xf8] sm:$0xff]
    %v1293 = vld [vmem:[#allocation7 + $0x100] sm:$0xff]
    %v1294 = vld [vmem:[#allocation7 + $0x108] sm:$0xff]
    %v1295 = vld [vmem:[#allocation7 + $0x110] sm:$0xff]
    %v1296 = vld [vmem:[#allocation7 + $0x118] sm:$0xff]
    %v1297 = vld [vmem:[#allocation7 + $0x120] sm:$0xff]
    %v1298 = vld [vmem:[#allocation7 + $0x128] sm:$0xff]
    %v1299 = vld [vmem:[#allocation7 + $0x130] sm:$0xff]
    %v1300 = vld [vmem:[#allocation7 + $0x138] sm:$0xff]
    %v1301 = vld [vmem:[#allocation7 + $0x140] sm:$0xff]
    %v1302 = vld [vmem:[#allocation7 + $0x148] sm:$0xff]
    %v1303 = vld [vmem:[#allocation7 + $0x150] sm:$0xff]
    %v1304 = vld [vmem:[#allocation7 + $0x158] sm:$0xff]
    %v1305 = vld [vmem:[#allocation7 + $0x160] sm:$0xff]
    %v1306 = vld [vmem:[#allocation7 + $0x168] sm:$0xff]
    %v1307 = vld [vmem:[#allocation7 + $0x170] sm:$0xff]
    %v1308 = vld [vmem:[#allocation7 + $0x178] sm:$0xff]
    %v1309 = vld [vmem:[#allocation7 + $0x180] sm:$0xff]
    %v1310 = vld [vmem:[#allocation7 + $0x188] sm:$0xff]
    %v1311 = vld [vmem:[#allocation7 + $0x190] sm:$0xff]
    %v1312 = vld [vmem:[#allocation7 + $0x198] sm:$0xff]
    %v1313 = vld [vmem:[#allocation7 + $0x1a0] sm:$0xff]
    %v1314 = vld [vmem:[#allocation7 + $0x1a8] sm:$0xff]
    %v1315 = vld [vmem:[#allocation7 + $0x1b0] sm:$0xff]
    %v1316 = vld [vmem:[#allocation7 + $0x1b8] sm:$0xff]
    %v1317 = vld [vmem:[#allocation7 + $0x1c0] sm:$0xff]
    %v1318 = vld [vmem:[#allocation7 + $0x1c8] sm:$0xff]
    %v1319 = vld [vmem:[#allocation7 + $0x1d0] sm:$0xff]
    %v1320 = vld [vmem:[#allocation7 + $0x1d8] sm:$0xff]
    %v1321 = vld [vmem:[#allocation7 + $0x1e0] sm:$0xff]
    %v1322 = vld [vmem:[#allocation7 + $0x1e8] sm:$0xff]
    %v1323 = vld [vmem:[#allocation7 + $0x1f0] sm:$0xff]
    %v1324 = vld [vmem:[#allocation7 + $0x1f8] sm:$0xff]
    %v1325 = vld [vmem:[#allocation7 + $0x200] sm:$0xff]
    %v1326 = vld [vmem:[#allocation7 + $0x208] sm:$0xff]
    %v1327 = vld [vmem:[#allocation7 + $0x210] sm:$0xff]
    %v1328 = vld [vmem:[#allocation7 + $0x218] sm:$0xff]
    %v1329 = vld [vmem:[#allocation7 + $0x220] sm:$0xff]
    %v1330 = vld [vmem:[#allocation7 + $0x228] sm:$0xff]
    %v1331 = vld [vmem:[#allocation7 + $0x230] sm:$0xff]
    %v1332 = vld [vmem:[#allocation7 + $0x238] sm:$0xff]
    %v1333 = vld [vmem:[#allocation7 + $0x240] sm:$0xff]
    %v1334 = vld [vmem:[#allocation7 + $0x248] sm:$0xff]
    %v1335 = vld [vmem:[#allocation7 + $0x250] sm:$0xff]
    %v1336 = vld [vmem:[#allocation7 + $0x258] sm:$0xff]
    %v1337 = vld [vmem:[#allocation7 + $0x260] sm:$0xff]
    %v1338 = vld [vmem:[#allocation7 + $0x268] sm:$0xff]
    %v1339 = vld [vmem:[#allocation7 + $0x270] sm:$0xff]
    %v1340 = vld [vmem:[#allocation7 + $0x278] sm:$0xff]
    %v1341 = vld [vmem:[#allocation7 + $0x280] sm:$0xff]
    %v1342 = vld [vmem:[#allocation7 + $0x288] sm:$0xff]
    %v1343 = vld [vmem:[#allocation7 + $0x290] sm:$0xff]
    %v1344 = vld [vmem:[#allocation7 + $0x298] sm:$0xff]
    %v1345 = vld [vmem:[#allocation7 + $0x2a0] sm:$0xff]
    %v1346 = vld [vmem:[#allocation7 + $0x2a8] sm:$0xff]
    %v1347 = vld [vmem:[#allocation7 + $0x2b0] sm:$0xff]
    %v1348 = vld [vmem:[#allocation7 + $0x2b8] sm:$0xff]
    %v1349 = vld [vmem:[#allocation7 + $0x2c0] sm:$0xff]
    %v1350 = vld [vmem:[#allocation7 + $0x2c8] sm:$0xff]
    %v1351 = vld [vmem:[#allocation7 + $0x2d0] sm:$0xff]
    %v1352 = vld [vmem:[#allocation7 + $0x2d8] sm:$0xff]
    %v1353 = vld [vmem:[#allocation7 + $0x2e0] sm:$0xff]
    %v1354 = vld [vmem:[#allocation7 + $0x2e8] sm:$0xff]
    %v1355 = vld [vmem:[#allocation7 + $0x2f0] sm:$0xff]
    %v1356 = vld [vmem:[#allocation7 + $0x2f8] sm:$0xff]
    %v1357 = vld [vmem:[#allocation7 + $0x300] sm:$0xff]
    %v1358 = vld [vmem:[#allocation7 + $0x308] sm:$0xff]
    %v1359 = vld [vmem:[#allocation7 + $0x310] sm:$0xff]
    %v1360 = vld [vmem:[#allocation7 + $0x318] sm:$0xff]
    %v1361 = vld [vmem:[#allocation7 + $0x320] sm:$0xff]
    %v1362 = vld [vmem:[#allocation7 + $0x328] sm:$0xff]
    %v1363 = vld [vmem:[#allocation7 + $0x330] sm:$0xff]
    %v1364 = vld [vmem:[#allocation7 + $0x338] sm:$0xff]
    %v1365 = vld [vmem:[#allocation7 + $0x340] sm:$0xff]
    %v1366 = vld [vmem:[#allocation7 + $0x348] sm:$0xff]
    %v1367 = vld [vmem:[#allocation7 + $0x350] sm:$0xff]
    %v1368 = vld [vmem:[#allocation7 + $0x358] sm:$0xff]
    %v1369 = vld [vmem:[#allocation7 + $0x360] sm:$0xff]
    %v1370 = vld [vmem:[#allocation7 + $0x368] sm:$0xff]
    %v1371 = vld [vmem:[#allocation7 + $0x370] sm:$0xff]
    %v1372 = vld [vmem:[#allocation7 + $0x378] sm:$0xff]
    %v1373 = vld [vmem:[#allocation7 + $0x380] sm:$0xff]
    %v1374 = vld [vmem:[#allocation7 + $0x388] sm:$0xff]
    %v1375 = vld [vmem:[#allocation7 + $0x390] sm:$0xff]
    %v1376 = vld [vmem:[#allocation7 + $0x398] sm:$0xff]
    %v1377 = vld [vmem:[#allocation7 + $0x3a0] sm:$0xff]
    %v1378 = vld [vmem:[#allocation7 + $0x3a8] sm:$0xff]
    %v1379 = vld [vmem:[#allocation7 + $0x3b0] sm:$0xff]
    %v1380 = vld [vmem:[#allocation7 + $0x3b8] sm:$0xff]
    %v1381 = vld [vmem:[#allocation7 + $0x3c0] sm:$0xff]
    %v1382 = vld [vmem:[#allocation7 + $0x3c8] sm:$0xff]
    %v1383 = vld [vmem:[#allocation7 + $0x3d0] sm:$0xff]
    %v1384 = vld [vmem:[#allocation7 + $0x3d8] sm:$0xff]
    %v1385 = vld [vmem:[#allocation7 + $0x3e0] sm:$0xff]
    %v1386 = vld [vmem:[#allocation7 + $0x3e8] sm:$0xff]
    %v1387 = vld [vmem:[#allocation7 + $0x3f0] sm:$0xff]
    %v1388 = vld [vmem:[#allocation7 + $0x3f8] sm:$0xff]
    %v1389 = vld [vmem:[%s11] sm:$0x3]
    %v1391 = vlaneseq
    %v1392 = vshrl.u32 %v1391, 7
    %v1393 = vsub.s32 0, %v1392
    %v1394 = vrot.slane %v1389, %v1393
    %v1395 = vlaneseq
    %v1396 = vshrl.u32 %v1395, 7
    %v1397 = vsub.s32 1, %v1396
    %v1398 = vrot.slane %v1389, %v1397
    %v1529 = vunpack.c.l.b16 %v1261
    %v1530 = vunpack.c.h.b16 %v1261
    %v1531 = vunpack.c.l.b16 %v1262
    %v1532 = vunpack.c.h.b16 %v1262
    %v1533 = vunpack.c.l.b16 %v1263
    %v1534 = vunpack.c.h.b16 %v1263
    %v1535 = vunpack.c.l.b16 %v1264
    %v1536 = vunpack.c.h.b16 %v1264
    %v1537 = vunpack.c.l.b16 %v1265
    %v1538 = vunpack.c.h.b16 %v1265
    %v1539 = vunpack.c.l.b16 %v1266
    %v1540 = vunpack.c.h.b16 %v1266
    %v1541 = vunpack.c.l.b16 %v1267
    %v1542 = vunpack.c.h.b16 %v1267
    %v1543 = vunpack.c.l.b16 %v1268
    %v1544 = vunpack.c.h.b16 %v1268
    %v1545 = vunpack.c.l.b16 %v1269
    %v1546 = vunpack.c.h.b16 %v1269
    %v1547 = vunpack.c.l.b16 %v1270
    %v1548 = vunpack.c.h.b16 %v1270
    %v1549 = vunpack.c.l.b16 %v1271
    %v1550 = vunpack.c.h.b16 %v1271
    %v1551 = vunpack.c.l.b16 %v1272
    %v1552 = vunpack.c.h.b16 %v1272
    %v1553 = vunpack.c.l.b16 %v1273
    %v1554 = vunpack.c.h.b16 %v1273
    %v1555 = vunpack.c.l.b16 %v1274
    %v1556 = vunpack.c.h.b16 %v1274
    %v1557 = vunpack.c.l.b16 %v1275
    %v1558 = vunpack.c.h.b16 %v1275
    %v1559 = vunpack.c.l.b16 %v1276
    %v1560 = vunpack.c.h.b16 %v1276
    %v1561 = vunpack.c.l.b16 %v1277
    %v1562 = vunpack.c.h.b16 %v1277
    %v1563 = vunpack.c.l.b16 %v1278
    %v1564 = vunpack.c.h.b16 %v1278
    %v1565 = vunpack.c.l.b16 %v1279
    %v1566 = vunpack.c.h.b16 %v1279
    %v1567 = vunpack.c.l.b16 %v1280
    %v1568 = vunpack.c.h.b16 %v1280
    %v1569 = vunpack.c.l.b16 %v1281
    %v1570 = vunpack.c.h.b16 %v1281
    %v1571 = vunpack.c.l.b16 %v1282
    %v1572 = vunpack.c.h.b16 %v1282
    %v1573 = vunpack.c.l.b16 %v1283
    %v1574 = vunpack.c.h.b16 %v1283
    %v1575 = vunpack.c.l.b16 %v1284
    %v1576 = vunpack.c.h.b16 %v1284
    %v1577 = vunpack.c.l.b16 %v1285
    %v1578 = vunpack.c.h.b16 %v1285
    %v1579 = vunpack.c.l.b16 %v1286
    %v1580 = vunpack.c.h.b16 %v1286
    %v1581 = vunpack.c.l.b16 %v1287
    %v1582 = vunpack.c.h.b16 %v1287
    %v1583 = vunpack.c.l.b16 %v1288
    %v1584 = vunpack.c.h.b16 %v1288
    %v1585 = vunpack.c.l.b16 %v1289
    %v1586 = vunpack.c.h.b16 %v1289
    %v1587 = vunpack.c.l.b16 %v1290
    %v1588 = vunpack.c.h.b16 %v1290
    %v1589 = vunpack.c.l.b16 %v1291
    %v1590 = vunpack.c.h.b16 %v1291
    %v1591 = vunpack.c.l.b16 %v1292
    %v1592 = vunpack.c.h.b16 %v1292
    %v1593 = vunpack.c.l.b16 %v1293
    %v1594 = vunpack.c.h.b16 %v1293
    %v1595 = vunpack.c.l.b16 %v1294
    %v1596 = vunpack.c.h.b16 %v1294
    %v1597 = vunpack.c.l.b16 %v1295
    %v1598 = vunpack.c.h.b16 %v1295
    %v1599 = vunpack.c.l.b16 %v1296
    %v1600 = vunpack.c.h.b16 %v1296
    %v1601 = vunpack.c.l.b16 %v1297
    %v1602 = vunpack.c.h.b16 %v1297
    %v1603 = vunpack.c.l.b16 %v1298
    %v1604 = vunpack.c.h.b16 %v1298
    %v1605 = vunpack.c.l.b16 %v1299
    %v1606 = vunpack.c.h.b16 %v1299
    %v1607 = vunpack.c.l.b16 %v1300
    %v1608 = vunpack.c.h.b16 %v1300
    %v1609 = vunpack.c.l.b16 %v1301
    %v1610 = vunpack.c.h.b16 %v1301
    %v1611 = vunpack.c.l.b16 %v1302
    %v1612 = vunpack.c.h.b16 %v1302
    %v1613 = vunpack.c.l.b16 %v1303
    %v1614 = vunpack.c.h.b16 %v1303
    %v1615 = vunpack.c.l.b16 %v1304
    %v1616 = vunpack.c.h.b16 %v1304
    %v1617 = vunpack.c.l.b16 %v1305
    %v1618 = vunpack.c.h.b16 %v1305
    %v1619 = vunpack.c.l.b16 %v1306
    %v1620 = vunpack.c.h.b16 %v1306
    %v1621 = vunpack.c.l.b16 %v1307
    %v1622 = vunpack.c.h.b16 %v1307
    %v1623 = vunpack.c.l.b16 %v1308
    %v1624 = vunpack.c.h.b16 %v1308
    %v1625 = vunpack.c.l.b16 %v1309
    %v1626 = vunpack.c.h.b16 %v1309
    %v1627 = vunpack.c.l.b16 %v1310
    %v1628 = vunpack.c.h.b16 %v1310
    %v1629 = vunpack.c.l.b16 %v1311
    %v1630 = vunpack.c.h.b16 %v1311
    %v1631 = vunpack.c.l.b16 %v1312
    %v1632 = vunpack.c.h.b16 %v1312
    %v1633 = vunpack.c.l.b16 %v1313
    %v1634 = vunpack.c.h.b16 %v1313
    %v1635 = vunpack.c.l.b16 %v1314
    %v1636 = vunpack.c.h.b16 %v1314
    %v1637 = vunpack.c.l.b16 %v1315
    %v1638 = vunpack.c.h.b16 %v1315
    %v1639 = vunpack.c.l.b16 %v1316
    %v1640 = vunpack.c.h.b16 %v1316
    %v1641 = vunpack.c.l.b16 %v1317
    %v1642 = vunpack.c.h.b16 %v1317
    %v1643 = vunpack.c.l.b16 %v1318
    %v1644 = vunpack.c.h.b16 %v1318
    %v1645 = vunpack.c.l.b16 %v1319
    %v1646 = vunpack.c.h.b16 %v1319
    %v1647 = vunpack.c.l.b16 %v1320
    %v1648 = vunpack.c.h.b16 %v1320
    %v1649 = vunpack.c.l.b16 %v1321
    %v1650 = vunpack.c.h.b16 %v1321
    %v1651 = vunpack.c.l.b16 %v1322
    %v1652 = vunpack.c.h.b16 %v1322
    %v1653 = vunpack.c.l.b16 %v1323
    %v1654 = vunpack.c.h.b16 %v1323
    %v1655 = vunpack.c.l.b16 %v1324
    %v1656 = vunpack.c.h.b16 %v1324
    %v1657 = vunpack.c.l.b16 %v1325
    %v1658 = vunpack.c.h.b16 %v1325
    %v1659 = vunpack.c.l.b16 %v1326
    %v1660 = vunpack.c.h.b16 %v1326
    %v1661 = vunpack.c.l.b16 %v1327
    %v1662 = vunpack.c.h.b16 %v1327
    %v1663 = vunpack.c.l.b16 %v1328
    %v1664 = vunpack.c.h.b16 %v1328
    %v1665 = vunpack.c.l.b16 %v1329
    %v1666 = vunpack.c.h.b16 %v1329
    %v1667 = vunpack.c.l.b16 %v1330
    %v1668 = vunpack.c.h.b16 %v1330
    %v1669 = vunpack.c.l.b16 %v1331
    %v1670 = vunpack.c.h.b16 %v1331
    %v1671 = vunpack.c.l.b16 %v1332
    %v1672 = vunpack.c.h.b16 %v1332
    %v1673 = vunpack.c.l.b16 %v1333
    %v1674 = vunpack.c.h.b16 %v1333
    %v1675 = vunpack.c.l.b16 %v1334
    %v1676 = vunpack.c.h.b16 %v1334
    %v1677 = vunpack.c.l.b16 %v1335
    %v1678 = vunpack.c.h.b16 %v1335
    %v1679 = vunpack.c.l.b16 %v1336
    %v1680 = vunpack.c.h.b16 %v1336
    %v1681 = vunpack.c.l.b16 %v1337
    %v1682 = vunpack.c.h.b16 %v1337
    %v1683 = vunpack.c.l.b16 %v1338
    %v1684 = vunpack.c.h.b16 %v1338
    %v1685 = vunpack.c.l.b16 %v1339
    %v1686 = vunpack.c.h.b16 %v1339
    %v1687 = vunpack.c.l.b16 %v1340
    %v1688 = vunpack.c.h.b16 %v1340
    %v1689 = vunpack.c.l.b16 %v1341
    %v1690 = vunpack.c.h.b16 %v1341
    %v1691 = vunpack.c.l.b16 %v1342
    %v1692 = vunpack.c.h.b16 %v1342
    %v1693 = vunpack.c.l.b16 %v1343
    %v1694 = vunpack.c.h.b16 %v1343
    %v1695 = vunpack.c.l.b16 %v1344
    %v1696 = vunpack.c.h.b16 %v1344
    %v1697 = vunpack.c.l.b16 %v1345
    %v1698 = vunpack.c.h.b16 %v1345
    %v1699 = vunpack.c.l.b16 %v1346
    %v1700 = vunpack.c.h.b16 %v1346
    %v1701 = vunpack.c.l.b16 %v1347
    %v1702 = vunpack.c.h.b16 %v1347
    %v1703 = vunpack.c.l.b16 %v1348
    %v1704 = vunpack.c.h.b16 %v1348
    %v1705 = vunpack.c.l.b16 %v1349
    %v1706 = vunpack.c.h.b16 %v1349
    %v1707 = vunpack.c.l.b16 %v1350
    %v1708 = vunpack.c.h.b16 %v1350
    %v1709 = vunpack.c.l.b16 %v1351
    %v1710 = vunpack.c.h.b16 %v1351
    %v1711 = vunpack.c.l.b16 %v1352
    %v1712 = vunpack.c.h.b16 %v1352
    %v1713 = vunpack.c.l.b16 %v1353
    %v1714 = vunpack.c.h.b16 %v1353
    %v1715 = vunpack.c.l.b16 %v1354
    %v1716 = vunpack.c.h.b16 %v1354
    %v1717 = vunpack.c.l.b16 %v1355
    %v1718 = vunpack.c.h.b16 %v1355
    %v1719 = vunpack.c.l.b16 %v1356
    %v1720 = vunpack.c.h.b16 %v1356
    %v1721 = vunpack.c.l.b16 %v1357
    %v1722 = vunpack.c.h.b16 %v1357
    %v1723 = vunpack.c.l.b16 %v1358
    %v1724 = vunpack.c.h.b16 %v1358
    %v1725 = vunpack.c.l.b16 %v1359
    %v1726 = vunpack.c.h.b16 %v1359
    %v1727 = vunpack.c.l.b16 %v1360
    %v1728 = vunpack.c.h.b16 %v1360
    %v1729 = vunpack.c.l.b16 %v1361
    %v1730 = vunpack.c.h.b16 %v1361
    %v1731 = vunpack.c.l.b16 %v1362
    %v1732 = vunpack.c.h.b16 %v1362
    %v1733 = vunpack.c.l.b16 %v1363
    %v1734 = vunpack.c.h.b16 %v1363
    %v1735 = vunpack.c.l.b16 %v1364
    %v1736 = vunpack.c.h.b16 %v1364
    %v1737 = vunpack.c.l.b16 %v1365
    %v1738 = vunpack.c.h.b16 %v1365
    %v1739 = vunpack.c.l.b16 %v1366
    %v1740 = vunpack.c.h.b16 %v1366
    %v1741 = vunpack.c.l.b16 %v1367
    %v1742 = vunpack.c.h.b16 %v1367
    %v1743 = vunpack.c.l.b16 %v1368
    %v1744 = vunpack.c.h.b16 %v1368
    %v1745 = vunpack.c.l.b16 %v1369
    %v1746 = vunpack.c.h.b16 %v1369
    %v1747 = vunpack.c.l.b16 %v1370
    %v1748 = vunpack.c.h.b16 %v1370
    %v1749 = vunpack.c.l.b16 %v1371
    %v1750 = vunpack.c.h.b16 %v1371
    %v1751 = vunpack.c.l.b16 %v1372
    %v1752 = vunpack.c.h.b16 %v1372
    %v1753 = vunpack.c.l.b16 %v1373
    %v1754 = vunpack.c.h.b16 %v1373
    %v1755 = vunpack.c.l.b16 %v1374
    %v1756 = vunpack.c.h.b16 %v1374
    %v1757 = vunpack.c.l.b16 %v1375
    %v1758 = vunpack.c.h.b16 %v1375
    %v1759 = vunpack.c.l.b16 %v1376
    %v1760 = vunpack.c.h.b16 %v1376
    %v1761 = vunpack.c.l.b16 %v1377
    %v1762 = vunpack.c.h.b16 %v1377
    %v1763 = vunpack.c.l.b16 %v1378
    %v1764 = vunpack.c.h.b16 %v1378
    %v1765 = vunpack.c.l.b16 %v1379
    %v1766 = vunpack.c.h.b16 %v1379
    %v1767 = vunpack.c.l.b16 %v1380
    %v1768 = vunpack.c.h.b16 %v1380
    %v1769 = vunpack.c.l.b16 %v1381
    %v1770 = vunpack.c.h.b16 %v1381
    %v1771 = vunpack.c.l.b16 %v1382
    %v1772 = vunpack.c.h.b16 %v1382
    %v1773 = vunpack.c.l.b16 %v1383
    %v1774 = vunpack.c.h.b16 %v1383
    %v1775 = vunpack.c.l.b16 %v1384
    %v1776 = vunpack.c.h.b16 %v1384
    %v1777 = vunpack.c.l.b16 %v1385
    %v1778 = vunpack.c.h.b16 %v1385
    %v1779 = vunpack.c.l.b16 %v1386
    %v1780 = vunpack.c.h.b16 %v1386
    %v1781 = vunpack.c.l.b16 %v1387
    %v1782 = vunpack.c.h.b16 %v1387
    %v1783 = vunpack.c.l.b16 %v1388
    %v1784 = vunpack.c.h.b16 %v1388
    %v1785 = vpack.c.b16 %v1531, %v1529
    %v1786 = vpack.c.b16 %v1532, %v1530
    %v1787 = vpack.c.b16 %v1535, %v1533
    %v1788 = vpack.c.b16 %v1536, %v1534
    %v1789 = vpack.c.b16 %v1539, %v1537
    %v1790 = vpack.c.b16 %v1540, %v1538
    %v1791 = vpack.c.b16 %v1543, %v1541
    %v1792 = vpack.c.b16 %v1544, %v1542
    %v1793 = vpack.c.b16 %v1547, %v1545
    %v1794 = vpack.c.b16 %v1548, %v1546
    %v1795 = vpack.c.b16 %v1551, %v1549
    %v1796 = vpack.c.b16 %v1552, %v1550
    %v1797 = vpack.c.b16 %v1555, %v1553
    %v1798 = vpack.c.b16 %v1556, %v1554
    %v1799 = vpack.c.b16 %v1559, %v1557
    %v1800 = vpack.c.b16 %v1560, %v1558
    %v1801 = vpack.c.b16 %v1563, %v1561
    %v1802 = vpack.c.b16 %v1564, %v1562
    %v1803 = vpack.c.b16 %v1567, %v1565
    %v1804 = vpack.c.b16 %v1568, %v1566
    %v1805 = vpack.c.b16 %v1571, %v1569
    %v1806 = vpack.c.b16 %v1572, %v1570
    %v1807 = vpack.c.b16 %v1575, %v1573
    %v1808 = vpack.c.b16 %v1576, %v1574
    %v1809 = vpack.c.b16 %v1579, %v1577
    %v1810 = vpack.c.b16 %v1580, %v1578
    %v1811 = vpack.c.b16 %v1583, %v1581
    %v1812 = vpack.c.b16 %v1584, %v1582
    %v1813 = vpack.c.b16 %v1587, %v1585
    %v1814 = vpack.c.b16 %v1588, %v1586
    %v1815 = vpack.c.b16 %v1591, %v1589
    %v1816 = vpack.c.b16 %v1592, %v1590
    %v1817 = vpack.c.b16 %v1595, %v1593
    %v1818 = vpack.c.b16 %v1596, %v1594
    %v1819 = vpack.c.b16 %v1599, %v1597
    %v1820 = vpack.c.b16 %v1600, %v1598
    %v1821 = vpack.c.b16 %v1603, %v1601
    %v1822 = vpack.c.b16 %v1604, %v1602
    %v1823 = vpack.c.b16 %v1607, %v1605
    %v1824 = vpack.c.b16 %v1608, %v1606
    %v1825 = vpack.c.b16 %v1611, %v1609
    %v1826 = vpack.c.b16 %v1612, %v1610
    %v1827 = vpack.c.b16 %v1615, %v1613
    %v1828 = vpack.c.b16 %v1616, %v1614
    %v1829 = vpack.c.b16 %v1619, %v1617
    %v1830 = vpack.c.b16 %v1620, %v1618
    %v1831 = vpack.c.b16 %v1623, %v1621
    %v1832 = vpack.c.b16 %v1624, %v1622
    %v1833 = vpack.c.b16 %v1627, %v1625
    %v1834 = vpack.c.b16 %v1628, %v1626
    %v1835 = vpack.c.b16 %v1631, %v1629
    %v1836 = vpack.c.b16 %v1632, %v1630
    %v1837 = vpack.c.b16 %v1635, %v1633
    %v1838 = vpack.c.b16 %v1636, %v1634
    %v1839 = vpack.c.b16 %v1639, %v1637
    %v1840 = vpack.c.b16 %v1640, %v1638
    %v1841 = vpack.c.b16 %v1643, %v1641
    %v1842 = vpack.c.b16 %v1644, %v1642
    %v1843 = vpack.c.b16 %v1647, %v1645
    %v1844 = vpack.c.b16 %v1648, %v1646
    %v1845 = vpack.c.b16 %v1651, %v1649
    %v1846 = vpack.c.b16 %v1652, %v1650
    %v1847 = vpack.c.b16 %v1655, %v1653
    %v1848 = vpack.c.b16 %v1656, %v1654
    %v1849 = vpack.c.b16 %v1659, %v1657
    %v1850 = vpack.c.b16 %v1660, %v1658
    %v1851 = vpack.c.b16 %v1663, %v1661
    %v1852 = vpack.c.b16 %v1664, %v1662
    %v1853 = vpack.c.b16 %v1667, %v1665
    %v1854 = vpack.c.b16 %v1668, %v1666
    %v1855 = vpack.c.b16 %v1671, %v1669
    %v1856 = vpack.c.b16 %v1672, %v1670
    %v1857 = vpack.c.b16 %v1675, %v1673
    %v1858 = vpack.c.b16 %v1676, %v1674
    %v1859 = vpack.c.b16 %v1679, %v1677
    %v1860 = vpack.c.b16 %v1680, %v1678
    %v1861 = vpack.c.b16 %v1683, %v1681
    %v1862 = vpack.c.b16 %v1684, %v1682
    %v1863 = vpack.c.b16 %v1687, %v1685
    %v1864 = vpack.c.b16 %v1688, %v1686
    %v1865 = vpack.c.b16 %v1691, %v1689
    %v1866 = vpack.c.b16 %v1692, %v1690
    %v1867 = vpack.c.b16 %v1695, %v1693
    %v1868 = vpack.c.b16 %v1696, %v1694
    %v1869 = vpack.c.b16 %v1699, %v1697
    %v1870 = vpack.c.b16 %v1700, %v1698
    %v1871 = vpack.c.b16 %v1703, %v1701
    %v1872 = vpack.c.b16 %v1704, %v1702
    %v1873 = vpack.c.b16 %v1707, %v1705
    %v1874 = vpack.c.b16 %v1708, %v1706
    %v1875 = vpack.c.b16 %v1711, %v1709
    %v1876 = vpack.c.b16 %v1712, %v1710
    %v1877 = vpack.c.b16 %v1715, %v1713
    %v1878 = vpack.c.b16 %v1716, %v1714
    %v1879 = vpack.c.b16 %v1719, %v1717
    %v1880 = vpack.c.b16 %v1720, %v1718
    %v1881 = vpack.c.b16 %v1723, %v1721
    %v1882 = vpack.c.b16 %v1724, %v1722
    %v1883 = vpack.c.b16 %v1727, %v1725
    %v1884 = vpack.c.b16 %v1728, %v1726
    %v1885 = vpack.c.b16 %v1731, %v1729
    %v1886 = vpack.c.b16 %v1732, %v1730
    %v1887 = vpack.c.b16 %v1735, %v1733
    %v1888 = vpack.c.b16 %v1736, %v1734
    %v1889 = vpack.c.b16 %v1739, %v1737
    %v1890 = vpack.c.b16 %v1740, %v1738
    %v1891 = vpack.c.b16 %v1743, %v1741
    %v1892 = vpack.c.b16 %v1744, %v1742
    %v1893 = vpack.c.b16 %v1747, %v1745
    %v1894 = vpack.c.b16 %v1748, %v1746
    %v1895 = vpack.c.b16 %v1751, %v1749
    %v1896 = vpack.c.b16 %v1752, %v1750
    %v1897 = vpack.c.b16 %v1755, %v1753
    %v1898 = vpack.c.b16 %v1756, %v1754
    %v1899 = vpack.c.b16 %v1759, %v1757
    %v1900 = vpack.c.b16 %v1760, %v1758
    %v1901 = vpack.c.b16 %v1763, %v1761
    %v1902 = vpack.c.b16 %v1764, %v1762
    %v1903 = vpack.c.b16 %v1767, %v1765
    %v1904 = vpack.c.b16 %v1768, %v1766
    %v1905 = vpack.c.b16 %v1771, %v1769
    %v1906 = vpack.c.b16 %v1772, %v1770
    %v1907 = vpack.c.b16 %v1775, %v1773
    %v1908 = vpack.c.b16 %v1776, %v1774
    %v1909 = vpack.c.b16 %v1779, %v1777
    %v1910 = vpack.c.b16 %v1780, %v1778
    %v1911 = vpack.c.b16 %v1783, %v1781
    %v1912 = vpack.c.b16 %v1784, %v1782
    %2041 = vmatprep.subr.bf16.mxu0 %v1800
    %2042 = vmatpush1.bf16.msra.mxu0 %v1799
    %2043 = vmatprep.subr.bf16.mxu0 %v1798
    %2044 = vmatpush1.bf16.msra.mxu0 %v1797
    %2045 = vmatprep.subr.bf16.mxu0 %v1796
    %2046 = vmatpush1.bf16.msra.mxu0 %v1795
    %2047 = vmatprep.subr.bf16.mxu0 %v1794
    %2048 = vmatpush1.bf16.msra.mxu0 %v1793
    %2049 = vmatprep.subr.bf16.mxu0 %v1792
    %2050 = vmatpush1.bf16.msra.mxu0 %v1791
    %2051 = vmatprep.subr.bf16.mxu0 %v1790
    %2052 = vmatpush1.bf16.msra.mxu0 %v1789
    %2053 = vmatprep.subr.bf16.mxu0 %v1788
    %2054 = vmatpush1.bf16.msra.mxu0 %v1787
    %2055 = vmatprep.subr.bf16.mxu0 %v1786
    %2056 = vmatpush1.bf16.msra.mxu0 %v1785
    %2057 = vmatprep.subr.bf16.mxu0 %v1816
    %2058 = vmatpush2.bf16.msra.mxu0 %v1815
    %2059 = vmatprep.subr.bf16.mxu0 %v1814
    %2060 = vmatpush2.bf16.msra.mxu0 %v1813
    %2061 = vmatprep.subr.bf16.mxu0 %v1812
    %2062 = vmatpush2.bf16.msra.mxu0 %v1811
    %2063 = vmatprep.subr.bf16.mxu0 %v1810
    %2064 = vmatpush2.bf16.msra.mxu0 %v1809
    %2065 = vmatprep.subr.bf16.mxu0 %v1808
    %2066 = vmatpush2.bf16.msra.mxu0 %v1807
    %2067 = vmatprep.subr.bf16.mxu0 %v1806
    %2068 = vmatpush2.bf16.msra.mxu0 %v1805
    %2069 = vmatprep.subr.bf16.mxu0 %v1804
    %2070 = vmatpush2.bf16.msra.mxu0 %v1803
    %2071 = vmatprep.subr.bf16.mxu0 %v1802
    %2072 = vmatpush2.bf16.msra.mxu0 %v1801
    %2073 = vmatprep.mubr.bf16.mxu0 %v1254
    %2074 = vmatmul.mubr.bf16.gmra.mxu0 %v1253
    %v2075 = vpop.f32.mrf.mxu0
    %v2076 = vadd.f32 %v1394, %v2075
    %v2077 = vpop.f32.mrf.mxu0
    %v2078 = vadd.f32 %v1398, %v2077
    %v2079 = vpop.f32.mrf.mxu0
    %v2080 = vpop.f32.mrf.mxu0
    %2081 = vdwg.mxu0
    %2082 = vmatprep.subr.bf16.mxu0 %v1832
    %2083 = vmatpush1.bf16.msra.mxu0 %v1831
    %2084 = vmatprep.subr.bf16.mxu0 %v1830
    %2085 = vmatpush1.bf16.msra.mxu0 %v1829
    %2086 = vmatprep.subr.bf16.mxu0 %v1828
    %2087 = vmatpush1.bf16.msra.mxu0 %v1827
    %2088 = vmatprep.subr.bf16.mxu0 %v1826
    %2089 = vmatpush1.bf16.msra.mxu0 %v1825
    %2090 = vmatprep.subr.bf16.mxu0 %v1824
    %2091 = vmatpush1.bf16.msra.mxu0 %v1823
    %2092 = vmatprep.subr.bf16.mxu0 %v1822
    %2093 = vmatpush1.bf16.msra.mxu0 %v1821
    %2094 = vmatprep.subr.bf16.mxu0 %v1820
    %2095 = vmatpush1.bf16.msra.mxu0 %v1819
    %2096 = vmatprep.subr.bf16.mxu0 %v1818
    %2097 = vmatpush1.bf16.msra.mxu0 %v1817
    %2098 = vmatprep.subr.bf16.mxu0 %v1848
    %2099 = vmatpush2.bf16.msra.mxu0 %v1847
    %2100 = vmatprep.subr.bf16.mxu0 %v1846
    %2101 = vmatpush2.bf16.msra.mxu0 %v1845
    %2102 = vmatprep.subr.bf16.mxu0 %v1844
    %2103 = vmatpush2.bf16.msra.mxu0 %v1843
    %2104 = vmatprep.subr.bf16.mxu0 %v1842
    %2105 = vmatpush2.bf16.msra.mxu0 %v1841
    %2106 = vmatprep.subr.bf16.mxu0 %v1840
    %2107 = vmatpush2.bf16.msra.mxu0 %v1839
    %2108 = vmatprep.subr.bf16.mxu0 %v1838
    %2109 = vmatpush2.bf16.msra.mxu0 %v1837
    %2110 = vmatprep.subr.bf16.mxu0 %v1836
    %2111 = vmatpush2.bf16.msra.mxu0 %v1835
    %2112 = vmatprep.subr.bf16.mxu0 %v1834
    %2113 = vmatpush2.bf16.msra.mxu0 %v1833
    %2114 = vmatprep.mubr.bf16.mxu0 %v1256
    %2115 = vmatmul.mubr.bf16.gmra.mxu0 %v1255
    %v2116 = vpop.f32.mrf.mxu0
    %v2117 = vadd.f32 %v2076, %v2116
    %v2118 = vpop.f32.mrf.mxu0
    %v2119 = vadd.f32 %v2078, %v2118
    %v2120 = vpop.f32.mrf.mxu0
    %v2121 = vpop.f32.mrf.mxu0
    %2122 = vdwg.mxu0
    %2123 = vmatprep.subr.bf16.mxu0 %v1864
    %2124 = vmatpush1.bf16.msra.mxu0 %v1863
    %2125 = vmatprep.subr.bf16.mxu0 %v1862
    %2126 = vmatpush1.bf16.msra.mxu0 %v1861
    %2127 = vmatprep.subr.bf16.mxu0 %v1860
    %2128 = vmatpush1.bf16.msra.mxu0 %v1859
    %2129 = vmatprep.subr.bf16.mxu0 %v1858
    %2130 = vmatpush1.bf16.msra.mxu0 %v1857
    %2131 = vmatprep.subr.bf16.mxu0 %v1856
    %2132 = vmatpush1.bf16.msra.mxu0 %v1855
    %2133 = vmatprep.subr.bf16.mxu0 %v1854
    %2134 = vmatpush1.bf16.msra.mxu0 %v1853
    %2135 = vmatprep.subr.bf16.mxu0 %v1852
    %2136 = vmatpush1.bf16.msra.mxu0 %v1851
    %2137 = vmatprep.subr.bf16.mxu0 %v1850
    %2138 = vmatpush1.bf16.msra.mxu0 %v1849
    %2139 = vmatprep.subr.bf16.mxu0 %v1880
    %2140 = vmatpush2.bf16.msra.mxu0 %v1879
    %2141 = vmatprep.subr.bf16.mxu0 %v1878
    %2142 = vmatpush2.bf16.msra.mxu0 %v1877
    %2143 = vmatprep.subr.bf16.mxu0 %v1876
    %2144 = vmatpush2.bf16.msra.mxu0 %v1875
    %2145 = vmatprep.subr.bf16.mxu0 %v1874
    %2146 = vmatpush2.bf16.msra.mxu0 %v1873
    %2147 = vmatprep.subr.bf16.mxu0 %v1872
    %2148 = vmatpush2.bf16.msra.mxu0 %v1871
    %2149 = vmatprep.subr.bf16.mxu0 %v1870
    %2150 = vmatpush2.bf16.msra.mxu0 %v1869
    %2151 = vmatprep.subr.bf16.mxu0 %v1868
    %2152 = vmatpush2.bf16.msra.mxu0 %v1867
    %2153 = vmatprep.subr.bf16.mxu0 %v1866
    %2154 = vmatpush2.bf16.msra.mxu0 %v1865
    %2155 = vmatprep.mubr.bf16.mxu0 %v1258
    %2156 = vmatmul.mubr.bf16.gmra.mxu0 %v1257
    %v2157 = vpop.f32.mrf.mxu0
    %v2158 = vadd.f32 %v2117, %v2157
    %v2159 = vpop.f32.mrf.mxu0
    %v2160 = vadd.f32 %v2119, %v2159
    %v2161 = vpop.f32.mrf.mxu0
    %v2162 = vpop.f32.mrf.mxu0
    %2163 = vdwg.mxu0
    %2164 = vmatprep.subr.bf16.mxu0 %v1896
    %2165 = vmatpush1.bf16.msra.mxu0 %v1895
    %2166 = vmatprep.subr.bf16.mxu0 %v1894
    %2167 = vmatpush1.bf16.msra.mxu0 %v1893
    %2168 = vmatprep.subr.bf16.mxu0 %v1892
    %2169 = vmatpush1.bf16.msra.mxu0 %v1891
    %2170 = vmatprep.subr.bf16.mxu0 %v1890
    %2171 = vmatpush1.bf16.msra.mxu0 %v1889
    %2172 = vmatprep.subr.bf16.mxu0 %v1888
    %2173 = vmatpush1.bf16.msra.mxu0 %v1887
    %2174 = vmatprep.subr.bf16.mxu0 %v1886
    %2175 = vmatpush1.bf16.msra.mxu0 %v1885
    %2176 = vmatprep.subr.bf16.mxu0 %v1884
    %2177 = vmatpush1.bf16.msra.mxu0 %v1883
    %2178 = vmatprep.subr.bf16.mxu0 %v1882
    %2179 = vmatpush1.bf16.msra.mxu0 %v1881
    %2180 = vmatprep.subr.bf16.mxu0 %v1912
    %2181 = vmatpush2.bf16.msra.mxu0 %v1911
    %2182 = vmatprep.subr.bf16.mxu0 %v1910
    %2183 = vmatpush2.bf16.msra.mxu0 %v1909
    %2184 = vmatprep.subr.bf16.mxu0 %v1908
    %2185 = vmatpush2.bf16.msra.mxu0 %v1907
    %2186 = vmatprep.subr.bf16.mxu0 %v1906
    %2187 = vmatpush2.bf16.msra.mxu0 %v1905
    %2188 = vmatprep.subr.bf16.mxu0 %v1904
    %2189 = vmatpush2.bf16.msra.mxu0 %v1903
    %2190 = vmatprep.subr.bf16.mxu0 %v1902
    %2191 = vmatpush2.bf16.msra.mxu0 %v1901
    %2192 = vmatprep.subr.bf16.mxu0 %v1900
    %2193 = vmatpush2.bf16.msra.mxu0 %v1899
    %2194 = vmatprep.subr.bf16.mxu0 %v1898
    %2195 = vmatpush2.bf16.msra.mxu0 %v1897
    %2196 = vmatprep.mubr.bf16.mxu0 %v1260
    %2197 = vmatmul.mubr.bf16.gmra.mxu0 %v1259
    %v2198 = vpop.f32.mrf.mxu0
    %v2199 = vadd.f32 %v2158, %v2198
    %v2200 = vpop.f32.mrf.mxu0
    %v2201 = vadd.f32 %v2160, %v2200
    %v2202 = vpop.f32.mrf.mxu0
    %v2203 = vpop.f32.mrf.mxu0
    %2204 = vdwg.mxu0
    %v2205 = vld [vmem:[%s12] sm:$0x3]
    %v2207 = vlaneseq
    %v2208 = vshrl.u32 %v2207, 7
    %v2209 = vsub.s32 0, %v2208
    %v2210 = vrot.slane %v2205, %v2209
    %v2211 = vlaneseq
    %v2212 = vshrl.u32 %v2211, 7
    %v2213 = vsub.s32 1, %v2212
    %v2214 = vrot.slane %v2205, %v2213
    %v2217 = vmul.f32 %v2199, %v2210
    %v2218 = vmul.f32 %v2201, %v2214
    %v2219 = vld [vmem:[%s13] sm:$0x3]
    %v2221 = vlaneseq
    %v2222 = vshrl.u32 %v2221, 7
    %v2223 = vsub.s32 0, %v2222
    %v2224 = vrot.slane %v2219, %v2223
    %v2225 = vlaneseq
    %v2226 = vshrl.u32 %v2225, 7
    %v2227 = vsub.s32 1, %v2226
    %v2228 = vrot.slane %v2219, %v2227
    %v2231 = vadd.f32 %v2217, %v2224
    %v2232 = vadd.f32 %v2218, %v2228
    %vm2233 = vcmp.ge.f32.partialorder %v2231, 0.0
    %vm2234 = vcmp.ge.f32.partialorder %v2232, 0.0
    %v2235 = vmul.f32 %v2231, 0.05
    %v2236 = vmul.f32 %v2232, 0.05
    %v2237 = vsel %vm2233, %v2231, %v2235
    %v2238 = vsel %vm2234, %v2232, %v2236
    %v2239 = vld [vmem:[%s14] sm:$0x3]
    %v2241 = vlaneseq
    %v2242 = vshrl.u32 %v2241, 7
    %v2243 = vsub.s32 0, %v2242
    %v2244 = vrot.slane %v2239, %v2243
    %v2245 = vlaneseq
    %v2246 = vshrl.u32 %v2245, 7
    %v2247 = vsub.s32 1, %v2246
    %v2248 = vrot.slane %v2239, %v2247
    %v2251 = vmul.f32 %v2237, %v2244
    %v2252 = vmul.f32 %v2238, %v2248
    %v2253 = vadd.f32 %v2251, %v2252
    %2254 = vadd.xlane.f32.xlu0 %v2253
    %v2255 = vpop.xlane.xlu0 %2254
    %v2256 = vstv %s1228
    %v2257 = vadd.f32 %v2255, %v2256
    %v2258 = vld [vmem:[%s15] sm:$0xff]
    %v2260 = vlaneseq
    %v2261 = vshrl.u32 %v2260, 7
    %v2262 = vsub.s32 0, %v2261
    %v2263 = vrot.slane %v2258, %v2262
    %v2264 = vlaneseq
    %v2265 = vshrl.u32 %v2264, 7
    %v2266 = vsub.s32 1, %v2265
    %v2267 = vrot.slane %v2258, %v2266
    %v2268 = vlaneseq
    %v2269 = vshrl.u32 %v2268, 7
    %v2270 = vsub.s32 2, %v2269
    %v2271 = vrot.slane %v2258, %v2270
    %v2272 = vlaneseq
    %v2273 = vshrl.u32 %v2272, 7
    %v2274 = vsub.s32 3, %v2273
    %v2275 = vrot.slane %v2258, %v2274
    %v2276 = vlaneseq
    %v2277 = vshrl.u32 %v2276, 7
    %v2278 = vsub.s32 4, %v2277
    %v2279 = vrot.slane %v2258, %v2278
    %v2280 = vlaneseq
    %v2281 = vshrl.u32 %v2280, 7
    %v2282 = vsub.s32 5, %v2281
    %v2283 = vrot.slane %v2258, %v2282
    %v2284 = vlaneseq
    %v2285 = vshrl.u32 %v2284, 7
    %v2286 = vsub.s32 6, %v2285
    %v2287 = vrot.slane %v2258, %v2286
    %v2288 = vlaneseq
    %v2289 = vshrl.u32 %v2288, 7
    %v2290 = vsub.s32 7, %v2289
    %v2291 = vrot.slane %v2258, %v2290
    %v2300 = vmul.f32 %v190, %v2263
    %v2301 = vmul.f32 %v191, %v2267
    %v2302 = vmul.f32 %v192, %v2271
    %v2303 = vmul.f32 %v193, %v2275
    %v2304 = vmul.f32 %v194, %v2279
    %v2305 = vmul.f32 %v195, %v2283
    %v2306 = vmul.f32 %v196, %v2287
    %v2307 = vmul.f32 %v197, %v2291
    %v2308 = vld [vmem:[%s16] sm:$0xff]
    %v2310 = vlaneseq
    %v2311 = vshrl.u32 %v2310, 7
    %v2312 = vsub.s32 0, %v2311
    %v2313 = vrot.slane %v2308, %v2312
    %v2314 = vlaneseq
    %v2315 = vshrl.u32 %v2314, 7
    %v2316 = vsub.s32 1, %v2315
    %v2317 = vrot.slane %v2308, %v2316
    %v2318 = vlaneseq
    %v2319 = vshrl.u32 %v2318, 7
    %v2320 = vsub.s32 2, %v2319
    %v2321 = vrot.slane %v2308, %v2320
    %v2322 = vlaneseq
    %v2323 = vshrl.u32 %v2322, 7
    %v2324 = vsub.s32 3, %v2323
    %v2325 = vrot.slane %v2308, %v2324
    %v2326 = vlaneseq
    %v2327 = vshrl.u32 %v2326, 7
    %v2328 = vsub.s32 4, %v2327
    %v2329 = vrot.slane %v2308, %v2328
    %v2330 = vlaneseq
    %v2331 = vshrl.u32 %v2330, 7
    %v2332 = vsub.s32 5, %v2331
    %v2333 = vrot.slane %v2308, %v2332
    %v2334 = vlaneseq
    %v2335 = vshrl.u32 %v2334, 7
    %v2336 = vsub.s32 6, %v2335
    %v2337 = vrot.slane %v2308, %v2336
    %v2338 = vlaneseq
    %v2339 = vshrl.u32 %v2338, 7
    %v2340 = vsub.s32 7, %v2339
    %v2341 = vrot.slane %v2308, %v2340
    %v2350 = vadd.f32 %v2300, %v2313
    %v2351 = vadd.f32 %v2301, %v2317
    %v2352 = vadd.f32 %v2302, %v2321
    %v2353 = vadd.f32 %v2303, %v2325
    %v2354 = vadd.f32 %v2304, %v2329
    %v2355 = vadd.f32 %v2305, %v2333
    %v2356 = vadd.f32 %v2306, %v2337
    %v2357 = vadd.f32 %v2307, %v2341
    %vm2358 = vcmp.ge.f32.partialorder %v2350, 0.0
    %vm2359 = vcmp.ge.f32.partialorder %v2351, 0.0
    %vm2360 = vcmp.ge.f32.partialorder %v2352, 0.0
    %vm2361 = vcmp.ge.f32.partialorder %v2353, 0.0
    %vm2362 = vcmp.ge.f32.partialorder %v2354, 0.0
    %vm2363 = vcmp.ge.f32.partialorder %v2355, 0.0
    %vm2364 = vcmp.ge.f32.partialorder %v2356, 0.0
    %vm2365 = vcmp.ge.f32.partialorder %v2357, 0.0
    %v2366 = vmul.f32 %v2350, 0.05
    %v2367 = vmul.f32 %v2351, 0.05
    %v2368 = vmul.f32 %v2352, 0.05
    %v2369 = vmul.f32 %v2353, 0.05
    %v2370 = vmul.f32 %v2354, 0.05
    %v2371 = vmul.f32 %v2355, 0.05
    %v2372 = vmul.f32 %v2356, 0.05
    %v2373 = vmul.f32 %v2357, 0.05
    %v2374 = vsel %vm2358, %v2350, %v2366
    %v2375 = vsel %vm2359, %v2351, %v2367
    %v2376 = vsel %vm2360, %v2352, %v2368
    %v2377 = vsel %vm2361, %v2353, %v2369
    %v2378 = vsel %vm2362, %v2354, %v2370
    %v2379 = vsel %vm2363, %v2355, %v2371
    %v2380 = vsel %vm2364, %v2356, %v2372
    %v2381 = vsel %vm2365, %v2357, %v2373
    %v2382 = vpack.c.bf16 %v2374, %v2374
    %v2383 = vpack.c.bf16 %v2375, %v2375
    %v2384 = vpack.c.bf16 %v2376, %v2376
    %v2385 = vpack.c.bf16 %v2377, %v2377
    %v2386 = vpack.c.bf16 %v2378, %v2378
    %v2387 = vpack.c.bf16 %v2379, %v2379
    %v2388 = vpack.c.bf16 %v2380, %v2380
    %v2389 = vpack.c.bf16 %v2381, %v2381
    %v2390 = vld [vmem:[%s17] sm:$0xff]
    %v2392 = vlaneseq
    %v2393 = vshrl.u32 %v2392, 7
    %v2394 = vsub.s32 0, %v2393
    %v2395 = vrot.slane %v2390, %v2394
    %v2396 = vlaneseq
    %v2397 = vshrl.u32 %v2396, 7
    %v2398 = vsub.s32 1, %v2397
    %v2399 = vrot.slane %v2390, %v2398
    %v2400 = vlaneseq
    %v2401 = vshrl.u32 %v2400, 7
    %v2402 = vsub.s32 2, %v2401
    %v2403 = vrot.slane %v2390, %v2402
    %v2404 = vlaneseq
    %v2405 = vshrl.u32 %v2404, 7
    %v2406 = vsub.s32 3, %v2405
    %v2407 = vrot.slane %v2390, %v2406
    %v2408 = vlaneseq
    %v2409 = vshrl.u32 %v2408, 7
    %v2410 = vsub.s32 4, %v2409
    %v2411 = vrot.slane %v2390, %v2410
    %v2412 = vlaneseq
    %v2413 = vshrl.u32 %v2412, 7
    %v2414 = vsub.s32 5, %v2413
    %v2415 = vrot.slane %v2390, %v2414
    %v2416 = vlaneseq
    %v2417 = vshrl.u32 %v2416, 7
    %v2418 = vsub.s32 6, %v2417
    %v2419 = vrot.slane %v2390, %v2418
    %v2420 = vlaneseq
    %v2421 = vshrl.u32 %v2420, 7
    %v2422 = vsub.s32 7, %v2421
    %v2423 = vrot.slane %v2390, %v2422
    %v2432 = vmul.f32 %v162, %v2395
    %v2433 = vmul.f32 %v163, %v2399
    %v2434 = vmul.f32 %v164, %v2403
    %v2435 = vmul.f32 %v165, %v2407
    %v2436 = vmul.f32 %v166, %v2411
    %v2437 = vmul.f32 %v167, %v2415
    %v2438 = vmul.f32 %v168, %v2419
    %v2439 = vmul.f32 %v169, %v2423
    %v2440 = vld [vmem:[%s18] sm:$0xff]
    %v2442 = vlaneseq
    %v2443 = vshrl.u32 %v2442, 7
    %v2444 = vsub.s32 0, %v2443
    %v2445 = vrot.slane %v2440, %v2444
    %v2446 = vlaneseq
    %v2447 = vshrl.u32 %v2446, 7
    %v2448 = vsub.s32 1, %v2447
    %v2449 = vrot.slane %v2440, %v2448
    %v2450 = vlaneseq
    %v2451 = vshrl.u32 %v2450, 7
    %v2452 = vsub.s32 2, %v2451
    %v2453 = vrot.slane %v2440, %v2452
    %v2454 = vlaneseq
    %v2455 = vshrl.u32 %v2454, 7
    %v2456 = vsub.s32 3, %v2455
    %v2457 = vrot.slane %v2440, %v2456
    %v2458 = vlaneseq
    %v2459 = vshrl.u32 %v2458, 7
    %v2460 = vsub.s32 4, %v2459
    %v2461 = vrot.slane %v2440, %v2460
    %v2462 = vlaneseq
    %v2463 = vshrl.u32 %v2462, 7
    %v2464 = vsub.s32 5, %v2463
    %v2465 = vrot.slane %v2440, %v2464
    %v2466 = vlaneseq
    %v2467 = vshrl.u32 %v2466, 7
    %v2468 = vsub.s32 6, %v2467
    %v2469 = vrot.slane %v2440, %v2468
    %v2470 = vlaneseq
    %v2471 = vshrl.u32 %v2470, 7
    %v2472 = vsub.s32 7, %v2471
    %v2473 = vrot.slane %v2440, %v2472
    %v2482 = vadd.f32 %v2432, %v2445
    %v2483 = vadd.f32 %v2433, %v2449
    %v2484 = vadd.f32 %v2434, %v2453
    %v2485 = vadd.f32 %v2435, %v2457
    %v2486 = vadd.f32 %v2436, %v2461
    %v2487 = vadd.f32 %v2437, %v2465
    %v2488 = vadd.f32 %v2438, %v2469
    %v2489 = vadd.f32 %v2439, %v2473
    %vm2490 = vcmp.ge.f32.partialorder %v2482, 0.0
    %vm2491 = vcmp.ge.f32.partialorder %v2483, 0.0
    %vm2492 = vcmp.ge.f32.partialorder %v2484, 0.0
    %vm2493 = vcmp.ge.f32.partialorder %v2485, 0.0
    %vm2494 = vcmp.ge.f32.partialorder %v2486, 0.0
    %vm2495 = vcmp.ge.f32.partialorder %v2487, 0.0
    %vm2496 = vcmp.ge.f32.partialorder %v2488, 0.0
    %vm2497 = vcmp.ge.f32.partialorder %v2489, 0.0
    %v2498 = vmul.f32 %v2482, 0.05
    %v2499 = vmul.f32 %v2483, 0.05
    %v2500 = vmul.f32 %v2484, 0.05
    %v2501 = vmul.f32 %v2485, 0.05
    %v2502 = vmul.f32 %v2486, 0.05
    %v2503 = vmul.f32 %v2487, 0.05
    %v2504 = vmul.f32 %v2488, 0.05
    %v2505 = vmul.f32 %v2489, 0.05
    %v2506 = vsel %vm2490, %v2482, %v2498
    %v2507 = vsel %vm2491, %v2483, %v2499
    %v2508 = vsel %vm2492, %v2484, %v2500
    %v2509 = vsel %vm2493, %v2485, %v2501
    %v2510 = vsel %vm2494, %v2486, %v2502
    %v2511 = vsel %vm2495, %v2487, %v2503
    %v2512 = vsel %vm2496, %v2488, %v2504
    %v2513 = vsel %vm2497, %v2489, %v2505
    %v2514 = vpack.c.bf16 %v2506, %v2506
    %v2515 = vpack.c.bf16 %v2507, %v2507
    %v2516 = vpack.c.bf16 %v2508, %v2508
    %v2517 = vpack.c.bf16 %v2509, %v2509
    %v2518 = vpack.c.bf16 %v2510, %v2510
    %v2519 = vpack.c.bf16 %v2511, %v2511
    %v2520 = vpack.c.bf16 %v2512, %v2512
    %v2521 = vpack.c.bf16 %v2513, %v2513
    %v2522 = vld [vmem:[#allocation8] sm:$0xff]
    %v2523 = vld [vmem:[#allocation8 + $0x8] sm:$0xff]
    %v2524 = vld [vmem:[#allocation8 + $0x10] sm:$0xff]
    %v2525 = vld [vmem:[#allocation8 + $0x18] sm:$0xff]
    %v2526 = vld [vmem:[#allocation8 + $0x20] sm:$0xff]
    %v2527 = vld [vmem:[#allocation8 + $0x28] sm:$0xff]
    %v2528 = vld [vmem:[#allocation8 + $0x30] sm:$0xff]
    %v2529 = vld [vmem:[#allocation8 + $0x38] sm:$0xff]
    %v2530 = vld [vmem:[#allocation8 + $0x40] sm:$0xff]
    %v2531 = vld [vmem:[#allocation8 + $0x48] sm:$0xff]
    %v2532 = vld [vmem:[#allocation8 + $0x50] sm:$0xff]
    %v2533 = vld [vmem:[#allocation8 + $0x58] sm:$0xff]
    %v2534 = vld [vmem:[#allocation8 + $0x60] sm:$0xff]
    %v2535 = vld [vmem:[#allocation8 + $0x68] sm:$0xff]
    %v2536 = vld [vmem:[#allocation8 + $0x70] sm:$0xff]
    %v2537 = vld [vmem:[#allocation8 + $0x78] sm:$0xff]
    %v2538 = vld [vmem:[#allocation8 + $0x80] sm:$0xff]
    %v2539 = vld [vmem:[#allocation8 + $0x88] sm:$0xff]
    %v2540 = vld [vmem:[#allocation8 + $0x90] sm:$0xff]
    %v2541 = vld [vmem:[#allocation8 + $0x98] sm:$0xff]
    %v2542 = vld [vmem:[#allocation8 + $0xa0] sm:$0xff]
    %v2543 = vld [vmem:[#allocation8 + $0xa8] sm:$0xff]
    %v2544 = vld [vmem:[#allocation8 + $0xb0] sm:$0xff]
    %v2545 = vld [vmem:[#allocation8 + $0xb8] sm:$0xff]
    %v2546 = vld [vmem:[#allocation8 + $0xc0] sm:$0xff]
    %v2547 = vld [vmem:[#allocation8 + $0xc8] sm:$0xff]
    %v2548 = vld [vmem:[#allocation8 + $0xd0] sm:$0xff]
    %v2549 = vld [vmem:[#allocation8 + $0xd8] sm:$0xff]
    %v2550 = vld [vmem:[#allocation8 + $0xe0] sm:$0xff]
    %v2551 = vld [vmem:[#allocation8 + $0xe8] sm:$0xff]
    %v2552 = vld [vmem:[#allocation8 + $0xf0] sm:$0xff]
    %v2553 = vld [vmem:[#allocation8 + $0xf8] sm:$0xff]
    %v2554 = vld [vmem:[#allocation8 + $0x100] sm:$0xff]
    %v2555 = vld [vmem:[#allocation8 + $0x108] sm:$0xff]
    %v2556 = vld [vmem:[#allocation8 + $0x110] sm:$0xff]
    %v2557 = vld [vmem:[#allocation8 + $0x118] sm:$0xff]
    %v2558 = vld [vmem:[#allocation8 + $0x120] sm:$0xff]
    %v2559 = vld [vmem:[#allocation8 + $0x128] sm:$0xff]
    %v2560 = vld [vmem:[#allocation8 + $0x130] sm:$0xff]
    %v2561 = vld [vmem:[#allocation8 + $0x138] sm:$0xff]
    %v2562 = vld [vmem:[#allocation8 + $0x140] sm:$0xff]
    %v2563 = vld [vmem:[#allocation8 + $0x148] sm:$0xff]
    %v2564 = vld [vmem:[#allocation8 + $0x150] sm:$0xff]
    %v2565 = vld [vmem:[#allocation8 + $0x158] sm:$0xff]
    %v2566 = vld [vmem:[#allocation8 + $0x160] sm:$0xff]
    %v2567 = vld [vmem:[#allocation8 + $0x168] sm:$0xff]
    %v2568 = vld [vmem:[#allocation8 + $0x170] sm:$0xff]
    %v2569 = vld [vmem:[#allocation8 + $0x178] sm:$0xff]
    %v2570 = vld [vmem:[#allocation8 + $0x180] sm:$0xff]
    %v2571 = vld [vmem:[#allocation8 + $0x188] sm:$0xff]
    %v2572 = vld [vmem:[#allocation8 + $0x190] sm:$0xff]
    %v2573 = vld [vmem:[#allocation8 + $0x198] sm:$0xff]
    %v2574 = vld [vmem:[#allocation8 + $0x1a0] sm:$0xff]
    %v2575 = vld [vmem:[#allocation8 + $0x1a8] sm:$0xff]
    %v2576 = vld [vmem:[#allocation8 + $0x1b0] sm:$0xff]
    %v2577 = vld [vmem:[#allocation8 + $0x1b8] sm:$0xff]
    %v2578 = vld [vmem:[#allocation8 + $0x1c0] sm:$0xff]
    %v2579 = vld [vmem:[#allocation8 + $0x1c8] sm:$0xff]
    %v2580 = vld [vmem:[#allocation8 + $0x1d0] sm:$0xff]
    %v2581 = vld [vmem:[#allocation8 + $0x1d8] sm:$0xff]
    %v2582 = vld [vmem:[#allocation8 + $0x1e0] sm:$0xff]
    %v2583 = vld [vmem:[#allocation8 + $0x1e8] sm:$0xff]
    %v2584 = vld [vmem:[#allocation8 + $0x1f0] sm:$0xff]
    %v2585 = vld [vmem:[#allocation8 + $0x1f8] sm:$0xff]
    %v2586 = vld [vmem:[#allocation8 + $0x200] sm:$0xff]
    %v2587 = vld [vmem:[#allocation8 + $0x208] sm:$0xff]
    %v2588 = vld [vmem:[#allocation8 + $0x210] sm:$0xff]
    %v2589 = vld [vmem:[#allocation8 + $0x218] sm:$0xff]
    %v2590 = vld [vmem:[#allocation8 + $0x220] sm:$0xff]
    %v2591 = vld [vmem:[#allocation8 + $0x228] sm:$0xff]
    %v2592 = vld [vmem:[#allocation8 + $0x230] sm:$0xff]
    %v2593 = vld [vmem:[#allocation8 + $0x238] sm:$0xff]
    %v2594 = vld [vmem:[#allocation8 + $0x240] sm:$0xff]
    %v2595 = vld [vmem:[#allocation8 + $0x248] sm:$0xff]
    %v2596 = vld [vmem:[#allocation8 + $0x250] sm:$0xff]
    %v2597 = vld [vmem:[#allocation8 + $0x258] sm:$0xff]
    %v2598 = vld [vmem:[#allocation8 + $0x260] sm:$0xff]
    %v2599 = vld [vmem:[#allocation8 + $0x268] sm:$0xff]
    %v2600 = vld [vmem:[#allocation8 + $0x270] sm:$0xff]
    %v2601 = vld [vmem:[#allocation8 + $0x278] sm:$0xff]
    %v2602 = vld [vmem:[#allocation8 + $0x280] sm:$0xff]
    %v2603 = vld [vmem:[#allocation8 + $0x288] sm:$0xff]
    %v2604 = vld [vmem:[#allocation8 + $0x290] sm:$0xff]
    %v2605 = vld [vmem:[#allocation8 + $0x298] sm:$0xff]
    %v2606 = vld [vmem:[#allocation8 + $0x2a0] sm:$0xff]
    %v2607 = vld [vmem:[#allocation8 + $0x2a8] sm:$0xff]
    %v2608 = vld [vmem:[#allocation8 + $0x2b0] sm:$0xff]
    %v2609 = vld [vmem:[#allocation8 + $0x2b8] sm:$0xff]
    %v2610 = vld [vmem:[#allocation8 + $0x2c0] sm:$0xff]
    %v2611 = vld [vmem:[#allocation8 + $0x2c8] sm:$0xff]
    %v2612 = vld [vmem:[#allocation8 + $0x2d0] sm:$0xff]
    %v2613 = vld [vmem:[#allocation8 + $0x2d8] sm:$0xff]
    %v2614 = vld [vmem:[#allocation8 + $0x2e0] sm:$0xff]
    %v2615 = vld [vmem:[#allocation8 + $0x2e8] sm:$0xff]
    %v2616 = vld [vmem:[#allocation8 + $0x2f0] sm:$0xff]
    %v2617 = vld [vmem:[#allocation8 + $0x2f8] sm:$0xff]
    %v2618 = vld [vmem:[#allocation8 + $0x300] sm:$0xff]
    %v2619 = vld [vmem:[#allocation8 + $0x308] sm:$0xff]
    %v2620 = vld [vmem:[#allocation8 + $0x310] sm:$0xff]
    %v2621 = vld [vmem:[#allocation8 + $0x318] sm:$0xff]
    %v2622 = vld [vmem:[#allocation8 + $0x320] sm:$0xff]
    %v2623 = vld [vmem:[#allocation8 + $0x328] sm:$0xff]
    %v2624 = vld [vmem:[#allocation8 + $0x330] sm:$0xff]
    %v2625 = vld [vmem:[#allocation8 + $0x338] sm:$0xff]
    %v2626 = vld [vmem:[#allocation8 + $0x340] sm:$0xff]
    %v2627 = vld [vmem:[#allocation8 + $0x348] sm:$0xff]
    %v2628 = vld [vmem:[#allocation8 + $0x350] sm:$0xff]
    %v2629 = vld [vmem:[#allocation8 + $0x358] sm:$0xff]
    %v2630 = vld [vmem:[#allocation8 + $0x360] sm:$0xff]
    %v2631 = vld [vmem:[#allocation8 + $0x368] sm:$0xff]
    %v2632 = vld [vmem:[#allocation8 + $0x370] sm:$0xff]
    %v2633 = vld [vmem:[#allocation8 + $0x378] sm:$0xff]
    %v2634 = vld [vmem:[#allocation8 + $0x380] sm:$0xff]
    %v2635 = vld [vmem:[#allocation8 + $0x388] sm:$0xff]
    %v2636 = vld [vmem:[#allocation8 + $0x390] sm:$0xff]
    %v2637 = vld [vmem:[#allocation8 + $0x398] sm:$0xff]
    %v2638 = vld [vmem:[#allocation8 + $0x3a0] sm:$0xff]
    %v2639 = vld [vmem:[#allocation8 + $0x3a8] sm:$0xff]
    %v2640 = vld [vmem:[#allocation8 + $0x3b0] sm:$0xff]
    %v2641 = vld [vmem:[#allocation8 + $0x3b8] sm:$0xff]
    %v2642 = vld [vmem:[#allocation8 + $0x3c0] sm:$0xff]
    %v2643 = vld [vmem:[#allocation8 + $0x3c8] sm:$0xff]
    %v2644 = vld [vmem:[#allocation8 + $0x3d0] sm:$0xff]
    %v2645 = vld [vmem:[#allocation8 + $0x3d8] sm:$0xff]
    %v2646 = vld [vmem:[#allocation8 + $0x3e0] sm:$0xff]
    %v2647 = vld [vmem:[#allocation8 + $0x3e8] sm:$0xff]
    %v2648 = vld [vmem:[#allocation8 + $0x3f0] sm:$0xff]
    %v2649 = vld [vmem:[#allocation8 + $0x3f8] sm:$0xff]
    %v2650 = vld [vmem:[#allocation8 + $0x400] sm:$0xff]
    %v2651 = vld [vmem:[#allocation8 + $0x408] sm:$0xff]
    %v2652 = vld [vmem:[#allocation8 + $0x410] sm:$0xff]
    %v2653 = vld [vmem:[#allocation8 + $0x418] sm:$0xff]
    %v2654 = vld [vmem:[#allocation8 + $0x420] sm:$0xff]
    %v2655 = vld [vmem:[#allocation8 + $0x428] sm:$0xff]
    %v2656 = vld [vmem:[#allocation8 + $0x430] sm:$0xff]
    %v2657 = vld [vmem:[#allocation8 + $0x438] sm:$0xff]
    %v2658 = vld [vmem:[#allocation8 + $0x440] sm:$0xff]
    %v2659 = vld [vmem:[#allocation8 + $0x448] sm:$0xff]
    %v2660 = vld [vmem:[#allocation8 + $0x450] sm:$0xff]
    %v2661 = vld [vmem:[#allocation8 + $0x458] sm:$0xff]
    %v2662 = vld [vmem:[#allocation8 + $0x460] sm:$0xff]
    %v2663 = vld [vmem:[#allocation8 + $0x468] sm:$0xff]
    %v2664 = vld [vmem:[#allocation8 + $0x470] sm:$0xff]
    %v2665 = vld [vmem:[#allocation8 + $0x478] sm:$0xff]
    %v2666 = vld [vmem:[#allocation8 + $0x480] sm:$0xff]
    %v2667 = vld [vmem:[#allocation8 + $0x488] sm:$0xff]
    %v2668 = vld [vmem:[#allocation8 + $0x490] sm:$0xff]
    %v2669 = vld [vmem:[#allocation8 + $0x498] sm:$0xff]
    %v2670 = vld [vmem:[#allocation8 + $0x4a0] sm:$0xff]
    %v2671 = vld [vmem:[#allocation8 + $0x4a8] sm:$0xff]
    %v2672 = vld [vmem:[#allocation8 + $0x4b0] sm:$0xff]
    %v2673 = vld [vmem:[#allocation8 + $0x4b8] sm:$0xff]
    %v2674 = vld [vmem:[#allocation8 + $0x4c0] sm:$0xff]
    %v2675 = vld [vmem:[#allocation8 + $0x4c8] sm:$0xff]
    %v2676 = vld [vmem:[#allocation8 + $0x4d0] sm:$0xff]
    %v2677 = vld [vmem:[#allocation8 + $0x4d8] sm:$0xff]
    %v2678 = vld [vmem:[#allocation8 + $0x4e0] sm:$0xff]
    %v2679 = vld [vmem:[#allocation8 + $0x4e8] sm:$0xff]
    %v2680 = vld [vmem:[#allocation8 + $0x4f0] sm:$0xff]
    %v2681 = vld [vmem:[#allocation8 + $0x4f8] sm:$0xff]
    %v2682 = vld [vmem:[#allocation8 + $0x500] sm:$0xff]
    %v2683 = vld [vmem:[#allocation8 + $0x508] sm:$0xff]
    %v2684 = vld [vmem:[#allocation8 + $0x510] sm:$0xff]
    %v2685 = vld [vmem:[#allocation8 + $0x518] sm:$0xff]
    %v2686 = vld [vmem:[#allocation8 + $0x520] sm:$0xff]
    %v2687 = vld [vmem:[#allocation8 + $0x528] sm:$0xff]
    %v2688 = vld [vmem:[#allocation8 + $0x530] sm:$0xff]
    %v2689 = vld [vmem:[#allocation8 + $0x538] sm:$0xff]
    %v2690 = vld [vmem:[#allocation8 + $0x540] sm:$0xff]
    %v2691 = vld [vmem:[#allocation8 + $0x548] sm:$0xff]
    %v2692 = vld [vmem:[#allocation8 + $0x550] sm:$0xff]
    %v2693 = vld [vmem:[#allocation8 + $0x558] sm:$0xff]
    %v2694 = vld [vmem:[#allocation8 + $0x560] sm:$0xff]
    %v2695 = vld [vmem:[#allocation8 + $0x568] sm:$0xff]
    %v2696 = vld [vmem:[#allocation8 + $0x570] sm:$0xff]
    %v2697 = vld [vmem:[#allocation8 + $0x578] sm:$0xff]
    %v2698 = vld [vmem:[#allocation8 + $0x580] sm:$0xff]
    %v2699 = vld [vmem:[#allocation8 + $0x588] sm:$0xff]
    %v2700 = vld [vmem:[#allocation8 + $0x590] sm:$0xff]
    %v2701 = vld [vmem:[#allocation8 + $0x598] sm:$0xff]
    %v2702 = vld [vmem:[#allocation8 + $0x5a0] sm:$0xff]
    %v2703 = vld [vmem:[#allocation8 + $0x5a8] sm:$0xff]
    %v2704 = vld [vmem:[#allocation8 + $0x5b0] sm:$0xff]
    %v2705 = vld [vmem:[#allocation8 + $0x5b8] sm:$0xff]
    %v2706 = vld [vmem:[#allocation8 + $0x5c0] sm:$0xff]
    %v2707 = vld [vmem:[#allocation8 + $0x5c8] sm:$0xff]
    %v2708 = vld [vmem:[#allocation8 + $0x5d0] sm:$0xff]
    %v2709 = vld [vmem:[#allocation8 + $0x5d8] sm:$0xff]
    %v2710 = vld [vmem:[#allocation8 + $0x5e0] sm:$0xff]
    %v2711 = vld [vmem:[#allocation8 + $0x5e8] sm:$0xff]
    %v2712 = vld [vmem:[#allocation8 + $0x5f0] sm:$0xff]
    %v2713 = vld [vmem:[#allocation8 + $0x5f8] sm:$0xff]
    %v2714 = vld [vmem:[#allocation8 + $0x600] sm:$0xff]
    %v2715 = vld [vmem:[#allocation8 + $0x608] sm:$0xff]
    %v2716 = vld [vmem:[#allocation8 + $0x610] sm:$0xff]
    %v2717 = vld [vmem:[#allocation8 + $0x618] sm:$0xff]
    %v2718 = vld [vmem:[#allocation8 + $0x620] sm:$0xff]
    %v2719 = vld [vmem:[#allocation8 + $0x628] sm:$0xff]
    %v2720 = vld [vmem:[#allocation8 + $0x630] sm:$0xff]
    %v2721 = vld [vmem:[#allocation8 + $0x638] sm:$0xff]
    %v2722 = vld [vmem:[#allocation8 + $0x640] sm:$0xff]
    %v2723 = vld [vmem:[#allocation8 + $0x648] sm:$0xff]
    %v2724 = vld [vmem:[#allocation8 + $0x650] sm:$0xff]
    %v2725 = vld [vmem:[#allocation8 + $0x658] sm:$0xff]
    %v2726 = vld [vmem:[#allocation8 + $0x660] sm:$0xff]
    %v2727 = vld [vmem:[#allocation8 + $0x668] sm:$0xff]
    %v2728 = vld [vmem:[#allocation8 + $0x670] sm:$0xff]
    %v2729 = vld [vmem:[#allocation8 + $0x678] sm:$0xff]
    %v2730 = vld [vmem:[#allocation8 + $0x680] sm:$0xff]
    %v2731 = vld [vmem:[#allocation8 + $0x688] sm:$0xff]
    %v2732 = vld [vmem:[#allocation8 + $0x690] sm:$0xff]
    %v2733 = vld [vmem:[#allocation8 + $0x698] sm:$0xff]
    %v2734 = vld [vmem:[#allocation8 + $0x6a0] sm:$0xff]
    %v2735 = vld [vmem:[#allocation8 + $0x6a8] sm:$0xff]
    %v2736 = vld [vmem:[#allocation8 + $0x6b0] sm:$0xff]
    %v2737 = vld [vmem:[#allocation8 + $0x6b8] sm:$0xff]
    %v2738 = vld [vmem:[#allocation8 + $0x6c0] sm:$0xff]
    %v2739 = vld [vmem:[#allocation8 + $0x6c8] sm:$0xff]
    %v2740 = vld [vmem:[#allocation8 + $0x6d0] sm:$0xff]
    %v2741 = vld [vmem:[#allocation8 + $0x6d8] sm:$0xff]
    %v2742 = vld [vmem:[#allocation8 + $0x6e0] sm:$0xff]
    %v2743 = vld [vmem:[#allocation8 + $0x6e8] sm:$0xff]
    %v2744 = vld [vmem:[#allocation8 + $0x6f0] sm:$0xff]
    %v2745 = vld [vmem:[#allocation8 + $0x6f8] sm:$0xff]
    %v2746 = vld [vmem:[#allocation8 + $0x700] sm:$0xff]
    %v2747 = vld [vmem:[#allocation8 + $0x708] sm:$0xff]
    %v2748 = vld [vmem:[#allocation8 + $0x710] sm:$0xff]
    %v2749 = vld [vmem:[#allocation8 + $0x718] sm:$0xff]
    %v2750 = vld [vmem:[#allocation8 + $0x720] sm:$0xff]
    %v2751 = vld [vmem:[#allocation8 + $0x728] sm:$0xff]
    %v2752 = vld [vmem:[#allocation8 + $0x730] sm:$0xff]
    %v2753 = vld [vmem:[#allocation8 + $0x738] sm:$0xff]
    %v2754 = vld [vmem:[#allocation8 + $0x740] sm:$0xff]
    %v2755 = vld [vmem:[#allocation8 + $0x748] sm:$0xff]
    %v2756 = vld [vmem:[#allocation8 + $0x750] sm:$0xff]
    %v2757 = vld [vmem:[#allocation8 + $0x758] sm:$0xff]
    %v2758 = vld [vmem:[#allocation8 + $0x760] sm:$0xff]
    %v2759 = vld [vmem:[#allocation8 + $0x768] sm:$0xff]
    %v2760 = vld [vmem:[#allocation8 + $0x770] sm:$0xff]
    %v2761 = vld [vmem:[#allocation8 + $0x778] sm:$0xff]
    %v2762 = vld [vmem:[#allocation8 + $0x780] sm:$0xff]
    %v2763 = vld [vmem:[#allocation8 + $0x788] sm:$0xff]
    %v2764 = vld [vmem:[#allocation8 + $0x790] sm:$0xff]
    %v2765 = vld [vmem:[#allocation8 + $0x798] sm:$0xff]
    %v2766 = vld [vmem:[#allocation8 + $0x7a0] sm:$0xff]
    %v2767 = vld [vmem:[#allocation8 + $0x7a8] sm:$0xff]
    %v2768 = vld [vmem:[#allocation8 + $0x7b0] sm:$0xff]
    %v2769 = vld [vmem:[#allocation8 + $0x7b8] sm:$0xff]
    %v2770 = vld [vmem:[#allocation8 + $0x7c0] sm:$0xff]
    %v2771 = vld [vmem:[#allocation8 + $0x7c8] sm:$0xff]
    %v2772 = vld [vmem:[#allocation8 + $0x7d0] sm:$0xff]
    %v2773 = vld [vmem:[#allocation8 + $0x7d8] sm:$0xff]
    %v2774 = vld [vmem:[#allocation8 + $0x7e0] sm:$0xff]
    %v2775 = vld [vmem:[#allocation8 + $0x7e8] sm:$0xff]
    %v2776 = vld [vmem:[#allocation8 + $0x7f0] sm:$0xff]
    %v2777 = vld [vmem:[#allocation8 + $0x7f8] sm:$0xff]
    %v2778 = vld [vmem:[#allocation10] sm:$0xff]
    %v2779 = vld [vmem:[#allocation10 + $0x8] sm:$0xff]
    %v2780 = vld [vmem:[#allocation10 + $0x10] sm:$0xff]
    %v2781 = vld [vmem:[#allocation10 + $0x18] sm:$0xff]
    %v2782 = vld [vmem:[#allocation10 + $0x20] sm:$0xff]
    %v2783 = vld [vmem:[#allocation10 + $0x28] sm:$0xff]
    %v2784 = vld [vmem:[#allocation10 + $0x30] sm:$0xff]
    %v2785 = vld [vmem:[#allocation10 + $0x38] sm:$0xff]
    %v2786 = vld [vmem:[#allocation10 + $0x40] sm:$0xff]
    %v2787 = vld [vmem:[#allocation10 + $0x48] sm:$0xff]
    %v2788 = vld [vmem:[#allocation10 + $0x50] sm:$0xff]
    %v2789 = vld [vmem:[#allocation10 + $0x58] sm:$0xff]
    %v2790 = vld [vmem:[#allocation10 + $0x60] sm:$0xff]
    %v2791 = vld [vmem:[#allocation10 + $0x68] sm:$0xff]
    %v2792 = vld [vmem:[#allocation10 + $0x70] sm:$0xff]
    %v2793 = vld [vmem:[#allocation10 + $0x78] sm:$0xff]
    %v2794 = vld [vmem:[#allocation10 + $0x80] sm:$0xff]
    %v2795 = vld [vmem:[#allocation10 + $0x88] sm:$0xff]
    %v2796 = vld [vmem:[#allocation10 + $0x90] sm:$0xff]
    %v2797 = vld [vmem:[#allocation10 + $0x98] sm:$0xff]
    %v2798 = vld [vmem:[#allocation10 + $0xa0] sm:$0xff]
    %v2799 = vld [vmem:[#allocation10 + $0xa8] sm:$0xff]
    %v2800 = vld [vmem:[#allocation10 + $0xb0] sm:$0xff]
    %v2801 = vld [vmem:[#allocation10 + $0xb8] sm:$0xff]
    %v2802 = vld [vmem:[#allocation10 + $0xc0] sm:$0xff]
    %v2803 = vld [vmem:[#allocation10 + $0xc8] sm:$0xff]
    %v2804 = vld [vmem:[#allocation10 + $0xd0] sm:$0xff]
    %v2805 = vld [vmem:[#allocation10 + $0xd8] sm:$0xff]
    %v2806 = vld [vmem:[#allocation10 + $0xe0] sm:$0xff]
    %v2807 = vld [vmem:[#allocation10 + $0xe8] sm:$0xff]
    %v2808 = vld [vmem:[#allocation10 + $0xf0] sm:$0xff]
    %v2809 = vld [vmem:[#allocation10 + $0xf8] sm:$0xff]
    %v2810 = vld [vmem:[#allocation10 + $0x100] sm:$0xff]
    %v2811 = vld [vmem:[#allocation10 + $0x108] sm:$0xff]
    %v2812 = vld [vmem:[#allocation10 + $0x110] sm:$0xff]
    %v2813 = vld [vmem:[#allocation10 + $0x118] sm:$0xff]
    %v2814 = vld [vmem:[#allocation10 + $0x120] sm:$0xff]
    %v2815 = vld [vmem:[#allocation10 + $0x128] sm:$0xff]
    %v2816 = vld [vmem:[#allocation10 + $0x130] sm:$0xff]
    %v2817 = vld [vmem:[#allocation10 + $0x138] sm:$0xff]
    %v2818 = vld [vmem:[#allocation10 + $0x140] sm:$0xff]
    %v2819 = vld [vmem:[#allocation10 + $0x148] sm:$0xff]
    %v2820 = vld [vmem:[#allocation10 + $0x150] sm:$0xff]
    %v2821 = vld [vmem:[#allocation10 + $0x158] sm:$0xff]
    %v2822 = vld [vmem:[#allocation10 + $0x160] sm:$0xff]
    %v2823 = vld [vmem:[#allocation10 + $0x168] sm:$0xff]
    %v2824 = vld [vmem:[#allocation10 + $0x170] sm:$0xff]
    %v2825 = vld [vmem:[#allocation10 + $0x178] sm:$0xff]
    %v2826 = vld [vmem:[#allocation10 + $0x180] sm:$0xff]
    %v2827 = vld [vmem:[#allocation10 + $0x188] sm:$0xff]
    %v2828 = vld [vmem:[#allocation10 + $0x190] sm:$0xff]
    %v2829 = vld [vmem:[#allocation10 + $0x198] sm:$0xff]
    %v2830 = vld [vmem:[#allocation10 + $0x1a0] sm:$0xff]
    %v2831 = vld [vmem:[#allocation10 + $0x1a8] sm:$0xff]
    %v2832 = vld [vmem:[#allocation10 + $0x1b0] sm:$0xff]
    %v2833 = vld [vmem:[#allocation10 + $0x1b8] sm:$0xff]
    %v2834 = vld [vmem:[#allocation10 + $0x1c0] sm:$0xff]
    %v2835 = vld [vmem:[#allocation10 + $0x1c8] sm:$0xff]
    %v2836 = vld [vmem:[#allocation10 + $0x1d0] sm:$0xff]
    %v2837 = vld [vmem:[#allocation10 + $0x1d8] sm:$0xff]
    %v2838 = vld [vmem:[#allocation10 + $0x1e0] sm:$0xff]
    %v2839 = vld [vmem:[#allocation10 + $0x1e8] sm:$0xff]
    %v2840 = vld [vmem:[#allocation10 + $0x1f0] sm:$0xff]
    %v2841 = vld [vmem:[#allocation10 + $0x1f8] sm:$0xff]
    %v2842 = vld [vmem:[#allocation10 + $0x200] sm:$0xff]
    %v2843 = vld [vmem:[#allocation10 + $0x208] sm:$0xff]
    %v2844 = vld [vmem:[#allocation10 + $0x210] sm:$0xff]
    %v2845 = vld [vmem:[#allocation10 + $0x218] sm:$0xff]
    %v2846 = vld [vmem:[#allocation10 + $0x220] sm:$0xff]
    %v2847 = vld [vmem:[#allocation10 + $0x228] sm:$0xff]
    %v2848 = vld [vmem:[#allocation10 + $0x230] sm:$0xff]
    %v2849 = vld [vmem:[#allocation10 + $0x238] sm:$0xff]
    %v2850 = vld [vmem:[#allocation10 + $0x240] sm:$0xff]
    %v2851 = vld [vmem:[#allocation10 + $0x248] sm:$0xff]
    %v2852 = vld [vmem:[#allocation10 + $0x250] sm:$0xff]
    %v2853 = vld [vmem:[#allocation10 + $0x258] sm:$0xff]
    %v2854 = vld [vmem:[#allocation10 + $0x260] sm:$0xff]
    %v2855 = vld [vmem:[#allocation10 + $0x268] sm:$0xff]
    %v2856 = vld [vmem:[#allocation10 + $0x270] sm:$0xff]
    %v2857 = vld [vmem:[#allocation10 + $0x278] sm:$0xff]
    %v2858 = vld [vmem:[#allocation10 + $0x280] sm:$0xff]
    %v2859 = vld [vmem:[#allocation10 + $0x288] sm:$0xff]
    %v2860 = vld [vmem:[#allocation10 + $0x290] sm:$0xff]
    %v2861 = vld [vmem:[#allocation10 + $0x298] sm:$0xff]
    %v2862 = vld [vmem:[#allocation10 + $0x2a0] sm:$0xff]
    %v2863 = vld [vmem:[#allocation10 + $0x2a8] sm:$0xff]
    %v2864 = vld [vmem:[#allocation10 + $0x2b0] sm:$0xff]
    %v2865 = vld [vmem:[#allocation10 + $0x2b8] sm:$0xff]
    %v2866 = vld [vmem:[#allocation10 + $0x2c0] sm:$0xff]
    %v2867 = vld [vmem:[#allocation10 + $0x2c8] sm:$0xff]
    %v2868 = vld [vmem:[#allocation10 + $0x2d0] sm:$0xff]
    %v2869 = vld [vmem:[#allocation10 + $0x2d8] sm:$0xff]
    %v2870 = vld [vmem:[#allocation10 + $0x2e0] sm:$0xff]
    %v2871 = vld [vmem:[#allocation10 + $0x2e8] sm:$0xff]
    %v2872 = vld [vmem:[#allocation10 + $0x2f0] sm:$0xff]
    %v2873 = vld [vmem:[#allocation10 + $0x2f8] sm:$0xff]
    %v2874 = vld [vmem:[#allocation10 + $0x300] sm:$0xff]
    %v2875 = vld [vmem:[#allocation10 + $0x308] sm:$0xff]
    %v2876 = vld [vmem:[#allocation10 + $0x310] sm:$0xff]
    %v2877 = vld [vmem:[#allocation10 + $0x318] sm:$0xff]
    %v2878 = vld [vmem:[#allocation10 + $0x320] sm:$0xff]
    %v2879 = vld [vmem:[#allocation10 + $0x328] sm:$0xff]
    %v2880 = vld [vmem:[#allocation10 + $0x330] sm:$0xff]
    %v2881 = vld [vmem:[#allocation10 + $0x338] sm:$0xff]
    %v2882 = vld [vmem:[#allocation10 + $0x340] sm:$0xff]
    %v2883 = vld [vmem:[#allocation10 + $0x348] sm:$0xff]
    %v2884 = vld [vmem:[#allocation10 + $0x350] sm:$0xff]
    %v2885 = vld [vmem:[#allocation10 + $0x358] sm:$0xff]
    %v2886 = vld [vmem:[#allocation10 + $0x360] sm:$0xff]
    %v2887 = vld [vmem:[#allocation10 + $0x368] sm:$0xff]
    %v2888 = vld [vmem:[#allocation10 + $0x370] sm:$0xff]
    %v2889 = vld [vmem:[#allocation10 + $0x378] sm:$0xff]
    %v2890 = vld [vmem:[#allocation10 + $0x380] sm:$0xff]
    %v2891 = vld [vmem:[#allocation10 + $0x388] sm:$0xff]
    %v2892 = vld [vmem:[#allocation10 + $0x390] sm:$0xff]
    %v2893 = vld [vmem:[#allocation10 + $0x398] sm:$0xff]
    %v2894 = vld [vmem:[#allocation10 + $0x3a0] sm:$0xff]
    %v2895 = vld [vmem:[#allocation10 + $0x3a8] sm:$0xff]
    %v2896 = vld [vmem:[#allocation10 + $0x3b0] sm:$0xff]
    %v2897 = vld [vmem:[#allocation10 + $0x3b8] sm:$0xff]
    %v2898 = vld [vmem:[#allocation10 + $0x3c0] sm:$0xff]
    %v2899 = vld [vmem:[#allocation10 + $0x3c8] sm:$0xff]
    %v2900 = vld [vmem:[#allocation10 + $0x3d0] sm:$0xff]
    %v2901 = vld [vmem:[#allocation10 + $0x3d8] sm:$0xff]
    %v2902 = vld [vmem:[#allocation10 + $0x3e0] sm:$0xff]
    %v2903 = vld [vmem:[#allocation10 + $0x3e8] sm:$0xff]
    %v2904 = vld [vmem:[#allocation10 + $0x3f0] sm:$0xff]
    %v2905 = vld [vmem:[#allocation10 + $0x3f8] sm:$0xff]
    %v2906 = vld [vmem:[#allocation10 + $0x400] sm:$0xff]
    %v2907 = vld [vmem:[#allocation10 + $0x408] sm:$0xff]
    %v2908 = vld [vmem:[#allocation10 + $0x410] sm:$0xff]
    %v2909 = vld [vmem:[#allocation10 + $0x418] sm:$0xff]
    %v2910 = vld [vmem:[#allocation10 + $0x420] sm:$0xff]
    %v2911 = vld [vmem:[#allocation10 + $0x428] sm:$0xff]
    %v2912 = vld [vmem:[#allocation10 + $0x430] sm:$0xff]
    %v2913 = vld [vmem:[#allocation10 + $0x438] sm:$0xff]
    %v2914 = vld [vmem:[#allocation10 + $0x440] sm:$0xff]
    %v2915 = vld [vmem:[#allocation10 + $0x448] sm:$0xff]
    %v2916 = vld [vmem:[#allocation10 + $0x450] sm:$0xff]
    %v2917 = vld [vmem:[#allocation10 + $0x458] sm:$0xff]
    %v2918 = vld [vmem:[#allocation10 + $0x460] sm:$0xff]
    %v2919 = vld [vmem:[#allocation10 + $0x468] sm:$0xff]
    %v2920 = vld [vmem:[#allocation10 + $0x470] sm:$0xff]
    %v2921 = vld [vmem:[#allocation10 + $0x478] sm:$0xff]
    %v2922 = vld [vmem:[#allocation10 + $0x480] sm:$0xff]
    %v2923 = vld [vmem:[#allocation10 + $0x488] sm:$0xff]
    %v2924 = vld [vmem:[#allocation10 + $0x490] sm:$0xff]
    %v2925 = vld [vmem:[#allocation10 + $0x498] sm:$0xff]
    %v2926 = vld [vmem:[#allocation10 + $0x4a0] sm:$0xff]
    %v2927 = vld [vmem:[#allocation10 + $0x4a8] sm:$0xff]
    %v2928 = vld [vmem:[#allocation10 + $0x4b0] sm:$0xff]
    %v2929 = vld [vmem:[#allocation10 + $0x4b8] sm:$0xff]
    %v2930 = vld [vmem:[#allocation10 + $0x4c0] sm:$0xff]
    %v2931 = vld [vmem:[#allocation10 + $0x4c8] sm:$0xff]
    %v2932 = vld [vmem:[#allocation10 + $0x4d0] sm:$0xff]
    %v2933 = vld [vmem:[#allocation10 + $0x4d8] sm:$0xff]
    %v2934 = vld [vmem:[#allocation10 + $0x4e0] sm:$0xff]
    %v2935 = vld [vmem:[#allocation10 + $0x4e8] sm:$0xff]
    %v2936 = vld [vmem:[#allocation10 + $0x4f0] sm:$0xff]
    %v2937 = vld [vmem:[#allocation10 + $0x4f8] sm:$0xff]
    %v2938 = vld [vmem:[#allocation10 + $0x500] sm:$0xff]
    %v2939 = vld [vmem:[#allocation10 + $0x508] sm:$0xff]
    %v2940 = vld [vmem:[#allocation10 + $0x510] sm:$0xff]
    %v2941 = vld [vmem:[#allocation10 + $0x518] sm:$0xff]
    %v2942 = vld [vmem:[#allocation10 + $0x520] sm:$0xff]
    %v2943 = vld [vmem:[#allocation10 + $0x528] sm:$0xff]
    %v2944 = vld [vmem:[#allocation10 + $0x530] sm:$0xff]
    %v2945 = vld [vmem:[#allocation10 + $0x538] sm:$0xff]
    %v2946 = vld [vmem:[#allocation10 + $0x540] sm:$0xff]
    %v2947 = vld [vmem:[#allocation10 + $0x548] sm:$0xff]
    %v2948 = vld [vmem:[#allocation10 + $0x550] sm:$0xff]
    %v2949 = vld [vmem:[#allocation10 + $0x558] sm:$0xff]
    %v2950 = vld [vmem:[#allocation10 + $0x560] sm:$0xff]
    %v2951 = vld [vmem:[#allocation10 + $0x568] sm:$0xff]
    %v2952 = vld [vmem:[#allocation10 + $0x570] sm:$0xff]
    %v2953 = vld [vmem:[#allocation10 + $0x578] sm:$0xff]
    %v2954 = vld [vmem:[#allocation10 + $0x580] sm:$0xff]
    %v2955 = vld [vmem:[#allocation10 + $0x588] sm:$0xff]
    %v2956 = vld [vmem:[#allocation10 + $0x590] sm:$0xff]
    %v2957 = vld [vmem:[#allocation10 + $0x598] sm:$0xff]
    %v2958 = vld [vmem:[#allocation10 + $0x5a0] sm:$0xff]
    %v2959 = vld [vmem:[#allocation10 + $0x5a8] sm:$0xff]
    %v2960 = vld [vmem:[#allocation10 + $0x5b0] sm:$0xff]
    %v2961 = vld [vmem:[#allocation10 + $0x5b8] sm:$0xff]
    %v2962 = vld [vmem:[#allocation10 + $0x5c0] sm:$0xff]
    %v2963 = vld [vmem:[#allocation10 + $0x5c8] sm:$0xff]
    %v2964 = vld [vmem:[#allocation10 + $0x5d0] sm:$0xff]
    %v2965 = vld [vmem:[#allocation10 + $0x5d8] sm:$0xff]
    %v2966 = vld [vmem:[#allocation10 + $0x5e0] sm:$0xff]
    %v2967 = vld [vmem:[#allocation10 + $0x5e8] sm:$0xff]
    %v2968 = vld [vmem:[#allocation10 + $0x5f0] sm:$0xff]
    %v2969 = vld [vmem:[#allocation10 + $0x5f8] sm:$0xff]
    %v2970 = vld [vmem:[#allocation10 + $0x600] sm:$0xff]
    %v2971 = vld [vmem:[#allocation10 + $0x608] sm:$0xff]
    %v2972 = vld [vmem:[#allocation10 + $0x610] sm:$0xff]
    %v2973 = vld [vmem:[#allocation10 + $0x618] sm:$0xff]
    %v2974 = vld [vmem:[#allocation10 + $0x620] sm:$0xff]
    %v2975 = vld [vmem:[#allocation10 + $0x628] sm:$0xff]
    %v2976 = vld [vmem:[#allocation10 + $0x630] sm:$0xff]
    %v2977 = vld [vmem:[#allocation10 + $0x638] sm:$0xff]
    %v2978 = vld [vmem:[#allocation10 + $0x640] sm:$0xff]
    %v2979 = vld [vmem:[#allocation10 + $0x648] sm:$0xff]
    %v2980 = vld [vmem:[#allocation10 + $0x650] sm:$0xff]
    %v2981 = vld [vmem:[#allocation10 + $0x658] sm:$0xff]
    %v2982 = vld [vmem:[#allocation10 + $0x660] sm:$0xff]
    %v2983 = vld [vmem:[#allocation10 + $0x668] sm:$0xff]
    %v2984 = vld [vmem:[#allocation10 + $0x670] sm:$0xff]
    %v2985 = vld [vmem:[#allocation10 + $0x678] sm:$0xff]
    %v2986 = vld [vmem:[#allocation10 + $0x680] sm:$0xff]
    %v2987 = vld [vmem:[#allocation10 + $0x688] sm:$0xff]
    %v2988 = vld [vmem:[#allocation10 + $0x690] sm:$0xff]
    %v2989 = vld [vmem:[#allocation10 + $0x698] sm:$0xff]
    %v2990 = vld [vmem:[#allocation10 + $0x6a0] sm:$0xff]
    %v2991 = vld [vmem:[#allocation10 + $0x6a8] sm:$0xff]
    %v2992 = vld [vmem:[#allocation10 + $0x6b0] sm:$0xff]
    %v2993 = vld [vmem:[#allocation10 + $0x6b8] sm:$0xff]
    %v2994 = vld [vmem:[#allocation10 + $0x6c0] sm:$0xff]
    %v2995 = vld [vmem:[#allocation10 + $0x6c8] sm:$0xff]
    %v2996 = vld [vmem:[#allocation10 + $0x6d0] sm:$0xff]
    %v2997 = vld [vmem:[#allocation10 + $0x6d8] sm:$0xff]
    %v2998 = vld [vmem:[#allocation10 + $0x6e0] sm:$0xff]
    %v2999 = vld [vmem:[#allocation10 + $0x6e8] sm:$0xff]
    %v3000 = vld [vmem:[#allocation10 + $0x6f0] sm:$0xff]
    %v3001 = vld [vmem:[#allocation10 + $0x6f8] sm:$0xff]
    %v3002 = vld [vmem:[#allocation10 + $0x700] sm:$0xff]
    %v3003 = vld [vmem:[#allocation10 + $0x708] sm:$0xff]
    %v3004 = vld [vmem:[#allocation10 + $0x710] sm:$0xff]
    %v3005 = vld [vmem:[#allocation10 + $0x718] sm:$0xff]
    %v3006 = vld [vmem:[#allocation10 + $0x720] sm:$0xff]
    %v3007 = vld [vmem:[#allocation10 + $0x728] sm:$0xff]
    %v3008 = vld [vmem:[#allocation10 + $0x730] sm:$0xff]
    %v3009 = vld [vmem:[#allocation10 + $0x738] sm:$0xff]
    %v3010 = vld [vmem:[#allocation10 + $0x740] sm:$0xff]
    %v3011 = vld [vmem:[#allocation10 + $0x748] sm:$0xff]
    %v3012 = vld [vmem:[#allocation10 + $0x750] sm:$0xff]
    %v3013 = vld [vmem:[#allocation10 + $0x758] sm:$0xff]
    %v3014 = vld [vmem:[#allocation10 + $0x760] sm:$0xff]
    %v3015 = vld [vmem:[#allocation10 + $0x768] sm:$0xff]
    %v3016 = vld [vmem:[#allocation10 + $0x770] sm:$0xff]
    %v3017 = vld [vmem:[#allocation10 + $0x778] sm:$0xff]
    %v3018 = vld [vmem:[#allocation10 + $0x780] sm:$0xff]
    %v3019 = vld [vmem:[#allocation10 + $0x788] sm:$0xff]
    %v3020 = vld [vmem:[#allocation10 + $0x790] sm:$0xff]
    %v3021 = vld [vmem:[#allocation10 + $0x798] sm:$0xff]
    %v3022 = vld [vmem:[#allocation10 + $0x7a0] sm:$0xff]
    %v3023 = vld [vmem:[#allocation10 + $0x7a8] sm:$0xff]
    %v3024 = vld [vmem:[#allocation10 + $0x7b0] sm:$0xff]
    %v3025 = vld [vmem:[#allocation10 + $0x7b8] sm:$0xff]
    %v3026 = vld [vmem:[#allocation10 + $0x7c0] sm:$0xff]
    %v3027 = vld [vmem:[#allocation10 + $0x7c8] sm:$0xff]
    %v3028 = vld [vmem:[#allocation10 + $0x7d0] sm:$0xff]
    %v3029 = vld [vmem:[#allocation10 + $0x7d8] sm:$0xff]
    %v3030 = vld [vmem:[#allocation10 + $0x7e0] sm:$0xff]
    %v3031 = vld [vmem:[#allocation10 + $0x7e8] sm:$0xff]
    %v3032 = vld [vmem:[#allocation10 + $0x7f0] sm:$0xff]
    %v3033 = vld [vmem:[#allocation10 + $0x7f8] sm:$0xff]
    %v3290 = vunpack.c.l.b16 %v2778
    %v3291 = vunpack.c.h.b16 %v2778
    %v3292 = vunpack.c.l.b16 %v2779
    %v3293 = vunpack.c.h.b16 %v2779
    %v3294 = vunpack.c.l.b16 %v2780
    %v3295 = vunpack.c.h.b16 %v2780
    %v3296 = vunpack.c.l.b16 %v2781
    %v3297 = vunpack.c.h.b16 %v2781
    %v3298 = vunpack.c.l.b16 %v2782
    %v3299 = vunpack.c.h.b16 %v2782
    %v3300 = vunpack.c.l.b16 %v2783
    %v3301 = vunpack.c.h.b16 %v2783
    %v3302 = vunpack.c.l.b16 %v2784
    %v3303 = vunpack.c.h.b16 %v2784
    %v3304 = vunpack.c.l.b16 %v2785
    %v3305 = vunpack.c.h.b16 %v2785
    %v3306 = vunpack.c.l.b16 %v2786
    %v3307 = vunpack.c.h.b16 %v2786
    %v3308 = vunpack.c.l.b16 %v2787
    %v3309 = vunpack.c.h.b16 %v2787
    %v3310 = vunpack.c.l.b16 %v2788
    %v3311 = vunpack.c.h.b16 %v2788
    %v3312 = vunpack.c.l.b16 %v2789
    %v3313 = vunpack.c.h.b16 %v2789
    %v3314 = vunpack.c.l.b16 %v2790
    %v3315 = vunpack.c.h.b16 %v2790
    %v3316 = vunpack.c.l.b16 %v2791
    %v3317 = vunpack.c.h.b16 %v2791
    %v3318 = vunpack.c.l.b16 %v2792
    %v3319 = vunpack.c.h.b16 %v2792
    %v3320 = vunpack.c.l.b16 %v2793
    %v3321 = vunpack.c.h.b16 %v2793
    %v3322 = vunpack.c.l.b16 %v2794
    %v3323 = vunpack.c.h.b16 %v2794
    %v3324 = vunpack.c.l.b16 %v2795
    %v3325 = vunpack.c.h.b16 %v2795
    %v3326 = vunpack.c.l.b16 %v2796
    %v3327 = vunpack.c.h.b16 %v2796
    %v3328 = vunpack.c.l.b16 %v2797
    %v3329 = vunpack.c.h.b16 %v2797
    %v3330 = vunpack.c.l.b16 %v2798
    %v3331 = vunpack.c.h.b16 %v2798
    %v3332 = vunpack.c.l.b16 %v2799
    %v3333 = vunpack.c.h.b16 %v2799
    %v3334 = vunpack.c.l.b16 %v2800
    %v3335 = vunpack.c.h.b16 %v2800
    %v3336 = vunpack.c.l.b16 %v2801
    %v3337 = vunpack.c.h.b16 %v2801
    %v3338 = vunpack.c.l.b16 %v2802
    %v3339 = vunpack.c.h.b16 %v2802
    %v3340 = vunpack.c.l.b16 %v2803
    %v3341 = vunpack.c.h.b16 %v2803
    %v3342 = vunpack.c.l.b16 %v2804
    %v3343 = vunpack.c.h.b16 %v2804
    %v3344 = vunpack.c.l.b16 %v2805
    %v3345 = vunpack.c.h.b16 %v2805
    %v3346 = vunpack.c.l.b16 %v2806
    %v3347 = vunpack.c.h.b16 %v2806
    %v3348 = vunpack.c.l.b16 %v2807
    %v3349 = vunpack.c.h.b16 %v2807
    %v3350 = vunpack.c.l.b16 %v2808
    %v3351 = vunpack.c.h.b16 %v2808
    %v3352 = vunpack.c.l.b16 %v2809
    %v3353 = vunpack.c.h.b16 %v2809
    %v3354 = vunpack.c.l.b16 %v2810
    %v3355 = vunpack.c.h.b16 %v2810
    %v3356 = vunpack.c.l.b16 %v2811
    %v3357 = vunpack.c.h.b16 %v2811
    %v3358 = vunpack.c.l.b16 %v2812
    %v3359 = vunpack.c.h.b16 %v2812
    %v3360 = vunpack.c.l.b16 %v2813
    %v3361 = vunpack.c.h.b16 %v2813
    %v3362 = vunpack.c.l.b16 %v2814
    %v3363 = vunpack.c.h.b16 %v2814
    %v3364 = vunpack.c.l.b16 %v2815
    %v3365 = vunpack.c.h.b16 %v2815
    %v3366 = vunpack.c.l.b16 %v2816
    %v3367 = vunpack.c.h.b16 %v2816
    %v3368 = vunpack.c.l.b16 %v2817
    %v3369 = vunpack.c.h.b16 %v2817
    %v3370 = vunpack.c.l.b16 %v2818
    %v3371 = vunpack.c.h.b16 %v2818
    %v3372 = vunpack.c.l.b16 %v2819
    %v3373 = vunpack.c.h.b16 %v2819
    %v3374 = vunpack.c.l.b16 %v2820
    %v3375 = vunpack.c.h.b16 %v2820
    %v3376 = vunpack.c.l.b16 %v2821
    %v3377 = vunpack.c.h.b16 %v2821
    %v3378 = vunpack.c.l.b16 %v2822
    %v3379 = vunpack.c.h.b16 %v2822
    %v3380 = vunpack.c.l.b16 %v2823
    %v3381 = vunpack.c.h.b16 %v2823
    %v3382 = vunpack.c.l.b16 %v2824
    %v3383 = vunpack.c.h.b16 %v2824
    %v3384 = vunpack.c.l.b16 %v2825
    %v3385 = vunpack.c.h.b16 %v2825
    %v3386 = vunpack.c.l.b16 %v2826
    %v3387 = vunpack.c.h.b16 %v2826
    %v3388 = vunpack.c.l.b16 %v2827
    %v3389 = vunpack.c.h.b16 %v2827
    %v3390 = vunpack.c.l.b16 %v2828
    %v3391 = vunpack.c.h.b16 %v2828
    %v3392 = vunpack.c.l.b16 %v2829
    %v3393 = vunpack.c.h.b16 %v2829
    %v3394 = vunpack.c.l.b16 %v2830
    %v3395 = vunpack.c.h.b16 %v2830
    %v3396 = vunpack.c.l.b16 %v2831
    %v3397 = vunpack.c.h.b16 %v2831
    %v3398 = vunpack.c.l.b16 %v2832
    %v3399 = vunpack.c.h.b16 %v2832
    %v3400 = vunpack.c.l.b16 %v2833
    %v3401 = vunpack.c.h.b16 %v2833
    %v3402 = vunpack.c.l.b16 %v2834
    %v3403 = vunpack.c.h.b16 %v2834
    %v3404 = vunpack.c.l.b16 %v2835
    %v3405 = vunpack.c.h.b16 %v2835
    %v3406 = vunpack.c.l.b16 %v2836
    %v3407 = vunpack.c.h.b16 %v2836
    %v3408 = vunpack.c.l.b16 %v2837
    %v3409 = vunpack.c.h.b16 %v2837
    %v3410 = vunpack.c.l.b16 %v2838
    %v3411 = vunpack.c.h.b16 %v2838
    %v3412 = vunpack.c.l.b16 %v2839
    %v3413 = vunpack.c.h.b16 %v2839
    %v3414 = vunpack.c.l.b16 %v2840
    %v3415 = vunpack.c.h.b16 %v2840
    %v3416 = vunpack.c.l.b16 %v2841
    %v3417 = vunpack.c.h.b16 %v2841
    %v3418 = vunpack.c.l.b16 %v2842
    %v3419 = vunpack.c.h.b16 %v2842
    %v3420 = vunpack.c.l.b16 %v2843
    %v3421 = vunpack.c.h.b16 %v2843
    %v3422 = vunpack.c.l.b16 %v2844
    %v3423 = vunpack.c.h.b16 %v2844
    %v3424 = vunpack.c.l.b16 %v2845
    %v3425 = vunpack.c.h.b16 %v2845
    %v3426 = vunpack.c.l.b16 %v2846
    %v3427 = vunpack.c.h.b16 %v2846
    %v3428 = vunpack.c.l.b16 %v2847
    %v3429 = vunpack.c.h.b16 %v2847
    %v3430 = vunpack.c.l.b16 %v2848
    %v3431 = vunpack.c.h.b16 %v2848
    %v3432 = vunpack.c.l.b16 %v2849
    %v3433 = vunpack.c.h.b16 %v2849
    %v3434 = vunpack.c.l.b16 %v2850
    %v3435 = vunpack.c.h.b16 %v2850
    %v3436 = vunpack.c.l.b16 %v2851
    %v3437 = vunpack.c.h.b16 %v2851
    %v3438 = vunpack.c.l.b16 %v2852
    %v3439 = vunpack.c.h.b16 %v2852
    %v3440 = vunpack.c.l.b16 %v2853
    %v3441 = vunpack.c.h.b16 %v2853
    %v3442 = vunpack.c.l.b16 %v2854
    %v3443 = vunpack.c.h.b16 %v2854
    %v3444 = vunpack.c.l.b16 %v2855
    %v3445 = vunpack.c.h.b16 %v2855
    %v3446 = vunpack.c.l.b16 %v2856
    %v3447 = vunpack.c.h.b16 %v2856
    %v3448 = vunpack.c.l.b16 %v2857
    %v3449 = vunpack.c.h.b16 %v2857
    %v3450 = vunpack.c.l.b16 %v2858
    %v3451 = vunpack.c.h.b16 %v2858
    %v3452 = vunpack.c.l.b16 %v2859
    %v3453 = vunpack.c.h.b16 %v2859
    %v3454 = vunpack.c.l.b16 %v2860
    %v3455 = vunpack.c.h.b16 %v2860
    %v3456 = vunpack.c.l.b16 %v2861
    %v3457 = vunpack.c.h.b16 %v2861
    %v3458 = vunpack.c.l.b16 %v2862
    %v3459 = vunpack.c.h.b16 %v2862
    %v3460 = vunpack.c.l.b16 %v2863
    %v3461 = vunpack.c.h.b16 %v2863
    %v3462 = vunpack.c.l.b16 %v2864
    %v3463 = vunpack.c.h.b16 %v2864
    %v3464 = vunpack.c.l.b16 %v2865
    %v3465 = vunpack.c.h.b16 %v2865
    %v3466 = vunpack.c.l.b16 %v2866
    %v3467 = vunpack.c.h.b16 %v2866
    %v3468 = vunpack.c.l.b16 %v2867
    %v3469 = vunpack.c.h.b16 %v2867
    %v3470 = vunpack.c.l.b16 %v2868
    %v3471 = vunpack.c.h.b16 %v2868
    %v3472 = vunpack.c.l.b16 %v2869
    %v3473 = vunpack.c.h.b16 %v2869
    %v3474 = vunpack.c.l.b16 %v2870
    %v3475 = vunpack.c.h.b16 %v2870
    %v3476 = vunpack.c.l.b16 %v2871
    %v3477 = vunpack.c.h.b16 %v2871
    %v3478 = vunpack.c.l.b16 %v2872
    %v3479 = vunpack.c.h.b16 %v2872
    %v3480 = vunpack.c.l.b16 %v2873
    %v3481 = vunpack.c.h.b16 %v2873
    %v3482 = vunpack.c.l.b16 %v2874
    %v3483 = vunpack.c.h.b16 %v2874
    %v3484 = vunpack.c.l.b16 %v2875
    %v3485 = vunpack.c.h.b16 %v2875
    %v3486 = vunpack.c.l.b16 %v2876
    %v3487 = vunpack.c.h.b16 %v2876
    %v3488 = vunpack.c.l.b16 %v2877
    %v3489 = vunpack.c.h.b16 %v2877
    %v3490 = vunpack.c.l.b16 %v2878
    %v3491 = vunpack.c.h.b16 %v2878
    %v3492 = vunpack.c.l.b16 %v2879
    %v3493 = vunpack.c.h.b16 %v2879
    %v3494 = vunpack.c.l.b16 %v2880
    %v3495 = vunpack.c.h.b16 %v2880
    %v3496 = vunpack.c.l.b16 %v2881
    %v3497 = vunpack.c.h.b16 %v2881
    %v3498 = vunpack.c.l.b16 %v2882
    %v3499 = vunpack.c.h.b16 %v2882
    %v3500 = vunpack.c.l.b16 %v2883
    %v3501 = vunpack.c.h.b16 %v2883
    %v3502 = vunpack.c.l.b16 %v2884
    %v3503 = vunpack.c.h.b16 %v2884
    %v3504 = vunpack.c.l.b16 %v2885
    %v3505 = vunpack.c.h.b16 %v2885
    %v3506 = vunpack.c.l.b16 %v2886
    %v3507 = vunpack.c.h.b16 %v2886
    %v3508 = vunpack.c.l.b16 %v2887
    %v3509 = vunpack.c.h.b16 %v2887
    %v3510 = vunpack.c.l.b16 %v2888
    %v3511 = vunpack.c.h.b16 %v2888
    %v3512 = vunpack.c.l.b16 %v2889
    %v3513 = vunpack.c.h.b16 %v2889
    %v3514 = vunpack.c.l.b16 %v2890
    %v3515 = vunpack.c.h.b16 %v2890
    %v3516 = vunpack.c.l.b16 %v2891
    %v3517 = vunpack.c.h.b16 %v2891
    %v3518 = vunpack.c.l.b16 %v2892
    %v3519 = vunpack.c.h.b16 %v2892
    %v3520 = vunpack.c.l.b16 %v2893
    %v3521 = vunpack.c.h.b16 %v2893
    %v3522 = vunpack.c.l.b16 %v2894
    %v3523 = vunpack.c.h.b16 %v2894
    %v3524 = vunpack.c.l.b16 %v2895
    %v3525 = vunpack.c.h.b16 %v2895
    %v3526 = vunpack.c.l.b16 %v2896
    %v3527 = vunpack.c.h.b16 %v2896
    %v3528 = vunpack.c.l.b16 %v2897
    %v3529 = vunpack.c.h.b16 %v2897
    %v3530 = vunpack.c.l.b16 %v2898
    %v3531 = vunpack.c.h.b16 %v2898
    %v3532 = vunpack.c.l.b16 %v2899
    %v3533 = vunpack.c.h.b16 %v2899
    %v3534 = vunpack.c.l.b16 %v2900
    %v3535 = vunpack.c.h.b16 %v2900
    %v3536 = vunpack.c.l.b16 %v2901
    %v3537 = vunpack.c.h.b16 %v2901
    %v3538 = vunpack.c.l.b16 %v2902
    %v3539 = vunpack.c.h.b16 %v2902
    %v3540 = vunpack.c.l.b16 %v2903
    %v3541 = vunpack.c.h.b16 %v2903
    %v3542 = vunpack.c.l.b16 %v2904
    %v3543 = vunpack.c.h.b16 %v2904
    %v3544 = vunpack.c.l.b16 %v2905
    %v3545 = vunpack.c.h.b16 %v2905
    %v3546 = vunpack.c.l.b16 %v2906
    %v3547 = vunpack.c.h.b16 %v2906
    %v3548 = vunpack.c.l.b16 %v2907
    %v3549 = vunpack.c.h.b16 %v2907
    %v3550 = vunpack.c.l.b16 %v2908
    %v3551 = vunpack.c.h.b16 %v2908
    %v3552 = vunpack.c.l.b16 %v2909
    %v3553 = vunpack.c.h.b16 %v2909
    %v3554 = vunpack.c.l.b16 %v2910
    %v3555 = vunpack.c.h.b16 %v2910
    %v3556 = vunpack.c.l.b16 %v2911
    %v3557 = vunpack.c.h.b16 %v2911
    %v3558 = vunpack.c.l.b16 %v2912
    %v3559 = vunpack.c.h.b16 %v2912
    %v3560 = vunpack.c.l.b16 %v2913
    %v3561 = vunpack.c.h.b16 %v2913
    %v3562 = vunpack.c.l.b16 %v2914
    %v3563 = vunpack.c.h.b16 %v2914
    %v3564 = vunpack.c.l.b16 %v2915
    %v3565 = vunpack.c.h.b16 %v2915
    %v3566 = vunpack.c.l.b16 %v2916
    %v3567 = vunpack.c.h.b16 %v2916
    %v3568 = vunpack.c.l.b16 %v2917
    %v3569 = vunpack.c.h.b16 %v2917
    %v3570 = vunpack.c.l.b16 %v2918
    %v3571 = vunpack.c.h.b16 %v2918
    %v3572 = vunpack.c.l.b16 %v2919
    %v3573 = vunpack.c.h.b16 %v2919
    %v3574 = vunpack.c.l.b16 %v2920
    %v3575 = vunpack.c.h.b16 %v2920
    %v3576 = vunpack.c.l.b16 %v2921
    %v3577 = vunpack.c.h.b16 %v2921
    %v3578 = vunpack.c.l.b16 %v2922
    %v3579 = vunpack.c.h.b16 %v2922
    %v3580 = vunpack.c.l.b16 %v2923
    %v3581 = vunpack.c.h.b16 %v2923
    %v3582 = vunpack.c.l.b16 %v2924
    %v3583 = vunpack.c.h.b16 %v2924
    %v3584 = vunpack.c.l.b16 %v2925
    %v3585 = vunpack.c.h.b16 %v2925
    %v3586 = vunpack.c.l.b16 %v2926
    %v3587 = vunpack.c.h.b16 %v2926
    %v3588 = vunpack.c.l.b16 %v2927
    %v3589 = vunpack.c.h.b16 %v2927
    %v3590 = vunpack.c.l.b16 %v2928
    %v3591 = vunpack.c.h.b16 %v2928
    %v3592 = vunpack.c.l.b16 %v2929
    %v3593 = vunpack.c.h.b16 %v2929
    %v3594 = vunpack.c.l.b16 %v2930
    %v3595 = vunpack.c.h.b16 %v2930
    %v3596 = vunpack.c.l.b16 %v2931
    %v3597 = vunpack.c.h.b16 %v2931
    %v3598 = vunpack.c.l.b16 %v2932
    %v3599 = vunpack.c.h.b16 %v2932
    %v3600 = vunpack.c.l.b16 %v2933
    %v3601 = vunpack.c.h.b16 %v2933
    %v3602 = vunpack.c.l.b16 %v2934
    %v3603 = vunpack.c.h.b16 %v2934
    %v3604 = vunpack.c.l.b16 %v2935
    %v3605 = vunpack.c.h.b16 %v2935
    %v3606 = vunpack.c.l.b16 %v2936
    %v3607 = vunpack.c.h.b16 %v2936
    %v3608 = vunpack.c.l.b16 %v2937
    %v3609 = vunpack.c.h.b16 %v2937
    %v3610 = vunpack.c.l.b16 %v2938
    %v3611 = vunpack.c.h.b16 %v2938
    %v3612 = vunpack.c.l.b16 %v2939
    %v3613 = vunpack.c.h.b16 %v2939
    %v3614 = vunpack.c.l.b16 %v2940
    %v3615 = vunpack.c.h.b16 %v2940
    %v3616 = vunpack.c.l.b16 %v2941
    %v3617 = vunpack.c.h.b16 %v2941
    %v3618 = vunpack.c.l.b16 %v2942
    %v3619 = vunpack.c.h.b16 %v2942
    %v3620 = vunpack.c.l.b16 %v2943
    %v3621 = vunpack.c.h.b16 %v2943
    %v3622 = vunpack.c.l.b16 %v2944
    %v3623 = vunpack.c.h.b16 %v2944
    %v3624 = vunpack.c.l.b16 %v2945
    %v3625 = vunpack.c.h.b16 %v2945
    %v3626 = vunpack.c.l.b16 %v2946
    %v3627 = vunpack.c.h.b16 %v2946
    %v3628 = vunpack.c.l.b16 %v2947
    %v3629 = vunpack.c.h.b16 %v2947
    %v3630 = vunpack.c.l.b16 %v2948
    %v3631 = vunpack.c.h.b16 %v2948
    %v3632 = vunpack.c.l.b16 %v2949
    %v3633 = vunpack.c.h.b16 %v2949
    %v3634 = vunpack.c.l.b16 %v2950
    %v3635 = vunpack.c.h.b16 %v2950
    %v3636 = vunpack.c.l.b16 %v2951
    %v3637 = vunpack.c.h.b16 %v2951
    %v3638 = vunpack.c.l.b16 %v2952
    %v3639 = vunpack.c.h.b16 %v2952
    %v3640 = vunpack.c.l.b16 %v2953
    %v3641 = vunpack.c.h.b16 %v2953
    %v3642 = vunpack.c.l.b16 %v2954
    %v3643 = vunpack.c.h.b16 %v2954
    %v3644 = vunpack.c.l.b16 %v2955
    %v3645 = vunpack.c.h.b16 %v2955
    %v3646 = vunpack.c.l.b16 %v2956
    %v3647 = vunpack.c.h.b16 %v2956
    %v3648 = vunpack.c.l.b16 %v2957
    %v3649 = vunpack.c.h.b16 %v2957
    %v3650 = vunpack.c.l.b16 %v2958
    %v3651 = vunpack.c.h.b16 %v2958
    %v3652 = vunpack.c.l.b16 %v2959
    %v3653 = vunpack.c.h.b16 %v2959
    %v3654 = vunpack.c.l.b16 %v2960
    %v3655 = vunpack.c.h.b16 %v2960
    %v3656 = vunpack.c.l.b16 %v2961
    %v3657 = vunpack.c.h.b16 %v2961
    %v3658 = vunpack.c.l.b16 %v2962
    %v3659 = vunpack.c.h.b16 %v2962
    %v3660 = vunpack.c.l.b16 %v2963
    %v3661 = vunpack.c.h.b16 %v2963
    %v3662 = vunpack.c.l.b16 %v2964
    %v3663 = vunpack.c.h.b16 %v2964
    %v3664 = vunpack.c.l.b16 %v2965
    %v3665 = vunpack.c.h.b16 %v2965
    %v3666 = vunpack.c.l.b16 %v2966
    %v3667 = vunpack.c.h.b16 %v2966
    %v3668 = vunpack.c.l.b16 %v2967
    %v3669 = vunpack.c.h.b16 %v2967
    %v3670 = vunpack.c.l.b16 %v2968
    %v3671 = vunpack.c.h.b16 %v2968
    %v3672 = vunpack.c.l.b16 %v2969
    %v3673 = vunpack.c.h.b16 %v2969
    %v3674 = vunpack.c.l.b16 %v2970
    %v3675 = vunpack.c.h.b16 %v2970
    %v3676 = vunpack.c.l.b16 %v2971
    %v3677 = vunpack.c.h.b16 %v2971
    %v3678 = vunpack.c.l.b16 %v2972
    %v3679 = vunpack.c.h.b16 %v2972
    %v3680 = vunpack.c.l.b16 %v2973
    %v3681 = vunpack.c.h.b16 %v2973
    %v3682 = vunpack.c.l.b16 %v2974
    %v3683 = vunpack.c.h.b16 %v2974
    %v3684 = vunpack.c.l.b16 %v2975
    %v3685 = vunpack.c.h.b16 %v2975
    %v3686 = vunpack.c.l.b16 %v2976
    %v3687 = vunpack.c.h.b16 %v2976
    %v3688 = vunpack.c.l.b16 %v2977
    %v3689 = vunpack.c.h.b16 %v2977
    %v3690 = vunpack.c.l.b16 %v2978
    %v3691 = vunpack.c.h.b16 %v2978
    %v3692 = vunpack.c.l.b16 %v2979
    %v3693 = vunpack.c.h.b16 %v2979
    %v3694 = vunpack.c.l.b16 %v2980
    %v3695 = vunpack.c.h.b16 %v2980
    %v3696 = vunpack.c.l.b16 %v2981
    %v3697 = vunpack.c.h.b16 %v2981
    %v3698 = vunpack.c.l.b16 %v2982
    %v3699 = vunpack.c.h.b16 %v2982
    %v3700 = vunpack.c.l.b16 %v2983
    %v3701 = vunpack.c.h.b16 %v2983
    %v3702 = vunpack.c.l.b16 %v2984
    %v3703 = vunpack.c.h.b16 %v2984
    %v3704 = vunpack.c.l.b16 %v2985
    %v3705 = vunpack.c.h.b16 %v2985
    %v3706 = vunpack.c.l.b16 %v2986
    %v3707 = vunpack.c.h.b16 %v2986
    %v3708 = vunpack.c.l.b16 %v2987
    %v3709 = vunpack.c.h.b16 %v2987
    %v3710 = vunpack.c.l.b16 %v2988
    %v3711 = vunpack.c.h.b16 %v2988
    %v3712 = vunpack.c.l.b16 %v2989
    %v3713 = vunpack.c.h.b16 %v2989
    %v3714 = vunpack.c.l.b16 %v2990
    %v3715 = vunpack.c.h.b16 %v2990
    %v3716 = vunpack.c.l.b16 %v2991
    %v3717 = vunpack.c.h.b16 %v2991
    %v3718 = vunpack.c.l.b16 %v2992
    %v3719 = vunpack.c.h.b16 %v2992
    %v3720 = vunpack.c.l.b16 %v2993
    %v3721 = vunpack.c.h.b16 %v2993
    %v3722 = vunpack.c.l.b16 %v2994
    %v3723 = vunpack.c.h.b16 %v2994
    %v3724 = vunpack.c.l.b16 %v2995
    %v3725 = vunpack.c.h.b16 %v2995
    %v3726 = vunpack.c.l.b16 %v2996
    %v3727 = vunpack.c.h.b16 %v2996
    %v3728 = vunpack.c.l.b16 %v2997
    %v3729 = vunpack.c.h.b16 %v2997
    %v3730 = vunpack.c.l.b16 %v2998
    %v3731 = vunpack.c.h.b16 %v2998
    %v3732 = vunpack.c.l.b16 %v2999
    %v3733 = vunpack.c.h.b16 %v2999
    %v3734 = vunpack.c.l.b16 %v3000
    %v3735 = vunpack.c.h.b16 %v3000
    %v3736 = vunpack.c.l.b16 %v3001
    %v3737 = vunpack.c.h.b16 %v3001
    %v3738 = vunpack.c.l.b16 %v3002
    %v3739 = vunpack.c.h.b16 %v3002
    %v3740 = vunpack.c.l.b16 %v3003
    %v3741 = vunpack.c.h.b16 %v3003
    %v3742 = vunpack.c.l.b16 %v3004
    %v3743 = vunpack.c.h.b16 %v3004
    %v3744 = vunpack.c.l.b16 %v3005
    %v3745 = vunpack.c.h.b16 %v3005
    %v3746 = vunpack.c.l.b16 %v3006
    %v3747 = vunpack.c.h.b16 %v3006
    %v3748 = vunpack.c.l.b16 %v3007
    %v3749 = vunpack.c.h.b16 %v3007
    %v3750 = vunpack.c.l.b16 %v3008
    %v3751 = vunpack.c.h.b16 %v3008
    %v3752 = vunpack.c.l.b16 %v3009
    %v3753 = vunpack.c.h.b16 %v3009
    %v3754 = vunpack.c.l.b16 %v3010
    %v3755 = vunpack.c.h.b16 %v3010
    %v3756 = vunpack.c.l.b16 %v3011
    %v3757 = vunpack.c.h.b16 %v3011
    %v3758 = vunpack.c.l.b16 %v3012
    %v3759 = vunpack.c.h.b16 %v3012
    %v3760 = vunpack.c.l.b16 %v3013
    %v3761 = vunpack.c.h.b16 %v3013
    %v3762 = vunpack.c.l.b16 %v3014
    %v3763 = vunpack.c.h.b16 %v3014
    %v3764 = vunpack.c.l.b16 %v3015
    %v3765 = vunpack.c.h.b16 %v3015
    %v3766 = vunpack.c.l.b16 %v3016
    %v3767 = vunpack.c.h.b16 %v3016
    %v3768 = vunpack.c.l.b16 %v3017
    %v3769 = vunpack.c.h.b16 %v3017
    %v3770 = vunpack.c.l.b16 %v3018
    %v3771 = vunpack.c.h.b16 %v3018
    %v3772 = vunpack.c.l.b16 %v3019
    %v3773 = vunpack.c.h.b16 %v3019
    %v3774 = vunpack.c.l.b16 %v3020
    %v3775 = vunpack.c.h.b16 %v3020
    %v3776 = vunpack.c.l.b16 %v3021
    %v3777 = vunpack.c.h.b16 %v3021
    %v3778 = vunpack.c.l.b16 %v3022
    %v3779 = vunpack.c.h.b16 %v3022
    %v3780 = vunpack.c.l.b16 %v3023
    %v3781 = vunpack.c.h.b16 %v3023
    %v3782 = vunpack.c.l.b16 %v3024
    %v3783 = vunpack.c.h.b16 %v3024
    %v3784 = vunpack.c.l.b16 %v3025
    %v3785 = vunpack.c.h.b16 %v3025
    %v3786 = vunpack.c.l.b16 %v3026
    %v3787 = vunpack.c.h.b16 %v3026
    %v3788 = vunpack.c.l.b16 %v3027
    %v3789 = vunpack.c.h.b16 %v3027
    %v3790 = vunpack.c.l.b16 %v3028
    %v3791 = vunpack.c.h.b16 %v3028
    %v3792 = vunpack.c.l.b16 %v3029
    %v3793 = vunpack.c.h.b16 %v3029
    %v3794 = vunpack.c.l.b16 %v3030
    %v3795 = vunpack.c.h.b16 %v3030
    %v3796 = vunpack.c.l.b16 %v3031
    %v3797 = vunpack.c.h.b16 %v3031
    %v3798 = vunpack.c.l.b16 %v3032
    %v3799 = vunpack.c.h.b16 %v3032
    %v3800 = vunpack.c.l.b16 %v3033
    %v3801 = vunpack.c.h.b16 %v3033
    %v3802 = vpack.c.b16 %v3294, %v3290
    %v3803 = vpack.c.b16 %v3295, %v3291
    %v3804 = vpack.c.b16 %v3296, %v3292
    %v3805 = vpack.c.b16 %v3297, %v3293
    %v3806 = vpack.c.b16 %v3302, %v3298
    %v3807 = vpack.c.b16 %v3303, %v3299
    %v3808 = vpack.c.b16 %v3304, %v3300
    %v3809 = vpack.c.b16 %v3305, %v3301
    %v3810 = vpack.c.b16 %v3310, %v3306
    %v3811 = vpack.c.b16 %v3311, %v3307
    %v3812 = vpack.c.b16 %v3312, %v3308
    %v3813 = vpack.c.b16 %v3313, %v3309
    %v3814 = vpack.c.b16 %v3318, %v3314
    %v3815 = vpack.c.b16 %v3319, %v3315
    %v3816 = vpack.c.b16 %v3320, %v3316
    %v3817 = vpack.c.b16 %v3321, %v3317
    %v3818 = vpack.c.b16 %v3326, %v3322
    %v3819 = vpack.c.b16 %v3327, %v3323
    %v3820 = vpack.c.b16 %v3328, %v3324
    %v3821 = vpack.c.b16 %v3329, %v3325
    %v3822 = vpack.c.b16 %v3334, %v3330
    %v3823 = vpack.c.b16 %v3335, %v3331
    %v3824 = vpack.c.b16 %v3336, %v3332
    %v3825 = vpack.c.b16 %v3337, %v3333
    %v3826 = vpack.c.b16 %v3342, %v3338
    %v3827 = vpack.c.b16 %v3343, %v3339
    %v3828 = vpack.c.b16 %v3344, %v3340
    %v3829 = vpack.c.b16 %v3345, %v3341
    %v3830 = vpack.c.b16 %v3350, %v3346
    %v3831 = vpack.c.b16 %v3351, %v3347
    %v3832 = vpack.c.b16 %v3352, %v3348
    %v3833 = vpack.c.b16 %v3353, %v3349
    %v3834 = vpack.c.b16 %v3358, %v3354
    %v3835 = vpack.c.b16 %v3359, %v3355
    %v3836 = vpack.c.b16 %v3360, %v3356
    %v3837 = vpack.c.b16 %v3361, %v3357
    %v3838 = vpack.c.b16 %v3366, %v3362
    %v3839 = vpack.c.b16 %v3367, %v3363
    %v3840 = vpack.c.b16 %v3368, %v3364
    %v3841 = vpack.c.b16 %v3369, %v3365
    %v3842 = vpack.c.b16 %v3374, %v3370
    %v3843 = vpack.c.b16 %v3375, %v3371
    %v3844 = vpack.c.b16 %v3376, %v3372
    %v3845 = vpack.c.b16 %v3377, %v3373
    %v3846 = vpack.c.b16 %v3382, %v3378
    %v3847 = vpack.c.b16 %v3383, %v3379
    %v3848 = vpack.c.b16 %v3384, %v3380
    %v3849 = vpack.c.b16 %v3385, %v3381
    %v3850 = vpack.c.b16 %v3390, %v3386
    %v3851 = vpack.c.b16 %v3391, %v3387
    %v3852 = vpack.c.b16 %v3392, %v3388
    %v3853 = vpack.c.b16 %v3393, %v3389
    %v3854 = vpack.c.b16 %v3398, %v3394
    %v3855 = vpack.c.b16 %v3399, %v3395
    %v3856 = vpack.c.b16 %v3400, %v3396
    %v3857 = vpack.c.b16 %v3401, %v3397
    %v3858 = vpack.c.b16 %v3406, %v3402
    %v3859 = vpack.c.b16 %v3407, %v3403
    %v3860 = vpack.c.b16 %v3408, %v3404
    %v3861 = vpack.c.b16 %v3409, %v3405
    %v3862 = vpack.c.b16 %v3414, %v3410
    %v3863 = vpack.c.b16 %v3415, %v3411
    %v3864 = vpack.c.b16 %v3416, %v3412
    %v3865 = vpack.c.b16 %v3417, %v3413
    %v3866 = vpack.c.b16 %v3422, %v3418
    %v3867 = vpack.c.b16 %v3423, %v3419
    %v3868 = vpack.c.b16 %v3424, %v3420
    %v3869 = vpack.c.b16 %v3425, %v3421
    %v3870 = vpack.c.b16 %v3430, %v3426
    %v3871 = vpack.c.b16 %v3431, %v3427
    %v3872 = vpack.c.b16 %v3432, %v3428
    %v3873 = vpack.c.b16 %v3433, %v3429
    %v3874 = vpack.c.b16 %v3438, %v3434
    %v3875 = vpack.c.b16 %v3439, %v3435
    %v3876 = vpack.c.b16 %v3440, %v3436
    %v3877 = vpack.c.b16 %v3441, %v3437
    %v3878 = vpack.c.b16 %v3446, %v3442
    %v3879 = vpack.c.b16 %v3447, %v3443
    %v3880 = vpack.c.b16 %v3448, %v3444
    %v3881 = vpack.c.b16 %v3449, %v3445
    %v3882 = vpack.c.b16 %v3454, %v3450
    %v3883 = vpack.c.b16 %v3455, %v3451
    %v3884 = vpack.c.b16 %v3456, %v3452
    %v3885 = vpack.c.b16 %v3457, %v3453
    %v3886 = vpack.c.b16 %v3462, %v3458
    %v3887 = vpack.c.b16 %v3463, %v3459
    %v3888 = vpack.c.b16 %v3464, %v3460
    %v3889 = vpack.c.b16 %v3465, %v3461
    %v3890 = vpack.c.b16 %v3470, %v3466
    %v3891 = vpack.c.b16 %v3471, %v3467
    %v3892 = vpack.c.b16 %v3472, %v3468
    %v3893 = vpack.c.b16 %v3473, %v3469
    %v3894 = vpack.c.b16 %v3478, %v3474
    %v3895 = vpack.c.b16 %v3479, %v3475
    %v3896 = vpack.c.b16 %v3480, %v3476
    %v3897 = vpack.c.b16 %v3481, %v3477
    %v3898 = vpack.c.b16 %v3486, %v3482
    %v3899 = vpack.c.b16 %v3487, %v3483
    %v3900 = vpack.c.b16 %v3488, %v3484
    %v3901 = vpack.c.b16 %v3489, %v3485
    %v3902 = vpack.c.b16 %v3494, %v3490
    %v3903 = vpack.c.b16 %v3495, %v3491
    %v3904 = vpack.c.b16 %v3496, %v3492
    %v3905 = vpack.c.b16 %v3497, %v3493
    %v3906 = vpack.c.b16 %v3502, %v3498
    %v3907 = vpack.c.b16 %v3503, %v3499
    %v3908 = vpack.c.b16 %v3504, %v3500
    %v3909 = vpack.c.b16 %v3505, %v3501
    %v3910 = vpack.c.b16 %v3510, %v3506
    %v3911 = vpack.c.b16 %v3511, %v3507
    %v3912 = vpack.c.b16 %v3512, %v3508
    %v3913 = vpack.c.b16 %v3513, %v3509
    %v3914 = vpack.c.b16 %v3518, %v3514
    %v3915 = vpack.c.b16 %v3519, %v3515
    %v3916 = vpack.c.b16 %v3520, %v3516
    %v3917 = vpack.c.b16 %v3521, %v3517
    %v3918 = vpack.c.b16 %v3526, %v3522
    %v3919 = vpack.c.b16 %v3527, %v3523
    %v3920 = vpack.c.b16 %v3528, %v3524
    %v3921 = vpack.c.b16 %v3529, %v3525
    %v3922 = vpack.c.b16 %v3534, %v3530
    %v3923 = vpack.c.b16 %v3535, %v3531
    %v3924 = vpack.c.b16 %v3536, %v3532
    %v3925 = vpack.c.b16 %v3537, %v3533
    %v3926 = vpack.c.b16 %v3542, %v3538
    %v3927 = vpack.c.b16 %v3543, %v3539
    %v3928 = vpack.c.b16 %v3544, %v3540
    %v3929 = vpack.c.b16 %v3545, %v3541
    %v3930 = vpack.c.b16 %v3550, %v3546
    %v3931 = vpack.c.b16 %v3551, %v3547
    %v3932 = vpack.c.b16 %v3552, %v3548
    %v3933 = vpack.c.b16 %v3553, %v3549
    %v3934 = vpack.c.b16 %v3558, %v3554
    %v3935 = vpack.c.b16 %v3559, %v3555
    %v3936 = vpack.c.b16 %v3560, %v3556
    %v3937 = vpack.c.b16 %v3561, %v3557
    %v3938 = vpack.c.b16 %v3566, %v3562
    %v3939 = vpack.c.b16 %v3567, %v3563
    %v3940 = vpack.c.b16 %v3568, %v3564
    %v3941 = vpack.c.b16 %v3569, %v3565
    %v3942 = vpack.c.b16 %v3574, %v3570
    %v3943 = vpack.c.b16 %v3575, %v3571
    %v3944 = vpack.c.b16 %v3576, %v3572
    %v3945 = vpack.c.b16 %v3577, %v3573
    %v3946 = vpack.c.b16 %v3582, %v3578
    %v3947 = vpack.c.b16 %v3583, %v3579
    %v3948 = vpack.c.b16 %v3584, %v3580
    %v3949 = vpack.c.b16 %v3585, %v3581
    %v3950 = vpack.c.b16 %v3590, %v3586
    %v3951 = vpack.c.b16 %v3591, %v3587
    %v3952 = vpack.c.b16 %v3592, %v3588
    %v3953 = vpack.c.b16 %v3593, %v3589
    %v3954 = vpack.c.b16 %v3598, %v3594
    %v3955 = vpack.c.b16 %v3599, %v3595
    %v3956 = vpack.c.b16 %v3600, %v3596
    %v3957 = vpack.c.b16 %v3601, %v3597
    %v3958 = vpack.c.b16 %v3606, %v3602
    %v3959 = vpack.c.b16 %v3607, %v3603
    %v3960 = vpack.c.b16 %v3608, %v3604
    %v3961 = vpack.c.b16 %v3609, %v3605
    %v3962 = vpack.c.b16 %v3614, %v3610
    %v3963 = vpack.c.b16 %v3615, %v3611
    %v3964 = vpack.c.b16 %v3616, %v3612
    %v3965 = vpack.c.b16 %v3617, %v3613
    %v3966 = vpack.c.b16 %v3622, %v3618
    %v3967 = vpack.c.b16 %v3623, %v3619
    %v3968 = vpack.c.b16 %v3624, %v3620
    %v3969 = vpack.c.b16 %v3625, %v3621
    %v3970 = vpack.c.b16 %v3630, %v3626
    %v3971 = vpack.c.b16 %v3631, %v3627
    %v3972 = vpack.c.b16 %v3632, %v3628
    %v3973 = vpack.c.b16 %v3633, %v3629
    %v3974 = vpack.c.b16 %v3638, %v3634
    %v3975 = vpack.c.b16 %v3639, %v3635
    %v3976 = vpack.c.b16 %v3640, %v3636
    %v3977 = vpack.c.b16 %v3641, %v3637
    %v3978 = vpack.c.b16 %v3646, %v3642
    %v3979 = vpack.c.b16 %v3647, %v3643
    %v3980 = vpack.c.b16 %v3648, %v3644
    %v3981 = vpack.c.b16 %v3649, %v3645
    %v3982 = vpack.c.b16 %v3654, %v3650
    %v3983 = vpack.c.b16 %v3655, %v3651
    %v3984 = vpack.c.b16 %v3656, %v3652
    %v3985 = vpack.c.b16 %v3657, %v3653
    %v3986 = vpack.c.b16 %v3662, %v3658
    %v3987 = vpack.c.b16 %v3663, %v3659
    %v3988 = vpack.c.b16 %v3664, %v3660
    %v3989 = vpack.c.b16 %v3665, %v3661
    %v3990 = vpack.c.b16 %v3670, %v3666
    %v3991 = vpack.c.b16 %v3671, %v3667
    %v3992 = vpack.c.b16 %v3672, %v3668
    %v3993 = vpack.c.b16 %v3673, %v3669
    %v3994 = vpack.c.b16 %v3678, %v3674
    %v3995 = vpack.c.b16 %v3679, %v3675
    %v3996 = vpack.c.b16 %v3680, %v3676
    %v3997 = vpack.c.b16 %v3681, %v3677
    %v3998 = vpack.c.b16 %v3686, %v3682
    %v3999 = vpack.c.b16 %v3687, %v3683
    %v4000 = vpack.c.b16 %v3688, %v3684
    %v4001 = vpack.c.b16 %v3689, %v3685
    %v4002 = vpack.c.b16 %v3694, %v3690
    %v4003 = vpack.c.b16 %v3695, %v3691
    %v4004 = vpack.c.b16 %v3696, %v3692
    %v4005 = vpack.c.b16 %v3697, %v3693
    %v4006 = vpack.c.b16 %v3702, %v3698
    %v4007 = vpack.c.b16 %v3703, %v3699
    %v4008 = vpack.c.b16 %v3704, %v3700
    %v4009 = vpack.c.b16 %v3705, %v3701
    %v4010 = vpack.c.b16 %v3710, %v3706
    %v4011 = vpack.c.b16 %v3711, %v3707
    %v4012 = vpack.c.b16 %v3712, %v3708
    %v4013 = vpack.c.b16 %v3713, %v3709
    %v4014 = vpack.c.b16 %v3718, %v3714
    %v4015 = vpack.c.b16 %v3719, %v3715
    %v4016 = vpack.c.b16 %v3720, %v3716
    %v4017 = vpack.c.b16 %v3721, %v3717
    %v4018 = vpack.c.b16 %v3726, %v3722
    %v4019 = vpack.c.b16 %v3727, %v3723
    %v4020 = vpack.c.b16 %v3728, %v3724
    %v4021 = vpack.c.b16 %v3729, %v3725
    %v4022 = vpack.c.b16 %v3734, %v3730
    %v4023 = vpack.c.b16 %v3735, %v3731
    %v4024 = vpack.c.b16 %v3736, %v3732
    %v4025 = vpack.c.b16 %v3737, %v3733
    %v4026 = vpack.c.b16 %v3742, %v3738
    %v4027 = vpack.c.b16 %v3743, %v3739
    %v4028 = vpack.c.b16 %v3744, %v3740
    %v4029 = vpack.c.b16 %v3745, %v3741
    %v4030 = vpack.c.b16 %v3750, %v3746
    %v4031 = vpack.c.b16 %v3751, %v3747
    %v4032 = vpack.c.b16 %v3752, %v3748
    %v4033 = vpack.c.b16 %v3753, %v3749
    %v4034 = vpack.c.b16 %v3758, %v3754
    %v4035 = vpack.c.b16 %v3759, %v3755
    %v4036 = vpack.c.b16 %v3760, %v3756
    %v4037 = vpack.c.b16 %v3761, %v3757
    %v4038 = vpack.c.b16 %v3766, %v3762
    %v4039 = vpack.c.b16 %v3767, %v3763
    %v4040 = vpack.c.b16 %v3768, %v3764
    %v4041 = vpack.c.b16 %v3769, %v3765
    %v4042 = vpack.c.b16 %v3774, %v3770
    %v4043 = vpack.c.b16 %v3775, %v3771
    %v4044 = vpack.c.b16 %v3776, %v3772
    %v4045 = vpack.c.b16 %v3777, %v3773
    %v4046 = vpack.c.b16 %v3782, %v3778
    %v4047 = vpack.c.b16 %v3783, %v3779
    %v4048 = vpack.c.b16 %v3784, %v3780
    %v4049 = vpack.c.b16 %v3785, %v3781
    %v4050 = vpack.c.b16 %v3790, %v3786
    %v4051 = vpack.c.b16 %v3791, %v3787
    %v4052 = vpack.c.b16 %v3792, %v3788
    %v4053 = vpack.c.b16 %v3793, %v3789
    %v4054 = vpack.c.b16 %v3798, %v3794
    %v4055 = vpack.c.b16 %v3799, %v3795
    %v4056 = vpack.c.b16 %v3800, %v3796
    %v4057 = vpack.c.b16 %v3801, %v3797
    %4314 = vmatprep.subr.bf16.mxu0 %v3831
    %4315 = vmatpush1.bf16.msra.mxu0 %v3830
    %4316 = vmatprep.subr.bf16.mxu0 %v3827
    %4317 = vmatpush1.bf16.msra.mxu0 %v3826
    %4318 = vmatprep.subr.bf16.mxu0 %v3823
    %4319 = vmatpush1.bf16.msra.mxu0 %v3822
    %4320 = vmatprep.subr.bf16.mxu0 %v3819
    %4321 = vmatpush1.bf16.msra.mxu0 %v3818
    %4322 = vmatprep.subr.bf16.mxu0 %v3815
    %4323 = vmatpush1.bf16.msra.mxu0 %v3814
    %4324 = vmatprep.subr.bf16.mxu0 %v3811
    %4325 = vmatpush1.bf16.msra.mxu0 %v3810
    %4326 = vmatprep.subr.bf16.mxu0 %v3807
    %4327 = vmatpush1.bf16.msra.mxu0 %v3806
    %4328 = vmatprep.subr.bf16.mxu0 %v3803
    %4329 = vmatpush1.bf16.msra.mxu0 %v3802
    %4330 = vmatprep.subr.bf16.mxu0 %v3863
    %4331 = vmatpush2.bf16.msra.mxu0 %v3862
    %4332 = vmatprep.subr.bf16.mxu0 %v3859
    %4333 = vmatpush2.bf16.msra.mxu0 %v3858
    %4334 = vmatprep.subr.bf16.mxu0 %v3855
    %4335 = vmatpush2.bf16.msra.mxu0 %v3854
    %4336 = vmatprep.subr.bf16.mxu0 %v3851
    %4337 = vmatpush2.bf16.msra.mxu0 %v3850
    %4338 = vmatprep.subr.bf16.mxu0 %v3847
    %4339 = vmatpush2.bf16.msra.mxu0 %v3846
    %4340 = vmatprep.subr.bf16.mxu0 %v3843
    %4341 = vmatpush2.bf16.msra.mxu0 %v3842
    %4342 = vmatprep.subr.bf16.mxu0 %v3839
    %4343 = vmatpush2.bf16.msra.mxu0 %v3838
    %4344 = vmatprep.subr.bf16.mxu0 %v3835
    %4345 = vmatpush2.bf16.msra.mxu0 %v3834
    %4346 = vmatprep.mubr.bf16.mxu0 %v2515
    %4347 = vmatmul.mubr.bf16.gmra.mxu0 %v2514
    %v4348 = vpop.f32.mrf.mxu0
    %v4349 = vadd.f32 0.0, %v4348
    %v4350 = vpop.f32.mrf.mxu0
    %v4351 = vadd.f32 0.0, %v4350
    %v4352 = vpop.f32.mrf.mxu0
    %v4353 = vpop.f32.mrf.mxu0
    %4354 = vdwg.mxu0
    %4355 = vmatprep.subr.bf16.mxu0 %v3895
    %4356 = vmatpush1.bf16.msra.mxu0 %v3894
    %4357 = vmatprep.subr.bf16.mxu0 %v3891
    %4358 = vmatpush1.bf16.msra.mxu0 %v3890
    %4359 = vmatprep.subr.bf16.mxu0 %v3887
    %4360 = vmatpush1.bf16.msra.mxu0 %v3886
    %4361 = vmatprep.subr.bf16.mxu0 %v3883
    %4362 = vmatpush1.bf16.msra.mxu0 %v3882
    %4363 = vmatprep.subr.bf16.mxu0 %v3879
    %4364 = vmatpush1.bf16.msra.mxu0 %v3878
    %4365 = vmatprep.subr.bf16.mxu0 %v3875
    %4366 = vmatpush1.bf16.msra.mxu0 %v3874
    %4367 = vmatprep.subr.bf16.mxu0 %v3871
    %4368 = vmatpush1.bf16.msra.mxu0 %v3870
    %4369 = vmatprep.subr.bf16.mxu0 %v3867
    %4370 = vmatpush1.bf16.msra.mxu0 %v3866
    %4371 = vmatprep.subr.bf16.mxu0 %v3927
    %4372 = vmatpush2.bf16.msra.mxu0 %v3926
    %4373 = vmatprep.subr.bf16.mxu0 %v3923
    %4374 = vmatpush2.bf16.msra.mxu0 %v3922
    %4375 = vmatprep.subr.bf16.mxu0 %v3919
    %4376 = vmatpush2.bf16.msra.mxu0 %v3918
    %4377 = vmatprep.subr.bf16.mxu0 %v3915
    %4378 = vmatpush2.bf16.msra.mxu0 %v3914
    %4379 = vmatprep.subr.bf16.mxu0 %v3911
    %4380 = vmatpush2.bf16.msra.mxu0 %v3910
    %4381 = vmatprep.subr.bf16.mxu0 %v3907
    %4382 = vmatpush2.bf16.msra.mxu0 %v3906
    %4383 = vmatprep.subr.bf16.mxu0 %v3903
    %4384 = vmatpush2.bf16.msra.mxu0 %v3902
    %4385 = vmatprep.subr.bf16.mxu0 %v3899
    %4386 = vmatpush2.bf16.msra.mxu0 %v3898
    %4387 = vmatprep.mubr.bf16.mxu0 %v2517
    %4388 = vmatmul.mubr.bf16.gmra.mxu0 %v2516
    %v4389 = vpop.f32.mrf.mxu0
    %v4390 = vadd.f32 %v4349, %v4389
    %v4391 = vpop.f32.mrf.mxu0
    %v4392 = vadd.f32 %v4351, %v4391
    %v4393 = vpop.f32.mrf.mxu0
    %v4394 = vpop.f32.mrf.mxu0
    %4395 = vdwg.mxu0
    %4396 = vmatprep.subr.bf16.mxu0 %v3959
    %4397 = vmatpush1.bf16.msra.mxu0 %v3958
    %4398 = vmatprep.subr.bf16.mxu0 %v3955
    %4399 = vmatpush1.bf16.msra.mxu0 %v3954
    %4400 = vmatprep.subr.bf16.mxu0 %v3951
    %4401 = vmatpush1.bf16.msra.mxu0 %v3950
    %4402 = vmatprep.subr.bf16.mxu0 %v3947
    %4403 = vmatpush1.bf16.msra.mxu0 %v3946
    %4404 = vmatprep.subr.bf16.mxu0 %v3943
    %4405 = vmatpush1.bf16.msra.mxu0 %v3942
    %4406 = vmatprep.subr.bf16.mxu0 %v3939
    %4407 = vmatpush1.bf16.msra.mxu0 %v3938
    %4408 = vmatprep.subr.bf16.mxu0 %v3935
    %4409 = vmatpush1.bf16.msra.mxu0 %v3934
    %4410 = vmatprep.subr.bf16.mxu0 %v3931
    %4411 = vmatpush1.bf16.msra.mxu0 %v3930
    %4412 = vmatprep.subr.bf16.mxu0 %v3991
    %4413 = vmatpush2.bf16.msra.mxu0 %v3990
    %4414 = vmatprep.subr.bf16.mxu0 %v3987
    %4415 = vmatpush2.bf16.msra.mxu0 %v3986
    %4416 = vmatprep.subr.bf16.mxu0 %v3983
    %4417 = vmatpush2.bf16.msra.mxu0 %v3982
    %4418 = vmatprep.subr.bf16.mxu0 %v3979
    %4419 = vmatpush2.bf16.msra.mxu0 %v3978
    %4420 = vmatprep.subr.bf16.mxu0 %v3975
    %4421 = vmatpush2.bf16.msra.mxu0 %v3974
    %4422 = vmatprep.subr.bf16.mxu0 %v3971
    %4423 = vmatpush2.bf16.msra.mxu0 %v3970
    %4424 = vmatprep.subr.bf16.mxu0 %v3967
    %4425 = vmatpush2.bf16.msra.mxu0 %v3966
    %4426 = vmatprep.subr.bf16.mxu0 %v3963
    %4427 = vmatpush2.bf16.msra.mxu0 %v3962
    %4428 = vmatprep.mubr.bf16.mxu0 %v2519
    %4429 = vmatmul.mubr.bf16.gmra.mxu0 %v2518
    %v4430 = vpop.f32.mrf.mxu0
    %v4431 = vadd.f32 %v4390, %v4430
    %v4432 = vpop.f32.mrf.mxu0
    %v4433 = vadd.f32 %v4392, %v4432
    %v4434 = vpop.f32.mrf.mxu0
    %v4435 = vpop.f32.mrf.mxu0
    %4436 = vdwg.mxu0
    %4437 = vmatprep.subr.bf16.mxu0 %v4023
    %4438 = vmatpush1.bf16.msra.mxu0 %v4022
    %4439 = vmatprep.subr.bf16.mxu0 %v4019
    %4440 = vmatpush1.bf16.msra.mxu0 %v4018
    %4441 = vmatprep.subr.bf16.mxu0 %v4015
    %4442 = vmatpush1.bf16.msra.mxu0 %v4014
    %4443 = vmatprep.subr.bf16.mxu0 %v4011
    %4444 = vmatpush1.bf16.msra.mxu0 %v4010
    %4445 = vmatprep.subr.bf16.mxu0 %v4007
    %4446 = vmatpush1.bf16.msra.mxu0 %v4006
    %4447 = vmatprep.subr.bf16.mxu0 %v4003
    %4448 = vmatpush1.bf16.msra.mxu0 %v4002
    %4449 = vmatprep.subr.bf16.mxu0 %v3999
    %4450 = vmatpush1.bf16.msra.mxu0 %v3998
    %4451 = vmatprep.subr.bf16.mxu0 %v3995
    %4452 = vmatpush1.bf16.msra.mxu0 %v3994
    %4453 = vmatprep.subr.bf16.mxu0 %v4055
    %4454 = vmatpush2.bf16.msra.mxu0 %v4054
    %4455 = vmatprep.subr.bf16.mxu0 %v4051
    %4456 = vmatpush2.bf16.msra.mxu0 %v4050
    %4457 = vmatprep.subr.bf16.mxu0 %v4047
    %4458 = vmatpush2.bf16.msra.mxu0 %v4046
    %4459 = vmatprep.subr.bf16.mxu0 %v4043
    %4460 = vmatpush2.bf16.msra.mxu0 %v4042
    %4461 = vmatprep.subr.bf16.mxu0 %v4039
    %4462 = vmatpush2.bf16.msra.mxu0 %v4038
    %4463 = vmatprep.subr.bf16.mxu0 %v4035
    %4464 = vmatpush2.bf16.msra.mxu0 %v4034
    %4465 = vmatprep.subr.bf16.mxu0 %v4031
    %4466 = vmatpush2.bf16.msra.mxu0 %v4030
    %4467 = vmatprep.subr.bf16.mxu0 %v4027
    %4468 = vmatpush2.bf16.msra.mxu0 %v4026
    %4469 = vmatprep.mubr.bf16.mxu0 %v2521
    %4470 = vmatmul.mubr.bf16.gmra.mxu0 %v2520
    %v4471 = vpop.f32.mrf.mxu0
    %v4472 = vadd.f32 %v4431, %v4471
    %v4473 = vpop.f32.mrf.mxu0
    %v4474 = vadd.f32 %v4433, %v4473
    %v4475 = vpop.f32.mrf.mxu0
    %v4476 = vpop.f32.mrf.mxu0
    %4477 = vdwg.mxu0
    %4478 = vmatprep.subr.bf16.mxu0 %v3833
    %4479 = vmatpush1.bf16.msra.mxu0 %v3832
    %4480 = vmatprep.subr.bf16.mxu0 %v3829
    %4481 = vmatpush1.bf16.msra.mxu0 %v3828
    %4482 = vmatprep.subr.bf16.mxu0 %v3825
    %4483 = vmatpush1.bf16.msra.mxu0 %v3824
    %4484 = vmatprep.subr.bf16.mxu0 %v3821
    %4485 = vmatpush1.bf16.msra.mxu0 %v3820
    %4486 = vmatprep.subr.bf16.mxu0 %v3817
    %4487 = vmatpush1.bf16.msra.mxu0 %v3816
    %4488 = vmatprep.subr.bf16.mxu0 %v3813
    %4489 = vmatpush1.bf16.msra.mxu0 %v3812
    %4490 = vmatprep.subr.bf16.mxu0 %v3809
    %4491 = vmatpush1.bf16.msra.mxu0 %v3808
    %4492 = vmatprep.subr.bf16.mxu0 %v3805
    %4493 = vmatpush1.bf16.msra.mxu0 %v3804
    %4494 = vmatprep.subr.bf16.mxu0 %v3865
    %4495 = vmatpush2.bf16.msra.mxu0 %v3864
    %4496 = vmatprep.subr.bf16.mxu0 %v3861
    %4497 = vmatpush2.bf16.msra.mxu0 %v3860
    %4498 = vmatprep.subr.bf16.mxu0 %v3857
    %4499 = vmatpush2.bf16.msra.mxu0 %v3856
    %4500 = vmatprep.subr.bf16.mxu0 %v3853
    %4501 = vmatpush2.bf16.msra.mxu0 %v3852
    %4502 = vmatprep.subr.bf16.mxu0 %v3849
    %4503 = vmatpush2.bf16.msra.mxu0 %v3848
    %4504 = vmatprep.subr.bf16.mxu0 %v3845
    %4505 = vmatpush2.bf16.msra.mxu0 %v3844
    %4506 = vmatprep.subr.bf16.mxu0 %v3841
    %4507 = vmatpush2.bf16.msra.mxu0 %v3840
    %4508 = vmatprep.subr.bf16.mxu0 %v3837
    %4509 = vmatpush2.bf16.msra.mxu0 %v3836
    %4510 = vmatprep.mubr.bf16.mxu0 %v2515
    %4511 = vmatmul.mubr.bf16.gmra.mxu0 %v2514
    %v4512 = vpop.f32.mrf.mxu0
    %v4513 = vadd.f32 0.0, %v4512
    %v4514 = vpop.f32.mrf.mxu0
    %v4515 = vadd.f32 0.0, %v4514
    %v4516 = vpop.f32.mrf.mxu0
    %v4517 = vpop.f32.mrf.mxu0
    %4518 = vdwg.mxu0
    %4519 = vmatprep.subr.bf16.mxu0 %v3897
    %4520 = vmatpush1.bf16.msra.mxu0 %v3896
    %4521 = vmatprep.subr.bf16.mxu0 %v3893
    %4522 = vmatpush1.bf16.msra.mxu0 %v3892
    %4523 = vmatprep.subr.bf16.mxu0 %v3889
    %4524 = vmatpush1.bf16.msra.mxu0 %v3888
    %4525 = vmatprep.subr.bf16.mxu0 %v3885
    %4526 = vmatpush1.bf16.msra.mxu0 %v3884
    %4527 = vmatprep.subr.bf16.mxu0 %v3881
    %4528 = vmatpush1.bf16.msra.mxu0 %v3880
    %4529 = vmatprep.subr.bf16.mxu0 %v3877
    %4530 = vmatpush1.bf16.msra.mxu0 %v3876
    %4531 = vmatprep.subr.bf16.mxu0 %v3873
    %4532 = vmatpush1.bf16.msra.mxu0 %v3872
    %4533 = vmatprep.subr.bf16.mxu0 %v3869
    %4534 = vmatpush1.bf16.msra.mxu0 %v3868
    %4535 = vmatprep.subr.bf16.mxu0 %v3929
    %4536 = vmatpush2.bf16.msra.mxu0 %v3928
    %4537 = vmatprep.subr.bf16.mxu0 %v3925
    %4538 = vmatpush2.bf16.msra.mxu0 %v3924
    %4539 = vmatprep.subr.bf16.mxu0 %v3921
    %4540 = vmatpush2.bf16.msra.mxu0 %v3920
    %4541 = vmatprep.subr.bf16.mxu0 %v3917
    %4542 = vmatpush2.bf16.msra.mxu0 %v3916
    %4543 = vmatprep.subr.bf16.mxu0 %v3913
    %4544 = vmatpush2.bf16.msra.mxu0 %v3912
    %4545 = vmatprep.subr.bf16.mxu0 %v3909
    %4546 = vmatpush2.bf16.msra.mxu0 %v3908
    %4547 = vmatprep.subr.bf16.mxu0 %v3905
    %4548 = vmatpush2.bf16.msra.mxu0 %v3904
    %4549 = vmatprep.subr.bf16.mxu0 %v3901
    %4550 = vmatpush2.bf16.msra.mxu0 %v3900
    %4551 = vmatprep.mubr.bf16.mxu0 %v2517
    %4552 = vmatmul.mubr.bf16.gmra.mxu0 %v2516
    %v4553 = vpop.f32.mrf.mxu0
    %v4554 = vadd.f32 %v4513, %v4553
    %v4555 = vpop.f32.mrf.mxu0
    %v4556 = vadd.f32 %v4515, %v4555
    %v4557 = vpop.f32.mrf.mxu0
    %v4558 = vpop.f32.mrf.mxu0
    %4559 = vdwg.mxu0
    %4560 = vmatprep.subr.bf16.mxu0 %v3961
    %4561 = vmatpush1.bf16.msra.mxu0 %v3960
    %4562 = vmatprep.subr.bf16.mxu0 %v3957
    %4563 = vmatpush1.bf16.msra.mxu0 %v3956
    %4564 = vmatprep.subr.bf16.mxu0 %v3953
    %4565 = vmatpush1.bf16.msra.mxu0 %v3952
    %4566 = vmatprep.subr.bf16.mxu0 %v3949
    %4567 = vmatpush1.bf16.msra.mxu0 %v3948
    %4568 = vmatprep.subr.bf16.mxu0 %v3945
    %4569 = vmatpush1.bf16.msra.mxu0 %v3944
    %4570 = vmatprep.subr.bf16.mxu0 %v3941
    %4571 = vmatpush1.bf16.msra.mxu0 %v3940
    %4572 = vmatprep.subr.bf16.mxu0 %v3937
    %4573 = vmatpush1.bf16.msra.mxu0 %v3936
    %4574 = vmatprep.subr.bf16.mxu0 %v3933
    %4575 = vmatpush1.bf16.msra.mxu0 %v3932
    %4576 = vmatprep.subr.bf16.mxu0 %v3993
    %4577 = vmatpush2.bf16.msra.mxu0 %v3992
    %4578 = vmatprep.subr.bf16.mxu0 %v3989
    %4579 = vmatpush2.bf16.msra.mxu0 %v3988
    %4580 = vmatprep.subr.bf16.mxu0 %v3985
    %4581 = vmatpush2.bf16.msra.mxu0 %v3984
    %4582 = vmatprep.subr.bf16.mxu0 %v3981
    %4583 = vmatpush2.bf16.msra.mxu0 %v3980
    %4584 = vmatprep.subr.bf16.mxu0 %v3977
    %4585 = vmatpush2.bf16.msra.mxu0 %v3976
    %4586 = vmatprep.subr.bf16.mxu0 %v3973
    %4587 = vmatpush2.bf16.msra.mxu0 %v3972
    %4588 = vmatprep.subr.bf16.mxu0 %v3969
    %4589 = vmatpush2.bf16.msra.mxu0 %v3968
    %4590 = vmatprep.subr.bf16.mxu0 %v3965
    %4591 = vmatpush2.bf16.msra.mxu0 %v3964
    %4592 = vmatprep.mubr.bf16.mxu0 %v2519
    %4593 = vmatmul.mubr.bf16.gmra.mxu0 %v2518
    %v4594 = vpop.f32.mrf.mxu0
    %v4595 = vadd.f32 %v4554, %v4594
    %v4596 = vpop.f32.mrf.mxu0
    %v4597 = vadd.f32 %v4556, %v4596
    %v4598 = vpop.f32.mrf.mxu0
    %v4599 = vpop.f32.mrf.mxu0
    %4600 = vdwg.mxu0
    %4601 = vmatprep.subr.bf16.mxu0 %v4025
    %4602 = vmatpush1.bf16.msra.mxu0 %v4024
    %4603 = vmatprep.subr.bf16.mxu0 %v4021
    %4604 = vmatpush1.bf16.msra.mxu0 %v4020
    %4605 = vmatprep.subr.bf16.mxu0 %v4017
    %4606 = vmatpush1.bf16.msra.mxu0 %v4016
    %4607 = vmatprep.subr.bf16.mxu0 %v4013
    %4608 = vmatpush1.bf16.msra.mxu0 %v4012
    %4609 = vmatprep.subr.bf16.mxu0 %v4009
    %4610 = vmatpush1.bf16.msra.mxu0 %v4008
    %4611 = vmatprep.subr.bf16.mxu0 %v4005
    %4612 = vmatpush1.bf16.msra.mxu0 %v4004
    %4613 = vmatprep.subr.bf16.mxu0 %v4001
    %4614 = vmatpush1.bf16.msra.mxu0 %v4000
    %4615 = vmatprep.subr.bf16.mxu0 %v3997
    %4616 = vmatpush1.bf16.msra.mxu0 %v3996
    %4617 = vmatprep.subr.bf16.mxu0 %v4057
    %4618 = vmatpush2.bf16.msra.mxu0 %v4056
    %4619 = vmatprep.subr.bf16.mxu0 %v4053
    %4620 = vmatpush2.bf16.msra.mxu0 %v4052
    %4621 = vmatprep.subr.bf16.mxu0 %v4049
    %4622 = vmatpush2.bf16.msra.mxu0 %v4048
    %4623 = vmatprep.subr.bf16.mxu0 %v4045
    %4624 = vmatpush2.bf16.msra.mxu0 %v4044
    %4625 = vmatprep.subr.bf16.mxu0 %v4041
    %4626 = vmatpush2.bf16.msra.mxu0 %v4040
    %4627 = vmatprep.subr.bf16.mxu0 %v4037
    %4628 = vmatpush2.bf16.msra.mxu0 %v4036
    %4629 = vmatprep.subr.bf16.mxu0 %v4033
    %4630 = vmatpush2.bf16.msra.mxu0 %v4032
    %4631 = vmatprep.subr.bf16.mxu0 %v4029
    %4632 = vmatpush2.bf16.msra.mxu0 %v4028
    %4633 = vmatprep.mubr.bf16.mxu0 %v2521
    %4634 = vmatmul.mubr.bf16.gmra.mxu0 %v2520
    %v4635 = vpop.f32.mrf.mxu0
    %v4636 = vadd.f32 %v4595, %v4635
    %v4637 = vpop.f32.mrf.mxu0
    %v4638 = vadd.f32 %v4597, %v4637
    %v4639 = vpop.f32.mrf.mxu0
    %v4640 = vpop.f32.mrf.mxu0
    %4641 = vdwg.mxu0
    %v4898 = vunpack.c.l.b16 %v2522
    %v4899 = vunpack.c.h.b16 %v2522
    %v4900 = vunpack.c.l.b16 %v2523
    %v4901 = vunpack.c.h.b16 %v2523
    %v4902 = vunpack.c.l.b16 %v2524
    %v4903 = vunpack.c.h.b16 %v2524
    %v4904 = vunpack.c.l.b16 %v2525
    %v4905 = vunpack.c.h.b16 %v2525
    %v4906 = vunpack.c.l.b16 %v2526
    %v4907 = vunpack.c.h.b16 %v2526
    %v4908 = vunpack.c.l.b16 %v2527
    %v4909 = vunpack.c.h.b16 %v2527
    %v4910 = vunpack.c.l.b16 %v2528
    %v4911 = vunpack.c.h.b16 %v2528
    %v4912 = vunpack.c.l.b16 %v2529
    %v4913 = vunpack.c.h.b16 %v2529
    %v4914 = vunpack.c.l.b16 %v2530
    %v4915 = vunpack.c.h.b16 %v2530
    %v4916 = vunpack.c.l.b16 %v2531
    %v4917 = vunpack.c.h.b16 %v2531
    %v4918 = vunpack.c.l.b16 %v2532
    %v4919 = vunpack.c.h.b16 %v2532
    %v4920 = vunpack.c.l.b16 %v2533
    %v4921 = vunpack.c.h.b16 %v2533
    %v4922 = vunpack.c.l.b16 %v2534
    %v4923 = vunpack.c.h.b16 %v2534
    %v4924 = vunpack.c.l.b16 %v2535
    %v4925 = vunpack.c.h.b16 %v2535
    %v4926 = vunpack.c.l.b16 %v2536
    %v4927 = vunpack.c.h.b16 %v2536
    %v4928 = vunpack.c.l.b16 %v2537
    %v4929 = vunpack.c.h.b16 %v2537
    %v4930 = vunpack.c.l.b16 %v2538
    %v4931 = vunpack.c.h.b16 %v2538
    %v4932 = vunpack.c.l.b16 %v2539
    %v4933 = vunpack.c.h.b16 %v2539
    %v4934 = vunpack.c.l.b16 %v2540
    %v4935 = vunpack.c.h.b16 %v2540
    %v4936 = vunpack.c.l.b16 %v2541
    %v4937 = vunpack.c.h.b16 %v2541
    %v4938 = vunpack.c.l.b16 %v2542
    %v4939 = vunpack.c.h.b16 %v2542
    %v4940 = vunpack.c.l.b16 %v2543
    %v4941 = vunpack.c.h.b16 %v2543
    %v4942 = vunpack.c.l.b16 %v2544
    %v4943 = vunpack.c.h.b16 %v2544
    %v4944 = vunpack.c.l.b16 %v2545
    %v4945 = vunpack.c.h.b16 %v2545
    %v4946 = vunpack.c.l.b16 %v2546
    %v4947 = vunpack.c.h.b16 %v2546
    %v4948 = vunpack.c.l.b16 %v2547
    %v4949 = vunpack.c.h.b16 %v2547
    %v4950 = vunpack.c.l.b16 %v2548
    %v4951 = vunpack.c.h.b16 %v2548
    %v4952 = vunpack.c.l.b16 %v2549
    %v4953 = vunpack.c.h.b16 %v2549
    %v4954 = vunpack.c.l.b16 %v2550
    %v4955 = vunpack.c.h.b16 %v2550
    %v4956 = vunpack.c.l.b16 %v2551
    %v4957 = vunpack.c.h.b16 %v2551
    %v4958 = vunpack.c.l.b16 %v2552
    %v4959 = vunpack.c.h.b16 %v2552
    %v4960 = vunpack.c.l.b16 %v2553
    %v4961 = vunpack.c.h.b16 %v2553
    %v4962 = vunpack.c.l.b16 %v2554
    %v4963 = vunpack.c.h.b16 %v2554
    %v4964 = vunpack.c.l.b16 %v2555
    %v4965 = vunpack.c.h.b16 %v2555
    %v4966 = vunpack.c.l.b16 %v2556
    %v4967 = vunpack.c.h.b16 %v2556
    %v4968 = vunpack.c.l.b16 %v2557
    %v4969 = vunpack.c.h.b16 %v2557
    %v4970 = vunpack.c.l.b16 %v2558
    %v4971 = vunpack.c.h.b16 %v2558
    %v4972 = vunpack.c.l.b16 %v2559
    %v4973 = vunpack.c.h.b16 %v2559
    %v4974 = vunpack.c.l.b16 %v2560
    %v4975 = vunpack.c.h.b16 %v2560
    %v4976 = vunpack.c.l.b16 %v2561
    %v4977 = vunpack.c.h.b16 %v2561
    %v4978 = vunpack.c.l.b16 %v2562
    %v4979 = vunpack.c.h.b16 %v2562
    %v4980 = vunpack.c.l.b16 %v2563
    %v4981 = vunpack.c.h.b16 %v2563
    %v4982 = vunpack.c.l.b16 %v2564
    %v4983 = vunpack.c.h.b16 %v2564
    %v4984 = vunpack.c.l.b16 %v2565
    %v4985 = vunpack.c.h.b16 %v2565
    %v4986 = vunpack.c.l.b16 %v2566
    %v4987 = vunpack.c.h.b16 %v2566
    %v4988 = vunpack.c.l.b16 %v2567
    %v4989 = vunpack.c.h.b16 %v2567
    %v4990 = vunpack.c.l.b16 %v2568
    %v4991 = vunpack.c.h.b16 %v2568
    %v4992 = vunpack.c.l.b16 %v2569
    %v4993 = vunpack.c.h.b16 %v2569
    %v4994 = vunpack.c.l.b16 %v2570
    %v4995 = vunpack.c.h.b16 %v2570
    %v4996 = vunpack.c.l.b16 %v2571
    %v4997 = vunpack.c.h.b16 %v2571
    %v4998 = vunpack.c.l.b16 %v2572
    %v4999 = vunpack.c.h.b16 %v2572
    %v5000 = vunpack.c.l.b16 %v2573
    %v5001 = vunpack.c.h.b16 %v2573
    %v5002 = vunpack.c.l.b16 %v2574
    %v5003 = vunpack.c.h.b16 %v2574
    %v5004 = vunpack.c.l.b16 %v2575
    %v5005 = vunpack.c.h.b16 %v2575
    %v5006 = vunpack.c.l.b16 %v2576
    %v5007 = vunpack.c.h.b16 %v2576
    %v5008 = vunpack.c.l.b16 %v2577
    %v5009 = vunpack.c.h.b16 %v2577
    %v5010 = vunpack.c.l.b16 %v2578
    %v5011 = vunpack.c.h.b16 %v2578
    %v5012 = vunpack.c.l.b16 %v2579
    %v5013 = vunpack.c.h.b16 %v2579
    %v5014 = vunpack.c.l.b16 %v2580
    %v5015 = vunpack.c.h.b16 %v2580
    %v5016 = vunpack.c.l.b16 %v2581
    %v5017 = vunpack.c.h.b16 %v2581
    %v5018 = vunpack.c.l.b16 %v2582
    %v5019 = vunpack.c.h.b16 %v2582
    %v5020 = vunpack.c.l.b16 %v2583
    %v5021 = vunpack.c.h.b16 %v2583
    %v5022 = vunpack.c.l.b16 %v2584
    %v5023 = vunpack.c.h.b16 %v2584
    %v5024 = vunpack.c.l.b16 %v2585
    %v5025 = vunpack.c.h.b16 %v2585
    %v5026 = vunpack.c.l.b16 %v2586
    %v5027 = vunpack.c.h.b16 %v2586
    %v5028 = vunpack.c.l.b16 %v2587
    %v5029 = vunpack.c.h.b16 %v2587
    %v5030 = vunpack.c.l.b16 %v2588
    %v5031 = vunpack.c.h.b16 %v2588
    %v5032 = vunpack.c.l.b16 %v2589
    %v5033 = vunpack.c.h.b16 %v2589
    %v5034 = vunpack.c.l.b16 %v2590
    %v5035 = vunpack.c.h.b16 %v2590
    %v5036 = vunpack.c.l.b16 %v2591
    %v5037 = vunpack.c.h.b16 %v2591
    %v5038 = vunpack.c.l.b16 %v2592
    %v5039 = vunpack.c.h.b16 %v2592
    %v5040 = vunpack.c.l.b16 %v2593
    %v5041 = vunpack.c.h.b16 %v2593
    %v5042 = vunpack.c.l.b16 %v2594
    %v5043 = vunpack.c.h.b16 %v2594
    %v5044 = vunpack.c.l.b16 %v2595
    %v5045 = vunpack.c.h.b16 %v2595
    %v5046 = vunpack.c.l.b16 %v2596
    %v5047 = vunpack.c.h.b16 %v2596
    %v5048 = vunpack.c.l.b16 %v2597
    %v5049 = vunpack.c.h.b16 %v2597
    %v5050 = vunpack.c.l.b16 %v2598
    %v5051 = vunpack.c.h.b16 %v2598
    %v5052 = vunpack.c.l.b16 %v2599
    %v5053 = vunpack.c.h.b16 %v2599
    %v5054 = vunpack.c.l.b16 %v2600
    %v5055 = vunpack.c.h.b16 %v2600
    %v5056 = vunpack.c.l.b16 %v2601
    %v5057 = vunpack.c.h.b16 %v2601
    %v5058 = vunpack.c.l.b16 %v2602
    %v5059 = vunpack.c.h.b16 %v2602
    %v5060 = vunpack.c.l.b16 %v2603
    %v5061 = vunpack.c.h.b16 %v2603
    %v5062 = vunpack.c.l.b16 %v2604
    %v5063 = vunpack.c.h.b16 %v2604
    %v5064 = vunpack.c.l.b16 %v2605
    %v5065 = vunpack.c.h.b16 %v2605
    %v5066 = vunpack.c.l.b16 %v2606
    %v5067 = vunpack.c.h.b16 %v2606
    %v5068 = vunpack.c.l.b16 %v2607
    %v5069 = vunpack.c.h.b16 %v2607
    %v5070 = vunpack.c.l.b16 %v2608
    %v5071 = vunpack.c.h.b16 %v2608
    %v5072 = vunpack.c.l.b16 %v2609
    %v5073 = vunpack.c.h.b16 %v2609
    %v5074 = vunpack.c.l.b16 %v2610
    %v5075 = vunpack.c.h.b16 %v2610
    %v5076 = vunpack.c.l.b16 %v2611
    %v5077 = vunpack.c.h.b16 %v2611
    %v5078 = vunpack.c.l.b16 %v2612
    %v5079 = vunpack.c.h.b16 %v2612
    %v5080 = vunpack.c.l.b16 %v2613
    %v5081 = vunpack.c.h.b16 %v2613
    %v5082 = vunpack.c.l.b16 %v2614
    %v5083 = vunpack.c.h.b16 %v2614
    %v5084 = vunpack.c.l.b16 %v2615
    %v5085 = vunpack.c.h.b16 %v2615
    %v5086 = vunpack.c.l.b16 %v2616
    %v5087 = vunpack.c.h.b16 %v2616
    %v5088 = vunpack.c.l.b16 %v2617
    %v5089 = vunpack.c.h.b16 %v2617
    %v5090 = vunpack.c.l.b16 %v2618
    %v5091 = vunpack.c.h.b16 %v2618
    %v5092 = vunpack.c.l.b16 %v2619
    %v5093 = vunpack.c.h.b16 %v2619
    %v5094 = vunpack.c.l.b16 %v2620
    %v5095 = vunpack.c.h.b16 %v2620
    %v5096 = vunpack.c.l.b16 %v2621
    %v5097 = vunpack.c.h.b16 %v2621
    %v5098 = vunpack.c.l.b16 %v2622
    %v5099 = vunpack.c.h.b16 %v2622
    %v5100 = vunpack.c.l.b16 %v2623
    %v5101 = vunpack.c.h.b16 %v2623
    %v5102 = vunpack.c.l.b16 %v2624
    %v5103 = vunpack.c.h.b16 %v2624
    %v5104 = vunpack.c.l.b16 %v2625
    %v5105 = vunpack.c.h.b16 %v2625
    %v5106 = vunpack.c.l.b16 %v2626
    %v5107 = vunpack.c.h.b16 %v2626
    %v5108 = vunpack.c.l.b16 %v2627
    %v5109 = vunpack.c.h.b16 %v2627
    %v5110 = vunpack.c.l.b16 %v2628
    %v5111 = vunpack.c.h.b16 %v2628
    %v5112 = vunpack.c.l.b16 %v2629
    %v5113 = vunpack.c.h.b16 %v2629
    %v5114 = vunpack.c.l.b16 %v2630
    %v5115 = vunpack.c.h.b16 %v2630
    %v5116 = vunpack.c.l.b16 %v2631
    %v5117 = vunpack.c.h.b16 %v2631
    %v5118 = vunpack.c.l.b16 %v2632
    %v5119 = vunpack.c.h.b16 %v2632
    %v5120 = vunpack.c.l.b16 %v2633
    %v5121 = vunpack.c.h.b16 %v2633
    %v5122 = vunpack.c.l.b16 %v2634
    %v5123 = vunpack.c.h.b16 %v2634
    %v5124 = vunpack.c.l.b16 %v2635
    %v5125 = vunpack.c.h.b16 %v2635
    %v5126 = vunpack.c.l.b16 %v2636
    %v5127 = vunpack.c.h.b16 %v2636
    %v5128 = vunpack.c.l.b16 %v2637
    %v5129 = vunpack.c.h.b16 %v2637
    %v5130 = vunpack.c.l.b16 %v2638
    %v5131 = vunpack.c.h.b16 %v2638
    %v5132 = vunpack.c.l.b16 %v2639
    %v5133 = vunpack.c.h.b16 %v2639
    %v5134 = vunpack.c.l.b16 %v2640
    %v5135 = vunpack.c.h.b16 %v2640
    %v5136 = vunpack.c.l.b16 %v2641
    %v5137 = vunpack.c.h.b16 %v2641
    %v5138 = vunpack.c.l.b16 %v2642
    %v5139 = vunpack.c.h.b16 %v2642
    %v5140 = vunpack.c.l.b16 %v2643
    %v5141 = vunpack.c.h.b16 %v2643
    %v5142 = vunpack.c.l.b16 %v2644
    %v5143 = vunpack.c.h.b16 %v2644
    %v5144 = vunpack.c.l.b16 %v2645
    %v5145 = vunpack.c.h.b16 %v2645
    %v5146 = vunpack.c.l.b16 %v2646
    %v5147 = vunpack.c.h.b16 %v2646
    %v5148 = vunpack.c.l.b16 %v2647
    %v5149 = vunpack.c.h.b16 %v2647
    %v5150 = vunpack.c.l.b16 %v2648
    %v5151 = vunpack.c.h.b16 %v2648
    %v5152 = vunpack.c.l.b16 %v2649
    %v5153 = vunpack.c.h.b16 %v2649
    %v5154 = vunpack.c.l.b16 %v2650
    %v5155 = vunpack.c.h.b16 %v2650
    %v5156 = vunpack.c.l.b16 %v2651
    %v5157 = vunpack.c.h.b16 %v2651
    %v5158 = vunpack.c.l.b16 %v2652
    %v5159 = vunpack.c.h.b16 %v2652
    %v5160 = vunpack.c.l.b16 %v2653
    %v5161 = vunpack.c.h.b16 %v2653
    %v5162 = vunpack.c.l.b16 %v2654
    %v5163 = vunpack.c.h.b16 %v2654
    %v5164 = vunpack.c.l.b16 %v2655
    %v5165 = vunpack.c.h.b16 %v2655
    %v5166 = vunpack.c.l.b16 %v2656
    %v5167 = vunpack.c.h.b16 %v2656
    %v5168 = vunpack.c.l.b16 %v2657
    %v5169 = vunpack.c.h.b16 %v2657
    %v5170 = vunpack.c.l.b16 %v2658
    %v5171 = vunpack.c.h.b16 %v2658
    %v5172 = vunpack.c.l.b16 %v2659
    %v5173 = vunpack.c.h.b16 %v2659
    %v5174 = vunpack.c.l.b16 %v2660
    %v5175 = vunpack.c.h.b16 %v2660
    %v5176 = vunpack.c.l.b16 %v2661
    %v5177 = vunpack.c.h.b16 %v2661
    %v5178 = vunpack.c.l.b16 %v2662
    %v5179 = vunpack.c.h.b16 %v2662
    %v5180 = vunpack.c.l.b16 %v2663
    %v5181 = vunpack.c.h.b16 %v2663
    %v5182 = vunpack.c.l.b16 %v2664
    %v5183 = vunpack.c.h.b16 %v2664
    %v5184 = vunpack.c.l.b16 %v2665
    %v5185 = vunpack.c.h.b16 %v2665
    %v5186 = vunpack.c.l.b16 %v2666
    %v5187 = vunpack.c.h.b16 %v2666
    %v5188 = vunpack.c.l.b16 %v2667
    %v5189 = vunpack.c.h.b16 %v2667
    %v5190 = vunpack.c.l.b16 %v2668
    %v5191 = vunpack.c.h.b16 %v2668
    %v5192 = vunpack.c.l.b16 %v2669
    %v5193 = vunpack.c.h.b16 %v2669
    %v5194 = vunpack.c.l.b16 %v2670
    %v5195 = vunpack.c.h.b16 %v2670
    %v5196 = vunpack.c.l.b16 %v2671
    %v5197 = vunpack.c.h.b16 %v2671
    %v5198 = vunpack.c.l.b16 %v2672
    %v5199 = vunpack.c.h.b16 %v2672
    %v5200 = vunpack.c.l.b16 %v2673
    %v5201 = vunpack.c.h.b16 %v2673
    %v5202 = vunpack.c.l.b16 %v2674
    %v5203 = vunpack.c.h.b16 %v2674
    %v5204 = vunpack.c.l.b16 %v2675
    %v5205 = vunpack.c.h.b16 %v2675
    %v5206 = vunpack.c.l.b16 %v2676
    %v5207 = vunpack.c.h.b16 %v2676
    %v5208 = vunpack.c.l.b16 %v2677
    %v5209 = vunpack.c.h.b16 %v2677
    %v5210 = vunpack.c.l.b16 %v2678
    %v5211 = vunpack.c.h.b16 %v2678
    %v5212 = vunpack.c.l.b16 %v2679
    %v5213 = vunpack.c.h.b16 %v2679
    %v5214 = vunpack.c.l.b16 %v2680
    %v5215 = vunpack.c.h.b16 %v2680
    %v5216 = vunpack.c.l.b16 %v2681
    %v5217 = vunpack.c.h.b16 %v2681
    %v5218 = vunpack.c.l.b16 %v2682
    %v5219 = vunpack.c.h.b16 %v2682
    %v5220 = vunpack.c.l.b16 %v2683
    %v5221 = vunpack.c.h.b16 %v2683
    %v5222 = vunpack.c.l.b16 %v2684
    %v5223 = vunpack.c.h.b16 %v2684
    %v5224 = vunpack.c.l.b16 %v2685
    %v5225 = vunpack.c.h.b16 %v2685
    %v5226 = vunpack.c.l.b16 %v2686
    %v5227 = vunpack.c.h.b16 %v2686
    %v5228 = vunpack.c.l.b16 %v2687
    %v5229 = vunpack.c.h.b16 %v2687
    %v5230 = vunpack.c.l.b16 %v2688
    %v5231 = vunpack.c.h.b16 %v2688
    %v5232 = vunpack.c.l.b16 %v2689
    %v5233 = vunpack.c.h.b16 %v2689
    %v5234 = vunpack.c.l.b16 %v2690
    %v5235 = vunpack.c.h.b16 %v2690
    %v5236 = vunpack.c.l.b16 %v2691
    %v5237 = vunpack.c.h.b16 %v2691
    %v5238 = vunpack.c.l.b16 %v2692
    %v5239 = vunpack.c.h.b16 %v2692
    %v5240 = vunpack.c.l.b16 %v2693
    %v5241 = vunpack.c.h.b16 %v2693
    %v5242 = vunpack.c.l.b16 %v2694
    %v5243 = vunpack.c.h.b16 %v2694
    %v5244 = vunpack.c.l.b16 %v2695
    %v5245 = vunpack.c.h.b16 %v2695
    %v5246 = vunpack.c.l.b16 %v2696
    %v5247 = vunpack.c.h.b16 %v2696
    %v5248 = vunpack.c.l.b16 %v2697
    %v5249 = vunpack.c.h.b16 %v2697
    %v5250 = vunpack.c.l.b16 %v2698
    %v5251 = vunpack.c.h.b16 %v2698
    %v5252 = vunpack.c.l.b16 %v2699
    %v5253 = vunpack.c.h.b16 %v2699
    %v5254 = vunpack.c.l.b16 %v2700
    %v5255 = vunpack.c.h.b16 %v2700
    %v5256 = vunpack.c.l.b16 %v2701
    %v5257 = vunpack.c.h.b16 %v2701
    %v5258 = vunpack.c.l.b16 %v2702
    %v5259 = vunpack.c.h.b16 %v2702
    %v5260 = vunpack.c.l.b16 %v2703
    %v5261 = vunpack.c.h.b16 %v2703
    %v5262 = vunpack.c.l.b16 %v2704
    %v5263 = vunpack.c.h.b16 %v2704
    %v5264 = vunpack.c.l.b16 %v2705
    %v5265 = vunpack.c.h.b16 %v2705
    %v5266 = vunpack.c.l.b16 %v2706
    %v5267 = vunpack.c.h.b16 %v2706
    %v5268 = vunpack.c.l.b16 %v2707
    %v5269 = vunpack.c.h.b16 %v2707
    %v5270 = vunpack.c.l.b16 %v2708
    %v5271 = vunpack.c.h.b16 %v2708
    %v5272 = vunpack.c.l.b16 %v2709
    %v5273 = vunpack.c.h.b16 %v2709
    %v5274 = vunpack.c.l.b16 %v2710
    %v5275 = vunpack.c.h.b16 %v2710
    %v5276 = vunpack.c.l.b16 %v2711
    %v5277 = vunpack.c.h.b16 %v2711
    %v5278 = vunpack.c.l.b16 %v2712
    %v5279 = vunpack.c.h.b16 %v2712
    %v5280 = vunpack.c.l.b16 %v2713
    %v5281 = vunpack.c.h.b16 %v2713
    %v5282 = vunpack.c.l.b16 %v2714
    %v5283 = vunpack.c.h.b16 %v2714
    %v5284 = vunpack.c.l.b16 %v2715
    %v5285 = vunpack.c.h.b16 %v2715
    %v5286 = vunpack.c.l.b16 %v2716
    %v5287 = vunpack.c.h.b16 %v2716
    %v5288 = vunpack.c.l.b16 %v2717
    %v5289 = vunpack.c.h.b16 %v2717
    %v5290 = vunpack.c.l.b16 %v2718
    %v5291 = vunpack.c.h.b16 %v2718
    %v5292 = vunpack.c.l.b16 %v2719
    %v5293 = vunpack.c.h.b16 %v2719
    %v5294 = vunpack.c.l.b16 %v2720
    %v5295 = vunpack.c.h.b16 %v2720
    %v5296 = vunpack.c.l.b16 %v2721
    %v5297 = vunpack.c.h.b16 %v2721
    %v5298 = vunpack.c.l.b16 %v2722
    %v5299 = vunpack.c.h.b16 %v2722
    %v5300 = vunpack.c.l.b16 %v2723
    %v5301 = vunpack.c.h.b16 %v2723
    %v5302 = vunpack.c.l.b16 %v2724
    %v5303 = vunpack.c.h.b16 %v2724
    %v5304 = vunpack.c.l.b16 %v2725
    %v5305 = vunpack.c.h.b16 %v2725
    %v5306 = vunpack.c.l.b16 %v2726
    %v5307 = vunpack.c.h.b16 %v2726
    %v5308 = vunpack.c.l.b16 %v2727
    %v5309 = vunpack.c.h.b16 %v2727
    %v5310 = vunpack.c.l.b16 %v2728
    %v5311 = vunpack.c.h.b16 %v2728
    %v5312 = vunpack.c.l.b16 %v2729
    %v5313 = vunpack.c.h.b16 %v2729
    %v5314 = vunpack.c.l.b16 %v2730
    %v5315 = vunpack.c.h.b16 %v2730
    %v5316 = vunpack.c.l.b16 %v2731
    %v5317 = vunpack.c.h.b16 %v2731
    %v5318 = vunpack.c.l.b16 %v2732
    %v5319 = vunpack.c.h.b16 %v2732
    %v5320 = vunpack.c.l.b16 %v2733
    %v5321 = vunpack.c.h.b16 %v2733
    %v5322 = vunpack.c.l.b16 %v2734
    %v5323 = vunpack.c.h.b16 %v2734
    %v5324 = vunpack.c.l.b16 %v2735
    %v5325 = vunpack.c.h.b16 %v2735
    %v5326 = vunpack.c.l.b16 %v2736
    %v5327 = vunpack.c.h.b16 %v2736
    %v5328 = vunpack.c.l.b16 %v2737
    %v5329 = vunpack.c.h.b16 %v2737
    %v5330 = vunpack.c.l.b16 %v2738
    %v5331 = vunpack.c.h.b16 %v2738
    %v5332 = vunpack.c.l.b16 %v2739
    %v5333 = vunpack.c.h.b16 %v2739
    %v5334 = vunpack.c.l.b16 %v2740
    %v5335 = vunpack.c.h.b16 %v2740
    %v5336 = vunpack.c.l.b16 %v2741
    %v5337 = vunpack.c.h.b16 %v2741
    %v5338 = vunpack.c.l.b16 %v2742
    %v5339 = vunpack.c.h.b16 %v2742
    %v5340 = vunpack.c.l.b16 %v2743
    %v5341 = vunpack.c.h.b16 %v2743
    %v5342 = vunpack.c.l.b16 %v2744
    %v5343 = vunpack.c.h.b16 %v2744
    %v5344 = vunpack.c.l.b16 %v2745
    %v5345 = vunpack.c.h.b16 %v2745
    %v5346 = vunpack.c.l.b16 %v2746
    %v5347 = vunpack.c.h.b16 %v2746
    %v5348 = vunpack.c.l.b16 %v2747
    %v5349 = vunpack.c.h.b16 %v2747
    %v5350 = vunpack.c.l.b16 %v2748
    %v5351 = vunpack.c.h.b16 %v2748
    %v5352 = vunpack.c.l.b16 %v2749
    %v5353 = vunpack.c.h.b16 %v2749
    %v5354 = vunpack.c.l.b16 %v2750
    %v5355 = vunpack.c.h.b16 %v2750
    %v5356 = vunpack.c.l.b16 %v2751
    %v5357 = vunpack.c.h.b16 %v2751
    %v5358 = vunpack.c.l.b16 %v2752
    %v5359 = vunpack.c.h.b16 %v2752
    %v5360 = vunpack.c.l.b16 %v2753
    %v5361 = vunpack.c.h.b16 %v2753
    %v5362 = vunpack.c.l.b16 %v2754
    %v5363 = vunpack.c.h.b16 %v2754
    %v5364 = vunpack.c.l.b16 %v2755
    %v5365 = vunpack.c.h.b16 %v2755
    %v5366 = vunpack.c.l.b16 %v2756
    %v5367 = vunpack.c.h.b16 %v2756
    %v5368 = vunpack.c.l.b16 %v2757
    %v5369 = vunpack.c.h.b16 %v2757
    %v5370 = vunpack.c.l.b16 %v2758
    %v5371 = vunpack.c.h.b16 %v2758
    %v5372 = vunpack.c.l.b16 %v2759
    %v5373 = vunpack.c.h.b16 %v2759
    %v5374 = vunpack.c.l.b16 %v2760
    %v5375 = vunpack.c.h.b16 %v2760
    %v5376 = vunpack.c.l.b16 %v2761
    %v5377 = vunpack.c.h.b16 %v2761
    %v5378 = vunpack.c.l.b16 %v2762
    %v5379 = vunpack.c.h.b16 %v2762
    %v5380 = vunpack.c.l.b16 %v2763
    %v5381 = vunpack.c.h.b16 %v2763
    %v5382 = vunpack.c.l.b16 %v2764
    %v5383 = vunpack.c.h.b16 %v2764
    %v5384 = vunpack.c.l.b16 %v2765
    %v5385 = vunpack.c.h.b16 %v2765
    %v5386 = vunpack.c.l.b16 %v2766
    %v5387 = vunpack.c.h.b16 %v2766
    %v5388 = vunpack.c.l.b16 %v2767
    %v5389 = vunpack.c.h.b16 %v2767
    %v5390 = vunpack.c.l.b16 %v2768
    %v5391 = vunpack.c.h.b16 %v2768
    %v5392 = vunpack.c.l.b16 %v2769
    %v5393 = vunpack.c.h.b16 %v2769
    %v5394 = vunpack.c.l.b16 %v2770
    %v5395 = vunpack.c.h.b16 %v2770
    %v5396 = vunpack.c.l.b16 %v2771
    %v5397 = vunpack.c.h.b16 %v2771
    %v5398 = vunpack.c.l.b16 %v2772
    %v5399 = vunpack.c.h.b16 %v2772
    %v5400 = vunpack.c.l.b16 %v2773
    %v5401 = vunpack.c.h.b16 %v2773
    %v5402 = vunpack.c.l.b16 %v2774
    %v5403 = vunpack.c.h.b16 %v2774
    %v5404 = vunpack.c.l.b16 %v2775
    %v5405 = vunpack.c.h.b16 %v2775
    %v5406 = vunpack.c.l.b16 %v2776
    %v5407 = vunpack.c.h.b16 %v2776
    %v5408 = vunpack.c.l.b16 %v2777
    %v5409 = vunpack.c.h.b16 %v2777
    %v5410 = vpack.c.b16 %v4902, %v4898
    %v5411 = vpack.c.b16 %v4903, %v4899
    %v5412 = vpack.c.b16 %v4904, %v4900
    %v5413 = vpack.c.b16 %v4905, %v4901
    %v5414 = vpack.c.b16 %v4910, %v4906
    %v5415 = vpack.c.b16 %v4911, %v4907
    %v5416 = vpack.c.b16 %v4912, %v4908
    %v5417 = vpack.c.b16 %v4913, %v4909
    %v5418 = vpack.c.b16 %v4918, %v4914
    %v5419 = vpack.c.b16 %v4919, %v4915
    %v5420 = vpack.c.b16 %v4920, %v4916
    %v5421 = vpack.c.b16 %v4921, %v4917
    %v5422 = vpack.c.b16 %v4926, %v4922
    %v5423 = vpack.c.b16 %v4927, %v4923
    %v5424 = vpack.c.b16 %v4928, %v4924
    %v5425 = vpack.c.b16 %v4929, %v4925
    %v5426 = vpack.c.b16 %v4934, %v4930
    %v5427 = vpack.c.b16 %v4935, %v4931
    %v5428 = vpack.c.b16 %v4936, %v4932
    %v5429 = vpack.c.b16 %v4937, %v4933
    %v5430 = vpack.c.b16 %v4942, %v4938
    %v5431 = vpack.c.b16 %v4943, %v4939
    %v5432 = vpack.c.b16 %v4944, %v4940
    %v5433 = vpack.c.b16 %v4945, %v4941
    %v5434 = vpack.c.b16 %v4950, %v4946
    %v5435 = vpack.c.b16 %v4951, %v4947
    %v5436 = vpack.c.b16 %v4952, %v4948
    %v5437 = vpack.c.b16 %v4953, %v4949
    %v5438 = vpack.c.b16 %v4958, %v4954
    %v5439 = vpack.c.b16 %v4959, %v4955
    %v5440 = vpack.c.b16 %v4960, %v4956
    %v5441 = vpack.c.b16 %v4961, %v4957
    %v5442 = vpack.c.b16 %v4966, %v4962
    %v5443 = vpack.c.b16 %v4967, %v4963
    %v5444 = vpack.c.b16 %v4968, %v4964
    %v5445 = vpack.c.b16 %v4969, %v4965
    %v5446 = vpack.c.b16 %v4974, %v4970
    %v5447 = vpack.c.b16 %v4975, %v4971
    %v5448 = vpack.c.b16 %v4976, %v4972
    %v5449 = vpack.c.b16 %v4977, %v4973
    %v5450 = vpack.c.b16 %v4982, %v4978
    %v5451 = vpack.c.b16 %v4983, %v4979
    %v5452 = vpack.c.b16 %v4984, %v4980
    %v5453 = vpack.c.b16 %v4985, %v4981
    %v5454 = vpack.c.b16 %v4990, %v4986
    %v5455 = vpack.c.b16 %v4991, %v4987
    %v5456 = vpack.c.b16 %v4992, %v4988
    %v5457 = vpack.c.b16 %v4993, %v4989
    %v5458 = vpack.c.b16 %v4998, %v4994
    %v5459 = vpack.c.b16 %v4999, %v4995
    %v5460 = vpack.c.b16 %v5000, %v4996
    %v5461 = vpack.c.b16 %v5001, %v4997
    %v5462 = vpack.c.b16 %v5006, %v5002
    %v5463 = vpack.c.b16 %v5007, %v5003
    %v5464 = vpack.c.b16 %v5008, %v5004
    %v5465 = vpack.c.b16 %v5009, %v5005
    %v5466 = vpack.c.b16 %v5014, %v5010
    %v5467 = vpack.c.b16 %v5015, %v5011
    %v5468 = vpack.c.b16 %v5016, %v5012
    %v5469 = vpack.c.b16 %v5017, %v5013
    %v5470 = vpack.c.b16 %v5022, %v5018
    %v5471 = vpack.c.b16 %v5023, %v5019
    %v5472 = vpack.c.b16 %v5024, %v5020
    %v5473 = vpack.c.b16 %v5025, %v5021
    %v5474 = vpack.c.b16 %v5030, %v5026
    %v5475 = vpack.c.b16 %v5031, %v5027
    %v5476 = vpack.c.b16 %v5032, %v5028
    %v5477 = vpack.c.b16 %v5033, %v5029
    %v5478 = vpack.c.b16 %v5038, %v5034
    %v5479 = vpack.c.b16 %v5039, %v5035
    %v5480 = vpack.c.b16 %v5040, %v5036
    %v5481 = vpack.c.b16 %v5041, %v5037
    %v5482 = vpack.c.b16 %v5046, %v5042
    %v5483 = vpack.c.b16 %v5047, %v5043
    %v5484 = vpack.c.b16 %v5048, %v5044
    %v5485 = vpack.c.b16 %v5049, %v5045
    %v5486 = vpack.c.b16 %v5054, %v5050
    %v5487 = vpack.c.b16 %v5055, %v5051
    %v5488 = vpack.c.b16 %v5056, %v5052
    %v5489 = vpack.c.b16 %v5057, %v5053
    %v5490 = vpack.c.b16 %v5062, %v5058
    %v5491 = vpack.c.b16 %v5063, %v5059
    %v5492 = vpack.c.b16 %v5064, %v5060
    %v5493 = vpack.c.b16 %v5065, %v5061
    %v5494 = vpack.c.b16 %v5070, %v5066
    %v5495 = vpack.c.b16 %v5071, %v5067
    %v5496 = vpack.c.b16 %v5072, %v5068
    %v5497 = vpack.c.b16 %v5073, %v5069
    %v5498 = vpack.c.b16 %v5078, %v5074
    %v5499 = vpack.c.b16 %v5079, %v5075
    %v5500 = vpack.c.b16 %v5080, %v5076
    %v5501 = vpack.c.b16 %v5081, %v5077
    %v5502 = vpack.c.b16 %v5086, %v5082
    %v5503 = vpack.c.b16 %v5087, %v5083
    %v5504 = vpack.c.b16 %v5088, %v5084
    %v5505 = vpack.c.b16 %v5089, %v5085
    %v5506 = vpack.c.b16 %v5094, %v5090
    %v5507 = vpack.c.b16 %v5095, %v5091
    %v5508 = vpack.c.b16 %v5096, %v5092
    %v5509 = vpack.c.b16 %v5097, %v5093
    %v5510 = vpack.c.b16 %v5102, %v5098
    %v5511 = vpack.c.b16 %v5103, %v5099
    %v5512 = vpack.c.b16 %v5104, %v5100
    %v5513 = vpack.c.b16 %v5105, %v5101
    %v5514 = vpack.c.b16 %v5110, %v5106
    %v5515 = vpack.c.b16 %v5111, %v5107
    %v5516 = vpack.c.b16 %v5112, %v5108
    %v5517 = vpack.c.b16 %v5113, %v5109
    %v5518 = vpack.c.b16 %v5118, %v5114
    %v5519 = vpack.c.b16 %v5119, %v5115
    %v5520 = vpack.c.b16 %v5120, %v5116
    %v5521 = vpack.c.b16 %v5121, %v5117
    %v5522 = vpack.c.b16 %v5126, %v5122
    %v5523 = vpack.c.b16 %v5127, %v5123
    %v5524 = vpack.c.b16 %v5128, %v5124
    %v5525 = vpack.c.b16 %v5129, %v5125
    %v5526 = vpack.c.b16 %v5134, %v5130
    %v5527 = vpack.c.b16 %v5135, %v5131
    %v5528 = vpack.c.b16 %v5136, %v5132
    %v5529 = vpack.c.b16 %v5137, %v5133
    %v5530 = vpack.c.b16 %v5142, %v5138
    %v5531 = vpack.c.b16 %v5143, %v5139
    %v5532 = vpack.c.b16 %v5144, %v5140
    %v5533 = vpack.c.b16 %v5145, %v5141
    %v5534 = vpack.c.b16 %v5150, %v5146
    %v5535 = vpack.c.b16 %v5151, %v5147
    %v5536 = vpack.c.b16 %v5152, %v5148
    %v5537 = vpack.c.b16 %v5153, %v5149
    %v5538 = vpack.c.b16 %v5158, %v5154
    %v5539 = vpack.c.b16 %v5159, %v5155
    %v5540 = vpack.c.b16 %v5160, %v5156
    %v5541 = vpack.c.b16 %v5161, %v5157
    %v5542 = vpack.c.b16 %v5166, %v5162
    %v5543 = vpack.c.b16 %v5167, %v5163
    %v5544 = vpack.c.b16 %v5168, %v5164
    %v5545 = vpack.c.b16 %v5169, %v5165
    %v5546 = vpack.c.b16 %v5174, %v5170
    %v5547 = vpack.c.b16 %v5175, %v5171
    %v5548 = vpack.c.b16 %v5176, %v5172
    %v5549 = vpack.c.b16 %v5177, %v5173
    %v5550 = vpack.c.b16 %v5182, %v5178
    %v5551 = vpack.c.b16 %v5183, %v5179
    %v5552 = vpack.c.b16 %v5184, %v5180
    %v5553 = vpack.c.b16 %v5185, %v5181
    %v5554 = vpack.c.b16 %v5190, %v5186
    %v5555 = vpack.c.b16 %v5191, %v5187
    %v5556 = vpack.c.b16 %v5192, %v5188
    %v5557 = vpack.c.b16 %v5193, %v5189
    %v5558 = vpack.c.b16 %v5198, %v5194
    %v5559 = vpack.c.b16 %v5199, %v5195
    %v5560 = vpack.c.b16 %v5200, %v5196
    %v5561 = vpack.c.b16 %v5201, %v5197
    %v5562 = vpack.c.b16 %v5206, %v5202
    %v5563 = vpack.c.b16 %v5207, %v5203
    %v5564 = vpack.c.b16 %v5208, %v5204
    %v5565 = vpack.c.b16 %v5209, %v5205
    %v5566 = vpack.c.b16 %v5214, %v5210
    %v5567 = vpack.c.b16 %v5215, %v5211
    %v5568 = vpack.c.b16 %v5216, %v5212
    %v5569 = vpack.c.b16 %v5217, %v5213
    %v5570 = vpack.c.b16 %v5222, %v5218
    %v5571 = vpack.c.b16 %v5223, %v5219
    %v5572 = vpack.c.b16 %v5224, %v5220
    %v5573 = vpack.c.b16 %v5225, %v5221
    %v5574 = vpack.c.b16 %v5230, %v5226
    %v5575 = vpack.c.b16 %v5231, %v5227
    %v5576 = vpack.c.b16 %v5232, %v5228
    %v5577 = vpack.c.b16 %v5233, %v5229
    %v5578 = vpack.c.b16 %v5238, %v5234
    %v5579 = vpack.c.b16 %v5239, %v5235
    %v5580 = vpack.c.b16 %v5240, %v5236
    %v5581 = vpack.c.b16 %v5241, %v5237
    %v5582 = vpack.c.b16 %v5246, %v5242
    %v5583 = vpack.c.b16 %v5247, %v5243
    %v5584 = vpack.c.b16 %v5248, %v5244
    %v5585 = vpack.c.b16 %v5249, %v5245
    %v5586 = vpack.c.b16 %v5254, %v5250
    %v5587 = vpack.c.b16 %v5255, %v5251
    %v5588 = vpack.c.b16 %v5256, %v5252
    %v5589 = vpack.c.b16 %v5257, %v5253
    %v5590 = vpack.c.b16 %v5262, %v5258
    %v5591 = vpack.c.b16 %v5263, %v5259
    %v5592 = vpack.c.b16 %v5264, %v5260
    %v5593 = vpack.c.b16 %v5265, %v5261
    %v5594 = vpack.c.b16 %v5270, %v5266
    %v5595 = vpack.c.b16 %v5271, %v5267
    %v5596 = vpack.c.b16 %v5272, %v5268
    %v5597 = vpack.c.b16 %v5273, %v5269
    %v5598 = vpack.c.b16 %v5278, %v5274
    %v5599 = vpack.c.b16 %v5279, %v5275
    %v5600 = vpack.c.b16 %v5280, %v5276
    %v5601 = vpack.c.b16 %v5281, %v5277
    %v5602 = vpack.c.b16 %v5286, %v5282
    %v5603 = vpack.c.b16 %v5287, %v5283
    %v5604 = vpack.c.b16 %v5288, %v5284
    %v5605 = vpack.c.b16 %v5289, %v5285
    %v5606 = vpack.c.b16 %v5294, %v5290
    %v5607 = vpack.c.b16 %v5295, %v5291
    %v5608 = vpack.c.b16 %v5296, %v5292
    %v5609 = vpack.c.b16 %v5297, %v5293
    %v5610 = vpack.c.b16 %v5302, %v5298
    %v5611 = vpack.c.b16 %v5303, %v5299
    %v5612 = vpack.c.b16 %v5304, %v5300
    %v5613 = vpack.c.b16 %v5305, %v5301
    %v5614 = vpack.c.b16 %v5310, %v5306
    %v5615 = vpack.c.b16 %v5311, %v5307
    %v5616 = vpack.c.b16 %v5312, %v5308
    %v5617 = vpack.c.b16 %v5313, %v5309
    %v5618 = vpack.c.b16 %v5318, %v5314
    %v5619 = vpack.c.b16 %v5319, %v5315
    %v5620 = vpack.c.b16 %v5320, %v5316
    %v5621 = vpack.c.b16 %v5321, %v5317
    %v5622 = vpack.c.b16 %v5326, %v5322
    %v5623 = vpack.c.b16 %v5327, %v5323
    %v5624 = vpack.c.b16 %v5328, %v5324
    %v5625 = vpack.c.b16 %v5329, %v5325
    %v5626 = vpack.c.b16 %v5334, %v5330
    %v5627 = vpack.c.b16 %v5335, %v5331
    %v5628 = vpack.c.b16 %v5336, %v5332
    %v5629 = vpack.c.b16 %v5337, %v5333
    %v5630 = vpack.c.b16 %v5342, %v5338
    %v5631 = vpack.c.b16 %v5343, %v5339
    %v5632 = vpack.c.b16 %v5344, %v5340
    %v5633 = vpack.c.b16 %v5345, %v5341
    %v5634 = vpack.c.b16 %v5350, %v5346
    %v5635 = vpack.c.b16 %v5351, %v5347
    %v5636 = vpack.c.b16 %v5352, %v5348
    %v5637 = vpack.c.b16 %v5353, %v5349
    %v5638 = vpack.c.b16 %v5358, %v5354
    %v5639 = vpack.c.b16 %v5359, %v5355
    %v5640 = vpack.c.b16 %v5360, %v5356
    %v5641 = vpack.c.b16 %v5361, %v5357
    %v5642 = vpack.c.b16 %v5366, %v5362
    %v5643 = vpack.c.b16 %v5367, %v5363
    %v5644 = vpack.c.b16 %v5368, %v5364
    %v5645 = vpack.c.b16 %v5369, %v5365
    %v5646 = vpack.c.b16 %v5374, %v5370
    %v5647 = vpack.c.b16 %v5375, %v5371
    %v5648 = vpack.c.b16 %v5376, %v5372
    %v5649 = vpack.c.b16 %v5377, %v5373
    %v5650 = vpack.c.b16 %v5382, %v5378
    %v5651 = vpack.c.b16 %v5383, %v5379
    %v5652 = vpack.c.b16 %v5384, %v5380
    %v5653 = vpack.c.b16 %v5385, %v5381
    %v5654 = vpack.c.b16 %v5390, %v5386
    %v5655 = vpack.c.b16 %v5391, %v5387
    %v5656 = vpack.c.b16 %v5392, %v5388
    %v5657 = vpack.c.b16 %v5393, %v5389
    %v5658 = vpack.c.b16 %v5398, %v5394
    %v5659 = vpack.c.b16 %v5399, %v5395
    %v5660 = vpack.c.b16 %v5400, %v5396
    %v5661 = vpack.c.b16 %v5401, %v5397
    %v5662 = vpack.c.b16 %v5406, %v5402
    %v5663 = vpack.c.b16 %v5407, %v5403
    %v5664 = vpack.c.b16 %v5408, %v5404
    %v5665 = vpack.c.b16 %v5409, %v5405
    %5922 = vmatprep.subr.bf16.mxu0 %v5439
    %5923 = vmatpush1.bf16.msra.mxu0 %v5438
    %5924 = vmatprep.subr.bf16.mxu0 %v5435
    %5925 = vmatpush1.bf16.msra.mxu0 %v5434
    %5926 = vmatprep.subr.bf16.mxu0 %v5431
    %5927 = vmatpush1.bf16.msra.mxu0 %v5430
    %5928 = vmatprep.subr.bf16.mxu0 %v5427
    %5929 = vmatpush1.bf16.msra.mxu0 %v5426
    %5930 = vmatprep.subr.bf16.mxu0 %v5423
    %5931 = vmatpush1.bf16.msra.mxu0 %v5422
    %5932 = vmatprep.subr.bf16.mxu0 %v5419
    %5933 = vmatpush1.bf16.msra.mxu0 %v5418
    %5934 = vmatprep.subr.bf16.mxu0 %v5415
    %5935 = vmatpush1.bf16.msra.mxu0 %v5414
    %5936 = vmatprep.subr.bf16.mxu0 %v5411
    %5937 = vmatpush1.bf16.msra.mxu0 %v5410
    %5938 = vmatprep.subr.bf16.mxu0 %v5471
    %5939 = vmatpush2.bf16.msra.mxu0 %v5470
    %5940 = vmatprep.subr.bf16.mxu0 %v5467
    %5941 = vmatpush2.bf16.msra.mxu0 %v5466
    %5942 = vmatprep.subr.bf16.mxu0 %v5463
    %5943 = vmatpush2.bf16.msra.mxu0 %v5462
    %5944 = vmatprep.subr.bf16.mxu0 %v5459
    %5945 = vmatpush2.bf16.msra.mxu0 %v5458
    %5946 = vmatprep.subr.bf16.mxu0 %v5455
    %5947 = vmatpush2.bf16.msra.mxu0 %v5454
    %5948 = vmatprep.subr.bf16.mxu0 %v5451
    %5949 = vmatpush2.bf16.msra.mxu0 %v5450
    %5950 = vmatprep.subr.bf16.mxu0 %v5447
    %5951 = vmatpush2.bf16.msra.mxu0 %v5446
    %5952 = vmatprep.subr.bf16.mxu0 %v5443
    %5953 = vmatpush2.bf16.msra.mxu0 %v5442
    %5954 = vmatprep.mubr.bf16.mxu0 %v2383
    %5955 = vmatmul.mubr.bf16.gmra.mxu0 %v2382
    %v5956 = vpop.f32.mrf.mxu0
    %v5957 = vadd.f32 %v4472, %v5956
    %v5958 = vpop.f32.mrf.mxu0
    %v5959 = vadd.f32 %v4474, %v5958
    %v5960 = vpop.f32.mrf.mxu0
    %v5961 = vpop.f32.mrf.mxu0
    %5962 = vdwg.mxu0
    %5963 = vmatprep.subr.bf16.mxu0 %v5503
    %5964 = vmatpush1.bf16.msra.mxu0 %v5502
    %5965 = vmatprep.subr.bf16.mxu0 %v5499
    %5966 = vmatpush1.bf16.msra.mxu0 %v5498
    %5967 = vmatprep.subr.bf16.mxu0 %v5495
    %5968 = vmatpush1.bf16.msra.mxu0 %v5494
    %5969 = vmatprep.subr.bf16.mxu0 %v5491
    %5970 = vmatpush1.bf16.msra.mxu0 %v5490
    %5971 = vmatprep.subr.bf16.mxu0 %v5487
    %5972 = vmatpush1.bf16.msra.mxu0 %v5486
    %5973 = vmatprep.subr.bf16.mxu0 %v5483
    %5974 = vmatpush1.bf16.msra.mxu0 %v5482
    %5975 = vmatprep.subr.bf16.mxu0 %v5479
    %5976 = vmatpush1.bf16.msra.mxu0 %v5478
    %5977 = vmatprep.subr.bf16.mxu0 %v5475
    %5978 = vmatpush1.bf16.msra.mxu0 %v5474
    %5979 = vmatprep.subr.bf16.mxu0 %v5535
    %5980 = vmatpush2.bf16.msra.mxu0 %v5534
    %5981 = vmatprep.subr.bf16.mxu0 %v5531
    %5982 = vmatpush2.bf16.msra.mxu0 %v5530
    %5983 = vmatprep.subr.bf16.mxu0 %v5527
    %5984 = vmatpush2.bf16.msra.mxu0 %v5526
    %5985 = vmatprep.subr.bf16.mxu0 %v5523
    %5986 = vmatpush2.bf16.msra.mxu0 %v5522
    %5987 = vmatprep.subr.bf16.mxu0 %v5519
    %5988 = vmatpush2.bf16.msra.mxu0 %v5518
    %5989 = vmatprep.subr.bf16.mxu0 %v5515
    %5990 = vmatpush2.bf16.msra.mxu0 %v5514
    %5991 = vmatprep.subr.bf16.mxu0 %v5511
    %5992 = vmatpush2.bf16.msra.mxu0 %v5510
    %5993 = vmatprep.subr.bf16.mxu0 %v5507
    %5994 = vmatpush2.bf16.msra.mxu0 %v5506
    %5995 = vmatprep.mubr.bf16.mxu0 %v2385
    %5996 = vmatmul.mubr.bf16.gmra.mxu0 %v2384
    %v5997 = vpop.f32.mrf.mxu0
    %v5998 = vadd.f32 %v5957, %v5997
    %v5999 = vpop.f32.mrf.mxu0
    %v6000 = vadd.f32 %v5959, %v5999
    %v6001 = vpop.f32.mrf.mxu0
    %v6002 = vpop.f32.mrf.mxu0
    %6003 = vdwg.mxu0
    %6004 = vmatprep.subr.bf16.mxu0 %v5567
    %6005 = vmatpush1.bf16.msra.mxu0 %v5566
    %6006 = vmatprep.subr.bf16.mxu0 %v5563
    %6007 = vmatpush1.bf16.msra.mxu0 %v5562
    %6008 = vmatprep.subr.bf16.mxu0 %v5559
    %6009 = vmatpush1.bf16.msra.mxu0 %v5558
    %6010 = vmatprep.subr.bf16.mxu0 %v5555
    %6011 = vmatpush1.bf16.msra.mxu0 %v5554
    %6012 = vmatprep.subr.bf16.mxu0 %v5551
    %6013 = vmatpush1.bf16.msra.mxu0 %v5550
    %6014 = vmatprep.subr.bf16.mxu0 %v5547
    %6015 = vmatpush1.bf16.msra.mxu0 %v5546
    %6016 = vmatprep.subr.bf16.mxu0 %v5543
    %6017 = vmatpush1.bf16.msra.mxu0 %v5542
    %6018 = vmatprep.subr.bf16.mxu0 %v5539
    %6019 = vmatpush1.bf16.msra.mxu0 %v5538
    %6020 = vmatprep.subr.bf16.mxu0 %v5599
    %6021 = vmatpush2.bf16.msra.mxu0 %v5598
    %6022 = vmatprep.subr.bf16.mxu0 %v5595
    %6023 = vmatpush2.bf16.msra.mxu0 %v5594
    %6024 = vmatprep.subr.bf16.mxu0 %v5591
    %6025 = vmatpush2.bf16.msra.mxu0 %v5590
    %6026 = vmatprep.subr.bf16.mxu0 %v5587
    %6027 = vmatpush2.bf16.msra.mxu0 %v5586
    %6028 = vmatprep.subr.bf16.mxu0 %v5583
    %6029 = vmatpush2.bf16.msra.mxu0 %v5582
    %6030 = vmatprep.subr.bf16.mxu0 %v5579
    %6031 = vmatpush2.bf16.msra.mxu0 %v5578
    %6032 = vmatprep.subr.bf16.mxu0 %v5575
    %6033 = vmatpush2.bf16.msra.mxu0 %v5574
    %6034 = vmatprep.subr.bf16.mxu0 %v5571
    %6035 = vmatpush2.bf16.msra.mxu0 %v5570
    %6036 = vmatprep.mubr.bf16.mxu0 %v2387
    %6037 = vmatmul.mubr.bf16.gmra.mxu0 %v2386
    %v6038 = vpop.f32.mrf.mxu0
    %v6039 = vadd.f32 %v5998, %v6038
    %v6040 = vpop.f32.mrf.mxu0
    %v6041 = vadd.f32 %v6000, %v6040
    %v6042 = vpop.f32.mrf.mxu0
    %v6043 = vpop.f32.mrf.mxu0
    %6044 = vdwg.mxu0
    %6045 = vmatprep.subr.bf16.mxu0 %v5631
    %6046 = vmatpush1.bf16.msra.mxu0 %v5630
    %6047 = vmatprep.subr.bf16.mxu0 %v5627
    %6048 = vmatpush1.bf16.msra.mxu0 %v5626
    %6049 = vmatprep.subr.bf16.mxu0 %v5623
    %6050 = vmatpush1.bf16.msra.mxu0 %v5622
    %6051 = vmatprep.subr.bf16.mxu0 %v5619
    %6052 = vmatpush1.bf16.msra.mxu0 %v5618
    %6053 = vmatprep.subr.bf16.mxu0 %v5615
    %6054 = vmatpush1.bf16.msra.mxu0 %v5614
    %6055 = vmatprep.subr.bf16.mxu0 %v5611
    %6056 = vmatpush1.bf16.msra.mxu0 %v5610
    %6057 = vmatprep.subr.bf16.mxu0 %v5607
    %6058 = vmatpush1.bf16.msra.mxu0 %v5606
    %6059 = vmatprep.subr.bf16.mxu0 %v5603
    %6060 = vmatpush1.bf16.msra.mxu0 %v5602
    %6061 = vmatprep.subr.bf16.mxu0 %v5663
    %6062 = vmatpush2.bf16.msra.mxu0 %v5662
    %6063 = vmatprep.subr.bf16.mxu0 %v5659
    %6064 = vmatpush2.bf16.msra.mxu0 %v5658
    %6065 = vmatprep.subr.bf16.mxu0 %v5655
    %6066 = vmatpush2.bf16.msra.mxu0 %v5654
    %6067 = vmatprep.subr.bf16.mxu0 %v5651
    %6068 = vmatpush2.bf16.msra.mxu0 %v5650
    %6069 = vmatprep.subr.bf16.mxu0 %v5647
    %6070 = vmatpush2.bf16.msra.mxu0 %v5646
    %6071 = vmatprep.subr.bf16.mxu0 %v5643
    %6072 = vmatpush2.bf16.msra.mxu0 %v5642
    %6073 = vmatprep.subr.bf16.mxu0 %v5639
    %6074 = vmatpush2.bf16.msra.mxu0 %v5638
    %6075 = vmatprep.subr.bf16.mxu0 %v5635
    %6076 = vmatpush2.bf16.msra.mxu0 %v5634
    %6077 = vmatprep.mubr.bf16.mxu0 %v2389
    %6078 = vmatmul.mubr.bf16.gmra.mxu0 %v2388
    %v6079 = vpop.f32.mrf.mxu0
    %v6080 = vadd.f32 %v6039, %v6079
    %v6081 = vpop.f32.mrf.mxu0
    %v6082 = vadd.f32 %v6041, %v6081
    %v6083 = vpop.f32.mrf.mxu0
    %v6084 = vpop.f32.mrf.mxu0
    %6085 = vdwg.mxu0
    %6086 = vmatprep.subr.bf16.mxu0 %v5441
    %6087 = vmatpush1.bf16.msra.mxu0 %v5440
    %6088 = vmatprep.subr.bf16.mxu0 %v5437
    %6089 = vmatpush1.bf16.msra.mxu0 %v5436
    %6090 = vmatprep.subr.bf16.mxu0 %v5433
    %6091 = vmatpush1.bf16.msra.mxu0 %v5432
    %6092 = vmatprep.subr.bf16.mxu0 %v5429
    %6093 = vmatpush1.bf16.msra.mxu0 %v5428
    %6094 = vmatprep.subr.bf16.mxu0 %v5425
    %6095 = vmatpush1.bf16.msra.mxu0 %v5424
    %6096 = vmatprep.subr.bf16.mxu0 %v5421
    %6097 = vmatpush1.bf16.msra.mxu0 %v5420
    %6098 = vmatprep.subr.bf16.mxu0 %v5417
    %6099 = vmatpush1.bf16.msra.mxu0 %v5416
    %6100 = vmatprep.subr.bf16.mxu0 %v5413
    %6101 = vmatpush1.bf16.msra.mxu0 %v5412
    %6102 = vmatprep.subr.bf16.mxu0 %v5473
    %6103 = vmatpush2.bf16.msra.mxu0 %v5472
    %6104 = vmatprep.subr.bf16.mxu0 %v5469
    %6105 = vmatpush2.bf16.msra.mxu0 %v5468
    %6106 = vmatprep.subr.bf16.mxu0 %v5465
    %6107 = vmatpush2.bf16.msra.mxu0 %v5464
    %6108 = vmatprep.subr.bf16.mxu0 %v5461
    %6109 = vmatpush2.bf16.msra.mxu0 %v5460
    %6110 = vmatprep.subr.bf16.mxu0 %v5457
    %6111 = vmatpush2.bf16.msra.mxu0 %v5456
    %6112 = vmatprep.subr.bf16.mxu0 %v5453
    %6113 = vmatpush2.bf16.msra.mxu0 %v5452
    %6114 = vmatprep.subr.bf16.mxu0 %v5449
    %6115 = vmatpush2.bf16.msra.mxu0 %v5448
    %6116 = vmatprep.subr.bf16.mxu0 %v5445
    %6117 = vmatpush2.bf16.msra.mxu0 %v5444
    %6118 = vmatprep.mubr.bf16.mxu0 %v2383
    %6119 = vmatmul.mubr.bf16.gmra.mxu0 %v2382
    %v6120 = vpop.f32.mrf.mxu0
    %v6121 = vadd.f32 %v4636, %v6120
    %v6122 = vpop.f32.mrf.mxu0
    %v6123 = vadd.f32 %v4638, %v6122
    %v6124 = vpop.f32.mrf.mxu0
    %v6125 = vpop.f32.mrf.mxu0
    %6126 = vdwg.mxu0
    %6127 = vmatprep.subr.bf16.mxu0 %v5505
    %6128 = vmatpush1.bf16.msra.mxu0 %v5504
    %6129 = vmatprep.subr.bf16.mxu0 %v5501
    %6130 = vmatpush1.bf16.msra.mxu0 %v5500
    %6131 = vmatprep.subr.bf16.mxu0 %v5497
    %6132 = vmatpush1.bf16.msra.mxu0 %v5496
    %6133 = vmatprep.subr.bf16.mxu0 %v5493
    %6134 = vmatpush1.bf16.msra.mxu0 %v5492
    %6135 = vmatprep.subr.bf16.mxu0 %v5489
    %6136 = vmatpush1.bf16.msra.mxu0 %v5488
    %6137 = vmatprep.subr.bf16.mxu0 %v5485
    %6138 = vmatpush1.bf16.msra.mxu0 %v5484
    %6139 = vmatprep.subr.bf16.mxu0 %v5481
    %6140 = vmatpush1.bf16.msra.mxu0 %v5480
    %6141 = vmatprep.subr.bf16.mxu0 %v5477
    %6142 = vmatpush1.bf16.msra.mxu0 %v5476
    %6143 = vmatprep.subr.bf16.mxu0 %v5537
    %6144 = vmatpush2.bf16.msra.mxu0 %v5536
    %6145 = vmatprep.subr.bf16.mxu0 %v5533
    %6146 = vmatpush2.bf16.msra.mxu0 %v5532
    %6147 = vmatprep.subr.bf16.mxu0 %v5529
    %6148 = vmatpush2.bf16.msra.mxu0 %v5528
    %6149 = vmatprep.subr.bf16.mxu0 %v5525
    %6150 = vmatpush2.bf16.msra.mxu0 %v5524
    %6151 = vmatprep.subr.bf16.mxu0 %v5521
    %6152 = vmatpush2.bf16.msra.mxu0 %v5520
    %6153 = vmatprep.subr.bf16.mxu0 %v5517
    %6154 = vmatpush2.bf16.msra.mxu0 %v5516
    %6155 = vmatprep.subr.bf16.mxu0 %v5513
    %6156 = vmatpush2.bf16.msra.mxu0 %v5512
    %6157 = vmatprep.subr.bf16.mxu0 %v5509
    %6158 = vmatpush2.bf16.msra.mxu0 %v5508
    %6159 = vmatprep.mubr.bf16.mxu0 %v2385
    %6160 = vmatmul.mubr.bf16.gmra.mxu0 %v2384
    %v6161 = vpop.f32.mrf.mxu0
    %v6162 = vadd.f32 %v6121, %v6161
    %v6163 = vpop.f32.mrf.mxu0
    %v6164 = vadd.f32 %v6123, %v6163
    %v6165 = vpop.f32.mrf.mxu0
    %v6166 = vpop.f32.mrf.mxu0
    %6167 = vdwg.mxu0
    %6168 = vmatprep.subr.bf16.mxu0 %v5569
    %6169 = vmatpush1.bf16.msra.mxu0 %v5568
    %6170 = vmatprep.subr.bf16.mxu0 %v5565
    %6171 = vmatpush1.bf16.msra.mxu0 %v5564
    %6172 = vmatprep.subr.bf16.mxu0 %v5561
    %6173 = vmatpush1.bf16.msra.mxu0 %v5560
    %6174 = vmatprep.subr.bf16.mxu0 %v5557
    %6175 = vmatpush1.bf16.msra.mxu0 %v5556
    %6176 = vmatprep.subr.bf16.mxu0 %v5553
    %6177 = vmatpush1.bf16.msra.mxu0 %v5552
    %6178 = vmatprep.subr.bf16.mxu0 %v5549
    %6179 = vmatpush1.bf16.msra.mxu0 %v5548
    %6180 = vmatprep.subr.bf16.mxu0 %v5545
    %6181 = vmatpush1.bf16.msra.mxu0 %v5544
    %6182 = vmatprep.subr.bf16.mxu0 %v5541
    %6183 = vmatpush1.bf16.msra.mxu0 %v5540
    %6184 = vmatprep.subr.bf16.mxu0 %v5601
    %6185 = vmatpush2.bf16.msra.mxu0 %v5600
    %6186 = vmatprep.subr.bf16.mxu0 %v5597
    %6187 = vmatpush2.bf16.msra.mxu0 %v5596
    %6188 = vmatprep.subr.bf16.mxu0 %v5593
    %6189 = vmatpush2.bf16.msra.mxu0 %v5592
    %6190 = vmatprep.subr.bf16.mxu0 %v5589
    %6191 = vmatpush2.bf16.msra.mxu0 %v5588
    %6192 = vmatprep.subr.bf16.mxu0 %v5585
    %6193 = vmatpush2.bf16.msra.mxu0 %v5584
    %6194 = vmatprep.subr.bf16.mxu0 %v5581
    %6195 = vmatpush2.bf16.msra.mxu0 %v5580
    %6196 = vmatprep.subr.bf16.mxu0 %v5577
    %6197 = vmatpush2.bf16.msra.mxu0 %v5576
    %6198 = vmatprep.subr.bf16.mxu0 %v5573
    %6199 = vmatpush2.bf16.msra.mxu0 %v5572
    %6200 = vmatprep.mubr.bf16.mxu0 %v2387
    %6201 = vmatmul.mubr.bf16.gmra.mxu0 %v2386
    %v6202 = vpop.f32.mrf.mxu0
    %v6203 = vadd.f32 %v6162, %v6202
    %v6204 = vpop.f32.mrf.mxu0
    %v6205 = vadd.f32 %v6164, %v6204
    %v6206 = vpop.f32.mrf.mxu0
    %v6207 = vpop.f32.mrf.mxu0
    %6208 = vdwg.mxu0
    %6209 = vmatprep.subr.bf16.mxu0 %v5633
    %6210 = vmatpush1.bf16.msra.mxu0 %v5632
    %6211 = vmatprep.subr.bf16.mxu0 %v5629
    %6212 = vmatpush1.bf16.msra.mxu0 %v5628
    %6213 = vmatprep.subr.bf16.mxu0 %v5625
    %6214 = vmatpush1.bf16.msra.mxu0 %v5624
    %6215 = vmatprep.subr.bf16.mxu0 %v5621
    %6216 = vmatpush1.bf16.msra.mxu0 %v5620
    %6217 = vmatprep.subr.bf16.mxu0 %v5617
    %6218 = vmatpush1.bf16.msra.mxu0 %v5616
    %6219 = vmatprep.subr.bf16.mxu0 %v5613
    %6220 = vmatpush1.bf16.msra.mxu0 %v5612
    %6221 = vmatprep.subr.bf16.mxu0 %v5609
    %6222 = vmatpush1.bf16.msra.mxu0 %v5608
    %6223 = vmatprep.subr.bf16.mxu0 %v5605
    %6224 = vmatpush1.bf16.msra.mxu0 %v5604
    %6225 = vmatprep.subr.bf16.mxu0 %v5665
    %6226 = vmatpush2.bf16.msra.mxu0 %v5664
    %6227 = vmatprep.subr.bf16.mxu0 %v5661
    %6228 = vmatpush2.bf16.msra.mxu0 %v5660
    %6229 = vmatprep.subr.bf16.mxu0 %v5657
    %6230 = vmatpush2.bf16.msra.mxu0 %v5656
    %6231 = vmatprep.subr.bf16.mxu0 %v5653
    %6232 = vmatpush2.bf16.msra.mxu0 %v5652
    %6233 = vmatprep.subr.bf16.mxu0 %v5649
    %6234 = vmatpush2.bf16.msra.mxu0 %v5648
    %6235 = vmatprep.subr.bf16.mxu0 %v5645
    %6236 = vmatpush2.bf16.msra.mxu0 %v5644
    %6237 = vmatprep.subr.bf16.mxu0 %v5641
    %6238 = vmatpush2.bf16.msra.mxu0 %v5640
    %6239 = vmatprep.subr.bf16.mxu0 %v5637
    %6240 = vmatpush2.bf16.msra.mxu0 %v5636
    %6241 = vmatprep.mubr.bf16.mxu0 %v2389
    %6242 = vmatmul.mubr.bf16.gmra.mxu0 %v2388
    %v6243 = vpop.f32.mrf.mxu0
    %v6244 = vadd.f32 %v6203, %v6243
    %v6245 = vpop.f32.mrf.mxu0
    %v6246 = vadd.f32 %v6205, %v6245
    %v6247 = vpop.f32.mrf.mxu0
    %v6248 = vpop.f32.mrf.mxu0
    %6249 = vdwg.mxu0
    %v6250 = vld [vmem:[%s21] sm:$0xf]
    %v6252 = vlaneseq
    %v6253 = vshrl.u32 %v6252, 7
    %v6254 = vsub.s32 0, %v6253
    %v6255 = vrot.slane %v6250, %v6254
    %v6256 = vlaneseq
    %v6257 = vshrl.u32 %v6256, 7
    %v6258 = vsub.s32 1, %v6257
    %v6259 = vrot.slane %v6250, %v6258
    %v6260 = vlaneseq
    %v6261 = vshrl.u32 %v6260, 7
    %v6262 = vsub.s32 2, %v6261
    %v6263 = vrot.slane %v6250, %v6262
    %v6264 = vlaneseq
    %v6265 = vshrl.u32 %v6264, 7
    %v6266 = vsub.s32 3, %v6265
    %v6267 = vrot.slane %v6250, %v6266
    %v6272 = vadd.f32 %v6080, %v6255
    %v6273 = vadd.f32 %v6082, %v6259
    %v6274 = vadd.f32 %v6244, %v6263
    %v6275 = vadd.f32 %v6246, %v6267
    %v6276 = vld [vmem:[%s22] sm:$0xf]
    %v6278 = vlaneseq
    %v6279 = vshrl.u32 %v6278, 7
    %v6280 = vsub.s32 0, %v6279
    %v6281 = vrot.slane %v6276, %v6280
    %v6282 = vlaneseq
    %v6283 = vshrl.u32 %v6282, 7
    %v6284 = vsub.s32 1, %v6283
    %v6285 = vrot.slane %v6276, %v6284
    %v6286 = vlaneseq
    %v6287 = vshrl.u32 %v6286, 7
    %v6288 = vsub.s32 2, %v6287
    %v6289 = vrot.slane %v6276, %v6288
    %v6290 = vlaneseq
    %v6291 = vshrl.u32 %v6290, 7
    %v6292 = vsub.s32 3, %v6291
    %v6293 = vrot.slane %v6276, %v6292
    %v6298 = vmul.f32 %v6272, %v6281
    %v6299 = vmul.f32 %v6273, %v6285
    %v6300 = vmul.f32 %v6274, %v6289
    %v6301 = vmul.f32 %v6275, %v6293
    %v6302 = vld [vmem:[%s23] sm:$0xf]
    %v6304 = vlaneseq
    %v6305 = vshrl.u32 %v6304, 7
    %v6306 = vsub.s32 0, %v6305
    %v6307 = vrot.slane %v6302, %v6306
    %v6308 = vlaneseq
    %v6309 = vshrl.u32 %v6308, 7
    %v6310 = vsub.s32 1, %v6309
    %v6311 = vrot.slane %v6302, %v6310
    %v6312 = vlaneseq
    %v6313 = vshrl.u32 %v6312, 7
    %v6314 = vsub.s32 2, %v6313
    %v6315 = vrot.slane %v6302, %v6314
    %v6316 = vlaneseq
    %v6317 = vshrl.u32 %v6316, 7
    %v6318 = vsub.s32 3, %v6317
    %v6319 = vrot.slane %v6302, %v6318
    %v6324 = vadd.f32 %v6298, %v6307
    %v6325 = vadd.f32 %v6299, %v6311
    %v6326 = vadd.f32 %v6300, %v6315
    %v6327 = vadd.f32 %v6301, %v6319
    %vm6328 = vcmp.ge.f32.partialorder %v6324, 0.0
    %vm6329 = vcmp.ge.f32.partialorder %v6325, 0.0
    %vm6330 = vcmp.ge.f32.partialorder %v6326, 0.0
    %vm6331 = vcmp.ge.f32.partialorder %v6327, 0.0
    %v6332 = vmul.f32 %v6324, 0.05
    %v6333 = vmul.f32 %v6325, 0.05
    %v6334 = vmul.f32 %v6326, 0.05
    %v6335 = vmul.f32 %v6327, 0.05
    %v6336 = vsel %vm6328, %v6324, %v6332
    %v6337 = vsel %vm6329, %v6325, %v6333
    %v6338 = vsel %vm6330, %v6326, %v6334
    %v6339 = vsel %vm6331, %v6327, %v6335
    %v6340 = vld [vmem:[%s24] sm:$0xf]
    %v6342 = vlaneseq
    %v6343 = vshrl.u32 %v6342, 7
    %v6344 = vsub.s32 0, %v6343
    %v6345 = vrot.slane %v6340, %v6344
    %v6346 = vlaneseq
    %v6347 = vshrl.u32 %v6346, 7
    %v6348 = vsub.s32 1, %v6347
    %v6349 = vrot.slane %v6340, %v6348
    %v6350 = vlaneseq
    %v6351 = vshrl.u32 %v6350, 7
    %v6352 = vsub.s32 2, %v6351
    %v6353 = vrot.slane %v6340, %v6352
    %v6354 = vlaneseq
    %v6355 = vshrl.u32 %v6354, 7
    %v6356 = vsub.s32 3, %v6355
    %v6357 = vrot.slane %v6340, %v6356
    %v6362 = vmul.f32 %v6336, %v6345
    %v6363 = vmul.f32 %v6337, %v6349
    %v6364 = vmul.f32 %v6338, %v6353
    %v6365 = vmul.f32 %v6339, %v6357
    %v6366 = vadd.f32 %v6362, %v6363
    %v6367 = vadd.f32 %v6366, %v6364
    %v6368 = vadd.f32 %v6367, %v6365
    %6369 = vadd.xlane.f32.xlu0 %v6368
    %v6370 = vpop.xlane.xlu0 %6369
    %s6371 = sld [smem:[#allocation5 + $0x2]]
    %v6372 = vstv %s6371
    %v6373 = vadd.f32 %v6370, %v6372
    %v6374 = vlaneseq
    %v6375 = vand.u32 %v6374, 127
    %vm6376 = vcmp.eq.s32.totalorder %v6375, 0
    %vm6377 = vcmp.eq.s32.totalorder %v6375, 1
    %vm6378 = vcmp.eq.s32.totalorder %v6375, 2
    %v6379 = vsel %vm6378, %v6373, 0.0
    %v6380 = vsel %vm6377, %v2257, %v6379
    %v6381 = vsel %vm6376, %v1227, %v6380
    %6382 = vst [vmem:[%s25] sm:$0xff] %v6381
    // Predicated region
    $region122: #{net_forward.1} parent=1 // pred_check
      _
    $region123: #{net_forward.1} parent=1 // pred_check_branch
      %6384 = sbr.rel (0) target = $region125
    $region124: #{net_forward.1} parent=1 // pred_region
      _
    $region125: #{net_forward.1} parent=1 // pred_fallthru
      _
    // Predicated region
    $region126: #{net_forward.1} parent=1 // pred_check
      _
    $region127: #{net_forward.1} parent=1 // pred_check_branch
      %6386 = sbr.rel (0) target = $region129
    $region128: #{net_forward.1} parent=1 // pred_region
      _
    $region129: #{net_forward.1} parent=1 // pred_fallthru
      _
    %6387 = vsyncpa [#allocation3], 1
    %6388 = vsyncpa [#allocation9], 1
    %6389 = vsyncpa [#allocation4], 1
    %6390 = vsyncpa [#allocation6], 1

</llo_original>
